<compile_context>
chip_gen: v7x
topology: tpu7x:2x2x1
jax: 0.10.0
libtpu: 0.0.40
codegen_flags: <defaults>
</compile_context>

<pallas_src>
import functools

import jax
import jax.numpy as jnp
from jax import lax
import numpy as np
from jax.experimental import pallas as pl
from jax.experimental.pallas import tpu as pltpu


# ---------------------------------------------------------------------------
# Per-axis polyphase planning (pure Python, runs at trace time)
# ---------------------------------------------------------------------------
def _ceil_div(a, b):
    return -(-a // b)


def _axis_plan(din, k, s, p):
    """Polyphase plan for one axis of a transposed convolution.

    Phases are sorted by their first output offset o0 (a bijection onto
    [0, s)), so the phase index equals the output interleave offset.
    """
    assert k >= s, "fast path assumes kernel_size >= stride on every axis"
    dout = (din - 1) * s - 2 * p + k
    phases = []
    pad_lo_ax = pad_hi_ax = 0
    total = 0
    for phi in range(s):
        k_t = _ceil_div(k - phi, s)            # taps belonging to this phase
        m_min = _ceil_div(p - phi, s)          # first input "slot"
        m_max = (dout - 1 + p - phi) // s      # last input "slot"
        assert m_max >= m_min, "empty output phase (unsupported config)"
        mcount = m_max - m_min + 1
        o0 = m_min * s + phi - p               # first output index of this phase
        assert 0 <= o0 < s
        pad_lo_ax = max(pad_lo_ax, max(0, (k_t - 1) - m_min))
        pad_hi_ax = max(pad_hi_ax, max(0, m_max - (din - 1)))
        total += mcount
        phases.append(dict(phi=phi, k_t=k_t, m_min=m_min, mcount=mcount, o0=o0))
    assert total == dout
    phases.sort(key=lambda ph: ph["o0"])
    return dict(dout=dout, phases=phases, pad_lo=pad_lo_ax, pad_hi=pad_hi_ax)


def _phase_order(k, s, p):
    """(phi, k_t) per phase, sorted by first-output offset o0 = (phi - p) % s."""
    entries = [((phi - p) % s, phi, _ceil_div(k - phi, s)) for phi in range(s)]
    entries.sort()
    return [(phi, k_t) for (_, phi, k_t) in entries]


# ---------------------------------------------------------------------------
# One-time parameter preprocessing (hoisted out of the forward pass)
# ---------------------------------------------------------------------------
def prepare_upconv3d_params(params, kernel_size, stride, padding):
    """Stack the transposed-conv weights per (depth-phase, h/w-phase, tap).

    Each depth phase gets one array of shape (n_hw, kd_t, T_max, Cout, Cin)
    whose trailing (Cout, Cin) dims feed the lane-dense (Cout, L) matmul.
    Zero-padded tap slots (phases with fewer taps) are never read.
    """
    wt, bt, se_w, se_b = params                  # PyTorch layouts
    Cin, Cout = int(wt.shape[0]), int(wt.shape[1])
    kd, kh, kw = kernel_size
    sd, sh, sw = stride
    pd, ph, pw = padding

    d_phases = _phase_order(kd, sd, pd)
    h_phases = _phase_order(kh, sh, ph)
    w_phases = _phase_order(kw, sw, pw)
    t_max = max(kh_t * kw_t for (_, kh_t) in h_phases for (_, kw_t) in w_phases)

    w_by_dphase = []
    for (phd, kd_t) in d_phases:
        stacks = []
        for (phh, kh_t) in h_phases:
            for (phw, kw_t) in w_phases:
                w = wt[:, :, phd::sd, phh::sh, phw::sw]     # (Cin,Cout,kd_t,kh_t,kw_t)
                w = jnp.transpose(w, (2, 3, 4, 1, 0))       # (kd_t,kh_t,kw_t,Cout,Cin)
                w = w.reshape(kd_t, kh_t * kw_t, Cout, Cin)
                if kh_t * kw_t < t_max:                     # pad unused taps (never read)
                    w = jnp.pad(w, ((0, 0), (0, t_max - kh_t * kw_t), (0, 0), (0, 0)))
                stacks.append(w)
        w_by_dphase.append(jnp.stack(stacks, axis=0))       # (n_hw,kd_t,Tmax,Cout,Cin)

    return dict(
        w_by_dphase=w_by_dphase,
        bias_col=bt.reshape(Cout, 1).astype(jnp.float32),   # broadcast over lanes
        bias_row=bt.reshape(1, Cout).astype(jnp.float32),
        se_w_mat=jnp.transpose(se_w.reshape(Cout, Cout)),   # attn = sigmoid(pool @ W^T + b)
        se_b=se_b.reshape(1, Cout).astype(jnp.float32),
    )


# ---------------------------------------------------------------------------
# VMEM limit: stay well under the physical per-core capacity (64 MiB on v7x)
# ---------------------------------------------------------------------------
def _default_vmem_limit():
    try:
        cap = int(pltpu.get_tpu_info().vmem_capacity_bytes)
    except Exception:
        cap = 64 * 1024 * 1024
    if cap <= 0:
        cap = 64 * 1024 * 1024
    return max(32 * 1024 * 1024, min(3 * cap // 4, 96 * 1024 * 1024))


# ---------------------------------------------------------------------------
# Pallas kernel: one depth phase of the polyphase transposed conv.
# Grid = (N, Md); the padded x slab for one n is resident across the Md sweep.
# All h/w phases + all depth / h/w taps are computed per grid step from that
# slab, accumulated in f32 registers and stored once (plus SE pooled sums).
# ---------------------------------------------------------------------------
def _make_conv_kernel(hw_meta, kd_t, bd, Wp, Cout, Lmax):
    def kernel(x_ref, w_ref, b_ref, y_ref, pool_ref):
        md = pl.program_id(1)

        # One f32 accumulator per h/w phase (each is ~1 vreg at FLAVR sizes).
        accs = [jnp.zeros((Cout, m["L"]), jnp.float32) for m in hw_meta]
        for rd in range(kd_t):
            # Dynamic leading-axis index into the resident slab: (Cin, HWp).
            xs = x_ref[md + (bd - rd)]
            for p, m in enumerate(hw_meta):
                for t in range(m["T"]):
                    rh, rw = divmod(t, m["kw_t"])
                    # Static lane shift into the flattened (H*W) slab.
                    start = (m["bh"] - rh) * Wp + (m["bw"] - rw)
                    a = xs[:, start:start + m["L"]]          # (Cin, L)
                    # NOTE: per-tap K=Cin matmuls are kept (kernel is
                    # bandwidth-bound at FLAVR channel counts); folding the
                    # taps into one K = T*Cin matmul is a possible micro-opt.
                    accs[p] = accs[p] + jnp.dot(
                        w_ref[p, rd, t], a, preferred_element_type=jnp.float32)

        pool = jnp.zeros((Cout, 1), jnp.float32)
        for p, m in enumerate(hw_meta):
            acc = accs[p]
            # SE pooled partial sum over the valid (jw < Mw) columns, pre-bias
            # (the bias term of the global mean is added analytically outside).
            # Junk (jw >= Mw) columns hold wrap-around values from the flat
            # H*W slicing trick -- they are masked here and sliced off before
            # the repack; do not remove one without the other.
            col = lax.broadcasted_iota(jnp.int32, (Cout, m["L"]), 1) % Wp
            pool = pool + jnp.sum(jnp.where(col < m["Mw"], acc, 0.0),
                                  axis=1, keepdims=True)
            yb = acc + b_ref[...]                            # (Cout, L) + (Cout, 1)
            if m["L"] < Lmax:
                yb = jnp.pad(yb, ((0, 0), (0, Lmax - m["L"])))
            y_ref[p] = yb.astype(y_ref.dtype)                # single store per phase
        pool_ref[...] = pool

    return kernel


def _conv_depth_phase(xf, w_stack, bias_col, *, Md, bd, hw_meta, Wp, Lmax,
                      out_dtype, vmem_limit):
    # TODO(synk): for very large H*W (v7x, 64 MiB VMEM) tile the flattened
    # H*W axis with a haloed manual DMA instead of holding the full slab.
    N, Dp, Cin, HWp = (int(v) for v in xf.shape)
    n_hw, kd_t, t_max, Cout, _ = (int(v) for v in w_stack.shape)
    assert n_hw == len(hw_meta)

    kernel = _make_conv_kernel(hw_meta, kd_t, bd, Wp, Cout, Lmax)
    return pl.pallas_call(
        kernel,
        out_shape=(
            jax.ShapeDtypeStruct((N, Md, n_hw, Cout, Lmax), out_dtype),
            jax.ShapeDtypeStruct((N, Md, Cout, 1), jnp.float32),
        ),
        grid_spec=pltpu.PrefetchScalarGridSpec(
            num_scalar_prefetch=0,
            grid=(N, Md),
            in_specs=[
                # Full padded x slab per n: block index constant across md, so
                # Pallas fetches it once per n and keeps it resident.
                pl.BlockSpec((None, Dp, Cin, HWp), lambda n, md: (n, 0, 0, 0)),
                pl.BlockSpec((n_hw, kd_t, t_max, Cout, Cin),
                             lambda n, md: (0, 0, 0, 0, 0)),
                pl.BlockSpec((Cout, 1), lambda n, md: (0, 0)),
            ],
            out_specs=[
                pl.BlockSpec((None, None, n_hw, Cout, Lmax),
                             lambda n, md: (n, md, 0, 0, 0)),
                pl.BlockSpec((None, None, Cout, 1),
                             lambda n, md: (n, md, 0, 0)),
            ],
        ),
        compiler_params=pltpu.CompilerParams(
            dimension_semantics=("parallel", "parallel"),
            vmem_limit_bytes=vmem_limit,
        ),
    )(xf, w_stack, bias_col)


# ---------------------------------------------------------------------------
# upConv3D forward (upmode='transpose', batchnorm=False)
# ---------------------------------------------------------------------------
def up_conv3d_forward(x, prep, *, kernel_size, stride, padding,
                      compute_dtype=jnp.bfloat16):
    # compute_dtype=bf16 halves operand/intermediate HBM bytes and uses the
    # bf16 MXU fast path on v5e/v6e/v7x; accumulation and the SE/attn path
    # stay f32.  Use jnp.float32 for exact parity with the PyTorch reference.
    kd, kh, kw = kernel_size
    sd, sh, sw = stride
    pd, ph, pw = padding
    N, Cin, D, H, W = (int(v) for v in x.shape)
    Cout = int(prep["bias_col"].shape[0])

    plan_d = _axis_plan(D, kd, sd, pd)
    plan_h = _axis_plan(H, kh, sh, ph)
    plan_w = _axis_plan(W, kw, sw, pw)
    Do, Ho, Wo = plan_d["dout"], plan_h["dout"], plan_w["dout"]

    Wp = W + plan_w["pad_lo"] + plan_w["pad_hi"]
    Hp_base = H + plan_h["pad_lo"] + plan_h["pad_hi"]

    # Static per-(h/w phase) metadata, shared by every depth phase.
    hw_meta = []
    for pph in plan_h["phases"]:
        for ppw in plan_w["phases"]:
            hw_meta.append(dict(
                T=pph["k_t"] * ppw["k_t"], kw_t=ppw["k_t"],
                bh=pph["m_min"] + plan_h["pad_lo"],
                bw=ppw["m_min"] + plan_w["pad_lo"],
                Mh=pph["mcount"], Mw=ppw["mcount"],
                L=pph["mcount"] * Wp,
                o0h=pph["o0"], o0w=ppw["o0"]))
    Lmax = max(m["L"] for m in hw_meta)

    # Extra zero rows at the bottom of the padded H axis so flattened (H*W)
    # lane slices never run past the slab; wrapped-in values only land in junk
    # (jw >= Mw) columns, which are masked from the pool and sliced off below.
    max_end = max(m["bh"] * Wp + m["bw"] + m["L"] for m in hw_meta)
    extra_rows = max(0, _ceil_div(max_end - Hp_base * Wp, Wp))

    # (N, Cin, D, H, W) -> (N, Dp, Cin, Hp*Wp): depth on the cheaply-indexed
    # leading axis, channels on sublanes, flattened spatial on lanes.
    xt = jnp.transpose(x, (0, 2, 1, 3, 4))
    x_pad = jnp.pad(xt, ((0, 0),
                         (plan_d["pad_lo"], plan_d["pad_hi"]),
                         (0, 0),
                         (plan_h["pad_lo"], plan_h["pad_hi"] + extra_rows),
                         (plan_w["pad_lo"], plan_w["pad_hi"])))
    Dp = int(x_pad.shape[1])
    Hp = int(x_pad.shape[3])
    xf = x_pad.reshape(N, Dp, Cin, Hp * Wp).astype(compute_dtype)

    vmem_limit = _default_vmem_limit()

    y_dphases = []
    pooled = jnp.zeros((N, Cout), jnp.float32)
    for i_d, ppd in enumerate(plan_d["phases"]):
        w_stack = prep["w_by_dphase"][i_d].astype(compute_dtype)
        assert int(w_stack.shape[0]) == len(hw_meta)
        assert int(w_stack.shape[1]) == ppd["k_t"]
        y_dp, pool_dp = _conv_depth_phase(
            xf, w_stack, prep["bias_col"],
            Md=ppd["mcount"], bd=ppd["m_min"] + plan_d["pad_lo"],
            hw_meta=hw_meta, Wp=Wp, Lmax=Lmax,
            out_dtype=compute_dtype, vmem_limit=vmem_limit)
        y_dphases.append(y_dp)
        pooled = pooled + jnp.sum(pool_dp, axis=(1, 3))

    # SEGating attention: tiny CxC matmul in plain JAX (f32); bias contribution
    # to the global mean is added analytically.
    pooled_mean = pooled * (1.0 / float(Do * Ho * Wo)) + prep["bias_row"]
    attn = jax.nn.sigmoid(pooled_mean @ prep["se_w_mat"] + prep["se_b"])   # (N, Cout)

    # Scale + phase interleave + NCDHW repack: one fused XLA pass over the
    # phase-major stack (replaces the old per-phase strided scatter + pad +
    # separate scale kernel + transpose).
    uniform = (len({m["Mh"] for m in hw_meta}) == 1
               and len({m["Mw"] for m in hw_meta}) == 1
               and len({ppd["mcount"] for ppd in plan_d["phases"]}) == 1)
    if uniform:
        Md = plan_d["phases"][0]["mcount"]
        Mh = hw_meta[0]["Mh"]
        Mw = hw_meta[0]["Mw"]
        y_all = jnp.stack(y_dphases, axis=2)          # (N, Md, sd, n_hw, Cout, Lmax)
        y_all = y_all.astype(jnp.float32) * attn[:, None, None, None, :, None]
        y_all = y_all.reshape(N, Md, sd, sh, sw, Cout, Mh, Wp)[..., :Mw]
        out = jnp.transpose(y_all, (0, 5, 1, 2, 6, 3, 7, 4))
        out = out.reshape(N, Cout, Do, Ho, Wo)
    else:
        # General fallback for ragged phase sizes: per-phase strided scatter.
        out = jnp.zeros((N, Cout, Do, Ho, Wo), jnp.float32)
        for i_d, ppd in enumerate(plan_d["phases"]):
            Md = ppd["mcount"]
            y_dp = y_dphases[i_d].astype(jnp.float32) * attn[:, None, None, :, None]
            for p, m in enumerate(hw_meta):
                blk = y_dp[:, :, p, :, :m["L"]].reshape(N, Md, Cout, m["Mh"], Wp)
                blk = blk[..., :m["Mw"]]
                blk = jnp.transpose(blk, (0, 2, 1, 3, 4))
                out = out.at[:, :, ppd["o0"]::sd, m["o0h"]::sh, m["o0w"]::sw].set(blk)

    return out.astype(x.dtype)


# ---------------------------------------------------------------------------
# Pure-JAX reference (sanity check of the Pallas path)
# ---------------------------------------------------------------------------
def _reference(x, params, kernel_size, stride, padding):
    wt, bt, se_w, se_b = params
    Cout = wt.shape[1]
    kd, kh, kw = kernel_size
    sd, sh, sw = stride
    pd, ph, pw = padding
    w_conv = jnp.transpose(wt[:, :, ::-1, ::-1, ::-1], (1, 0, 2, 3, 4))
    y = lax.conv_general_dilated(
        x, w_conv, window_strides=(1, 1, 1),
        padding=[(kd - 1 - pd, kd - 1 - pd),
                 (kh - 1 - ph, kh - 1 - ph),
                 (kw - 1 - pw, kw - 1 - pw)],
        lhs_dilation=(sd, sh, sw),
        dimension_numbers=('NCDHW', 'OIDHW', 'NCDHW'),
        precision=lax.Precision.HIGHEST)
    y = y + bt.reshape(1, Cout, 1, 1, 1)
    pooled = jnp.mean(y, axis=(2, 3, 4), keepdims=True)
    attn = jax.nn.sigmoid(
        jnp.einsum('ncdhw,oc->nodhw', pooled, se_w.reshape(Cout, Cout),
                   precision=lax.Precision.HIGHEST)
        + se_b.reshape(1, Cout, 1, 1, 1))
    return y * attn


if __name__ == "__main__":
    # FLAVR-style upConv3D config: in_ch=4, out_ch=8,
    # kernel_size=(3,4,4), stride=(1,2,2), padding=(1,1,1)
    N, Cin, Cout = 2, 4, 8
    D, H, W = 4, 8, 8
    kernel_size, stride, padding = (3, 4, 4), (1, 2, 2), (1, 1, 1)

    key = jax.random.PRNGKey(0)
    k0, k1, k2, k3, k4 = jax.random.split(key, 5)

    x = jax.random.normal(k0, (N, Cin, D, H, W), jnp.float32)

    kd, kh, kw = kernel_size
    fan_t = Cin * kd * kh * kw
    wt = jax.random.uniform(k1, (Cin, Cout, kd, kh, kw), jnp.float32,
                            -1.0 / np.sqrt(fan_t), 1.0 / np.sqrt(fan_t))
    bt = jax.random.uniform(k2, (Cout,), jnp.float32,
                            -1.0 / np.sqrt(fan_t), 1.0 / np.sqrt(fan_t))
    se_w = jax.random.uniform(k3, (Cout, Cout, 1, 1, 1), jnp.float32,
                              -1.0 / np.sqrt(Cout), 1.0 / np.sqrt(Cout))
    se_b = jax.random.uniform(k4, (Cout,), jnp.float32,
                              -1.0 / np.sqrt(Cout), 1.0 / np.sqrt(Cout))
    params = (wt, bt, se_w, se_b)

    prep = prepare_upconv3d_params(params, kernel_size, stride, padding)
    fwd = jax.jit(functools.partial(up_conv3d_forward, kernel_size=kernel_size,
                                    stride=stride, padding=padding))
    out = jax.block_until_ready(fwd(x, prep))

    # The Pallas path computes in bf16 (f32 accumulation) by default, so the
    # exact f32 reference is evaluated on bf16-rounded x / conv weights; this
    # isolates implementation correctness from the precision choice.
    x_q = x.astype(jnp.bfloat16).astype(jnp.float32)
    wt_q = wt.astype(jnp.bfloat16).astype(jnp.float32)
    ref = jax.block_until_ready(
        _reference(x_q, (wt_q, bt, se_w, se_b), kernel_size, stride, padding))

    assert out.shape == ref.shape == (N, Cout, D, 2 * H, 2 * W)
    np.testing.assert_allclose(np.asarray(out), np.asarray(ref),
                               rtol=5e-3, atol=5e-3)

    print("KERNEL_OK")
</pallas_src>

<mosaic_0001>
module attributes {stable_mosaic.version = 11 : i64} {
  func.func @kernel(%arg0: i32, %arg1: i32, %arg2: memref<1x6x4x110xbf16, #tpu.memory_space<vmem>>, %arg3: memref<4x3x4x8x4xbf16, #tpu.memory_space<vmem>>, %arg4: memref<8x1xf32, #tpu.memory_space<vmem>>, %arg5: memref<1x1x4x8x80xbf16, #tpu.memory_space<vmem>>, %arg6: memref<1x1x8x1xf32, #tpu.memory_space<vmem>>) attributes {dimension_semantics = [#tpu.dimension_semantics<parallel>, #tpu.dimension_semantics<parallel>], iteration_bounds = array<i64: 2, 4>, scalar_prefetch = 0 : i64, scratch_operands = 0 : i64, tpu.core_type = #tpu.core_type<tc>, window_params = [{transform_indices = @transform_0, window_bounds = array<i64: 1, 6, 4, 110>}, {pipeline_mode = #tpu.pipeline_mode<synchronous>, transform_indices = @transform_1, window_bounds = array<i64: 4, 3, 4, 8, 4>}, {pipeline_mode = #tpu.pipeline_mode<synchronous>, transform_indices = @transform_2, window_bounds = array<i64: 8, 1>}, {transform_indices = @transform_3, window_bounds = array<i64: 1, 1, 4, 8, 80>}, {transform_indices = @transform_4, window_bounds = array<i64: 1, 1, 8, 1>}]} {
    %cst = arith.constant 0.000000e+00 : f32
    %0 = vector.broadcast %cst : f32 to vector<8x80xf32>
    %cst_0 = arith.constant 0.000000e+00 : f32
    %1 = vector.broadcast %cst_0 : f32 to vector<8x80xf32>
    %cst_1 = arith.constant 0.000000e+00 : f32
    %2 = vector.broadcast %cst_1 : f32 to vector<8x80xf32>
    %cst_2 = arith.constant 0.000000e+00 : f32
    %3 = vector.broadcast %cst_2 : f32 to vector<8x80xf32>
    %c2_i32 = arith.constant 2 : i32
    %4 = arith.addi %arg1, %c2_i32 : i32
    %c0 = arith.constant 0 : index
    %5 = arith.index_cast %4 : i32 to index
    %c0_3 = arith.constant 0 : index
    %c0_4 = arith.constant 0 : index
    %6 = vector.load %arg2[%c0, %5, %c0_3, %c0_4] : memref<1x6x4x110xbf16, #tpu.memory_space<vmem>>, vector<1x1x4x110xbf16>
    %7 = vector.shape_cast %6 : vector<1x1x4x110xbf16> to vector<4x110xbf16>
    %8 = vector.extract_strided_slice %7 {offsets = [0, 11], sizes = [4, 80], strides = [1, 1]} : vector<4x110xbf16> to vector<4x80xbf16>
    %c0_5 = arith.constant 0 : index
    %c0_6 = arith.constant 0 : index
    %c0_7 = arith.constant 0 : index
    %c0_8 = arith.constant 0 : index
    %c0_9 = arith.constant 0 : index
    %9 = vector.load %arg3[%c0_5, %c0_6, %c0_7, %c0_8, %c0_9] : memref<4x3x4x8x4xbf16, #tpu.memory_space<vmem>>, vector<1x1x1x8x4xbf16>
    %10 = vector.shape_cast %9 : vector<1x1x1x8x4xbf16> to vector<8x4xbf16>
    %cst_10 = arith.constant dense<0.000000e+00> : vector<8x80xf32>
    %11 = tpu.matmul %10, %8, %cst_10 {dimension_numbers = #tpu.dot_dimension_numbers<[1], [0], [0], [1], [0, 0, 1, 1], [], []>} : vector<8x4xbf16>, vector<4x80xbf16>, vector<8x80xf32> -> vector<8x80xf32>
    %12 = arith.addf %0, %11 : vector<8x80xf32>
    %13 = vector.extract_strided_slice %7 {offsets = [0, 10], sizes = [4, 80], strides = [1, 1]} : vector<4x110xbf16> to vector<4x80xbf16>
    %c0_11 = arith.constant 0 : index
    %c0_12 = arith.constant 0 : index
    %c1 = arith.constant 1 : index
    %c0_13 = arith.constant 0 : index
    %c0_14 = arith.constant 0 : index
    %14 = vector.load %arg3[%c0_11, %c0_12, %c1, %c0_13, %c0_14] : memref<4x3x4x8x4xbf16, #tpu.memory_space<vmem>>, vector<1x1x1x8x4xbf16>
    %15 = vector.shape_cast %14 : vector<1x1x1x8x4xbf16> to vector<8x4xbf16>
    %cst_15 = arith.constant dense<0.000000e+00> : vector<8x80xf32>
    %16 = tpu.matmul %15, %13, %cst_15 {dimension_numbers = #tpu.dot_dimension_numbers<[1], [0], [0], [1], [0, 0, 1, 1], [], []>} : vector<8x4xbf16>, vector<4x80xbf16>, vector<8x80xf32> -> vector<8x80xf32>
    %17 = arith.addf %12, %16 : vector<8x80xf32>
    %18 = vector.extract_strided_slice %7 {offsets = [0, 1], sizes = [4, 80], strides = [1, 1]} : vector<4x110xbf16> to vector<4x80xbf16>
    %c0_16 = arith.constant 0 : index
    %c0_17 = arith.constant 0 : index
    %c2 = arith.constant 2 : index
    %c0_18 = arith.constant 0 : index
    %c0_19 = arith.constant 0 : index
    %19 = vector.load %arg3[%c0_16, %c0_17, %c2, %c0_18, %c0_19] : memref<4x3x4x8x4xbf16, #tpu.memory_space<vmem>>, vector<1x1x1x8x4xbf16>
    %20 = vector.shape_cast %19 : vector<1x1x1x8x4xbf16> to vector<8x4xbf16>
    %cst_20 = arith.constant dense<0.000000e+00> : vector<8x80xf32>
    %21 = tpu.matmul %20, %18, %cst_20 {dimension_numbers = #tpu.dot_dimension_numbers<[1], [0], [0], [1], [0, 0, 1, 1], [], []>} : vector<8x4xbf16>, vector<4x80xbf16>, vector<8x80xf32> -> vector<8x80xf32>
    %22 = arith.addf %17, %21 : vector<8x80xf32>
    %23 = vector.extract_strided_slice %7 {offsets = [0, 0], sizes = [4, 80], strides = [1, 1]} : vector<4x110xbf16> to vector<4x80xbf16>
    %c0_21 = arith.constant 0 : index
    %c0_22 = arith.constant 0 : index
    %c3 = arith.constant 3 : index
    %c0_23 = arith.constant 0 : index
    %c0_24 = arith.constant 0 : index
    %24 = vector.load %arg3[%c0_21, %c0_22, %c3, %c0_23, %c0_24] : memref<4x3x4x8x4xbf16, #tpu.memory_space<vmem>>, vector<1x1x1x8x4xbf16>
    %25 = vector.shape_cast %24 : vector<1x1x1x8x4xbf16> to vector<8x4xbf16>
    %cst_25 = arith.constant dense<0.000000e+00> : vector<8x80xf32>
    %26 = tpu.matmul %25, %23, %cst_25 {dimension_numbers = #tpu.dot_dimension_numbers<[1], [0], [0], [1], [0, 0, 1, 1], [], []>} : vector<8x4xbf16>, vector<4x80xbf16>, vector<8x80xf32> -> vector<8x80xf32>
    %27 = arith.addf %22, %26 : vector<8x80xf32>
    %28 = vector.extract_strided_slice %7 {offsets = [0, 12], sizes = [4, 80], strides = [1, 1]} : vector<4x110xbf16> to vector<4x80xbf16>
    %c1_26 = arith.constant 1 : index
    %c0_27 = arith.constant 0 : index
    %c0_28 = arith.constant 0 : index
    %c0_29 = arith.constant 0 : index
    %c0_30 = arith.constant 0 : index
    %29 = vector.load %arg3[%c1_26, %c0_27, %c0_28, %c0_29, %c0_30] : memref<4x3x4x8x4xbf16, #tpu.memory_space<vmem>>, vector<1x1x1x8x4xbf16>
    %30 = vector.shape_cast %29 : vector<1x1x1x8x4xbf16> to vector<8x4xbf16>
    %cst_31 = arith.constant dense<0.000000e+00> : vector<8x80xf32>
    %31 = tpu.matmul %30, %28, %cst_31 {dimension_numbers = #tpu.dot_dimension_numbers<[1], [0], [0], [1], [0, 0, 1, 1], [], []>} : vector<8x4xbf16>, vector<4x80xbf16>, vector<8x80xf32> -> vector<8x80xf32>
    %32 = arith.addf %1, %31 : vector<8x80xf32>
    %33 = vector.extract_strided_slice %7 {offsets = [0, 11], sizes = [4, 80], strides = [1, 1]} : vector<4x110xbf16> to vector<4x80xbf16>
    %c1_32 = arith.constant 1 : index
    %c0_33 = arith.constant 0 : index
    %c1_34 = arith.constant 1 : index
    %c0_35 = arith.constant 0 : index
    %c0_36 = arith.constant 0 : index
    %34 = vector.load %arg3[%c1_32, %c0_33, %c1_34, %c0_35, %c0_36] : memref<4x3x4x8x4xbf16, #tpu.memory_space<vmem>>, vector<1x1x1x8x4xbf16>
    %35 = vector.shape_cast %34 : vector<1x1x1x8x4xbf16> to vector<8x4xbf16>
    %cst_37 = arith.constant dense<0.000000e+00> : vector<8x80xf32>
    %36 = tpu.matmul %35, %33, %cst_37 {dimension_numbers = #tpu.dot_dimension_numbers<[1], [0], [0], [1], [0, 0, 1, 1], [], []>} : vector<8x4xbf16>, vector<4x80xbf16>, vector<8x80xf32> -> vector<8x80xf32>
    %37 = arith.addf %32, %36 : vector<8x80xf32>
    %38 = vector.extract_strided_slice %7 {offsets = [0, 2], sizes = [4, 80], strides = [1, 1]} : vector<4x110xbf16> to vector<4x80xbf16>
    %c1_38 = arith.constant 1 : index
    %c0_39 = arith.constant 0 : index
    %c2_40 = arith.constant 2 : index
    %c0_41 = arith.constant 0 : index
    %c0_42 = arith.constant 0 : index
    %39 = vector.load %arg3[%c1_38, %c0_39, %c2_40, %c0_41, %c0_42] : memref<4x3x4x8x4xbf16, #tpu.memory_space<vmem>>, vector<1x1x1x8x4xbf16>
    %40 = vector.shape_cast %39 : vector<1x1x1x8x4xbf16> to vector<8x4xbf16>
    %cst_43 = arith.constant dense<0.000000e+00> : vector<8x80xf32>
    %41 = tpu.matmul %40, %38, %cst_43 {dimension_numbers = #tpu.dot_dimension_numbers<[1], [0], [0], [1], [0, 0, 1, 1], [], []>} : vector<8x4xbf16>, vector<4x80xbf16>, vector<8x80xf32> -> vector<8x80xf32>
    %42 = arith.addf %37, %41 : vector<8x80xf32>
    %43 = vector.extract_strided_slice %7 {offsets = [0, 1], sizes = [4, 80], strides = [1, 1]} : vector<4x110xbf16> to vector<4x80xbf16>
    %c1_44 = arith.constant 1 : index
    %c0_45 = arith.constant 0 : index
    %c3_46 = arith.constant 3 : index
    %c0_47 = arith.constant 0 : index
    %c0_48 = arith.constant 0 : index
    %44 = vector.load %arg3[%c1_44, %c0_45, %c3_46, %c0_47, %c0_48] : memref<4x3x4x8x4xbf16, #tpu.memory_space<vmem>>, vector<1x1x1x8x4xbf16>
    %45 = vector.shape_cast %44 : vector<1x1x1x8x4xbf16> to vector<8x4xbf16>
    %cst_49 = arith.constant dense<0.000000e+00> : vector<8x80xf32>
    %46 = tpu.matmul %45, %43, %cst_49 {dimension_numbers = #tpu.dot_dimension_numbers<[1], [0], [0], [1], [0, 0, 1, 1], [], []>} : vector<8x4xbf16>, vector<4x80xbf16>, vector<8x80xf32> -> vector<8x80xf32>
    %47 = arith.addf %42, %46 : vector<8x80xf32>
    %48 = vector.extract_strided_slice %7 {offsets = [0, 21], sizes = [4, 80], strides = [1, 1]} : vector<4x110xbf16> to vector<4x80xbf16>
    %c2_50 = arith.constant 2 : index
    %c0_51 = arith.constant 0 : index
    %c0_52 = arith.constant 0 : index
    %c0_53 = arith.constant 0 : index
    %c0_54 = arith.constant 0 : index
    %49 = vector.load %arg3[%c2_50, %c0_51, %c0_52, %c0_53, %c0_54] : memref<4x3x4x8x4xbf16, #tpu.memory_space<vmem>>, vector<1x1x1x8x4xbf16>
    %50 = vector.shape_cast %49 : vector<1x1x1x8x4xbf16> to vector<8x4xbf16>
    %cst_55 = arith.constant dense<0.000000e+00> : vector<8x80xf32>
    %51 = tpu.matmul %50, %48, %cst_55 {dimension_numbers = #tpu.dot_dimension_numbers<[1], [0], [0], [1], [0, 0, 1, 1], [], []>} : vector<8x4xbf16>, vector<4x80xbf16>, vector<8x80xf32> -> vector<8x80xf32>
    %52 = arith.addf %2, %51 : vector<8x80xf32>
    %53 = vector.extract_strided_slice %7 {offsets = [0, 20], sizes = [4, 80], strides = [1, 1]} : vector<4x110xbf16> to vector<4x80xbf16>
    %c2_56 = arith.constant 2 : index
    %c0_57 = arith.constant 0 : index
    %c1_58 = arith.constant 1 : index
    %c0_59 = arith.constant 0 : index
    %c0_60 = arith.constant 0 : index
    %54 = vector.load %arg3[%c2_56, %c0_57, %c1_58, %c0_59, %c0_60] : memref<4x3x4x8x4xbf16, #tpu.memory_space<vmem>>, vector<1x1x1x8x4xbf16>
    %55 = vector.shape_cast %54 : vector<1x1x1x8x4xbf16> to vector<8x4xbf16>
    %cst_61 = arith.constant dense<0.000000e+00> : vector<8x80xf32>
    %56 = tpu.matmul %55, %53, %cst_61 {dimension_numbers = #tpu.dot_dimension_numbers<[1], [0], [0], [1], [0, 0, 1, 1], [], []>} : vector<8x4xbf16>, vector<4x80xbf16>, vector<8x80xf32> -> vector<8x80xf32>
    %57 = arith.addf %52, %56 : vector<8x80xf32>
    %58 = vector.extract_strided_slice %7 {offsets = [0, 11], sizes = [4, 80], strides = [1, 1]} : vector<4x110xbf16> to vector<4x80xbf16>
    %c2_62 = arith.constant 2 : index
    %c0_63 = arith.constant 0 : index
    %c2_64 = arith.constant 2 : index
    %c0_65 = arith.constant 0 : index
    %c0_66 = arith.constant 0 : index
    %59 = vector.load %arg3[%c2_62, %c0_63, %c2_64, %c0_65, %c0_66] : memref<4x3x4x8x4xbf16, #tpu.memory_space<vmem>>, vector<1x1x1x8x4xbf16>
    %60 = vector.shape_cast %59 : vector<1x1x1x8x4xbf16> to vector<8x4xbf16>
    %cst_67 = arith.constant dense<0.000000e+00> : vector<8x80xf32>
    %61 = tpu.matmul %60, %58, %cst_67 {dimension_numbers = #tpu.dot_dimension_numbers<[1], [0], [0], [1], [0, 0, 1, 1], [], []>} : vector<8x4xbf16>, vector<4x80xbf16>, vector<8x80xf32> -> vector<8x80xf32>
    %62 = arith.addf %57, %61 : vector<8x80xf32>
    %63 = vector.extract_strided_slice %7 {offsets = [0, 10], sizes = [4, 80], strides = [1, 1]} : vector<4x110xbf16> to vector<4x80xbf16>
    %c2_68 = arith.constant 2 : index
    %c0_69 = arith.constant 0 : index
    %c3_70 = arith.constant 3 : index
    %c0_71 = arith.constant 0 : index
    %c0_72 = arith.constant 0 : index
    %64 = vector.load %arg3[%c2_68, %c0_69, %c3_70, %c0_71, %c0_72] : memref<4x3x4x8x4xbf16, #tpu.memory_space<vmem>>, vector<1x1x1x8x4xbf16>
    %65 = vector.shape_cast %64 : vector<1x1x1x8x4xbf16> to vector<8x4xbf16>
    %cst_73 = arith.constant dense<0.000000e+00> : vector<8x80xf32>
    %66 = tpu.matmul %65, %63, %cst_73 {dimension_numbers = #tpu.dot_dimension_numbers<[1], [0], [0], [1], [0, 0, 1, 1], [], []>} : vector<8x4xbf16>, vector<4x80xbf16>, vector<8x80xf32> -> vector<8x80xf32>
    %67 = arith.addf %62, %66 : vector<8x80xf32>
    %68 = vector.extract_strided_slice %7 {offsets = [0, 22], sizes = [4, 80], strides = [1, 1]} : vector<4x110xbf16> to vector<4x80xbf16>
    %c3_74 = arith.constant 3 : index
    %c0_75 = arith.constant 0 : index
    %c0_76 = arith.constant 0 : index
    %c0_77 = arith.constant 0 : index
    %c0_78 = arith.constant 0 : index
    %69 = vector.load %arg3[%c3_74, %c0_75, %c0_76, %c0_77, %c0_78] : memref<4x3x4x8x4xbf16, #tpu.memory_space<vmem>>, vector<1x1x1x8x4xbf16>
    %70 = vector.shape_cast %69 : vector<1x1x1x8x4xbf16> to vector<8x4xbf16>
    %cst_79 = arith.constant dense<0.000000e+00> : vector<8x80xf32>
    %71 = tpu.matmul %70, %68, %cst_79 {dimension_numbers = #tpu.dot_dimension_numbers<[1], [0], [0], [1], [0, 0, 1, 1], [], []>} : vector<8x4xbf16>, vector<4x80xbf16>, vector<8x80xf32> -> vector<8x80xf32>
    %72 = arith.addf %3, %71 : vector<8x80xf32>
    %73 = vector.extract_strided_slice %7 {offsets = [0, 21], sizes = [4, 80], strides = [1, 1]} : vector<4x110xbf16> to vector<4x80xbf16>
    %c3_80 = arith.constant 3 : index
    %c0_81 = arith.constant 0 : index
    %c1_82 = arith.constant 1 : index
    %c0_83 = arith.constant 0 : index
    %c0_84 = arith.constant 0 : index
    %74 = vector.load %arg3[%c3_80, %c0_81, %c1_82, %c0_83, %c0_84] : memref<4x3x4x8x4xbf16, #tpu.memory_space<vmem>>, vector<1x1x1x8x4xbf16>
    %75 = vector.shape_cast %74 : vector<1x1x1x8x4xbf16> to vector<8x4xbf16>
    %cst_85 = arith.constant dense<0.000000e+00> : vector<8x80xf32>
    %76 = tpu.matmul %75, %73, %cst_85 {dimension_numbers = #tpu.dot_dimension_numbers<[1], [0], [0], [1], [0, 0, 1, 1], [], []>} : vector<8x4xbf16>, vector<4x80xbf16>, vector<8x80xf32> -> vector<8x80xf32>
    %77 = arith.addf %72, %76 : vector<8x80xf32>
    %78 = vector.extract_strided_slice %7 {offsets = [0, 12], sizes = [4, 80], strides = [1, 1]} : vector<4x110xbf16> to vector<4x80xbf16>
    %c3_86 = arith.constant 3 : index
    %c0_87 = arith.constant 0 : index
    %c2_88 = arith.constant 2 : index
    %c0_89 = arith.constant 0 : index
    %c0_90 = arith.constant 0 : index
    %79 = vector.load %arg3[%c3_86, %c0_87, %c2_88, %c0_89, %c0_90] : memref<4x3x4x8x4xbf16, #tpu.memory_space<vmem>>, vector<1x1x1x8x4xbf16>
    %80 = vector.shape_cast %79 : vector<1x1x1x8x4xbf16> to vector<8x4xbf16>
    %cst_91 = arith.constant dense<0.000000e+00> : vector<8x80xf32>
    %81 = tpu.matmul %80, %78, %cst_91 {dimension_numbers = #tpu.dot_dimension_numbers<[1], [0], [0], [1], [0, 0, 1, 1], [], []>} : vector<8x4xbf16>, vector<4x80xbf16>, vector<8x80xf32> -> vector<8x80xf32>
    %82 = arith.addf %77, %81 : vector<8x80xf32>
    %83 = vector.extract_strided_slice %7 {offsets = [0, 11], sizes = [4, 80], strides = [1, 1]} : vector<4x110xbf16> to vector<4x80xbf16>
    %c3_92 = arith.constant 3 : index
    %c0_93 = arith.constant 0 : index
    %c3_94 = arith.constant 3 : index
    %c0_95 = arith.constant 0 : index
    %c0_96 = arith.constant 0 : index
    %84 = vector.load %arg3[%c3_92, %c0_93, %c3_94, %c0_95, %c0_96] : memref<4x3x4x8x4xbf16, #tpu.memory_space<vmem>>, vector<1x1x1x8x4xbf16>
    %85 = vector.shape_cast %84 : vector<1x1x1x8x4xbf16> to vector<8x4xbf16>
    %cst_97 = arith.constant dense<0.000000e+00> : vector<8x80xf32>
    %86 = tpu.matmul %85, %83, %cst_97 {dimension_numbers = #tpu.dot_dimension_numbers<[1], [0], [0], [1], [0, 0, 1, 1], [], []>} : vector<8x4xbf16>, vector<4x80xbf16>, vector<8x80xf32> -> vector<8x80xf32>
    %87 = arith.addf %82, %86 : vector<8x80xf32>
    %c1_i32 = arith.constant 1 : i32
    %88 = arith.addi %arg1, %c1_i32 : i32
    %c0_98 = arith.constant 0 : index
    %89 = arith.index_cast %88 : i32 to index
    %c0_99 = arith.constant 0 : index
    %c0_100 = arith.constant 0 : index
    %90 = vector.load %arg2[%c0_98, %89, %c0_99, %c0_100] : memref<1x6x4x110xbf16, #tpu.memory_space<vmem>>, vector<1x1x4x110xbf16>
    %91 = vector.shape_cast %90 : vector<1x1x4x110xbf16> to vector<4x110xbf16>
    %92 = vector.extract_strided_slice %91 {offsets = [0, 11], sizes = [4, 80], strides = [1, 1]} : vector<4x110xbf16> to vector<4x80xbf16>
    %c0_101 = arith.constant 0 : index
    %c1_102 = arith.constant 1 : index
    %c0_103 = arith.constant 0 : index
    %c0_104 = arith.constant 0 : index
    %c0_105 = arith.constant 0 : index
    %93 = vector.load %arg3[%c0_101, %c1_102, %c0_103, %c0_104, %c0_105] : memref<4x3x4x8x4xbf16, #tpu.memory_space<vmem>>, vector<1x1x1x8x4xbf16>
    %94 = vector.shape_cast %93 : vector<1x1x1x8x4xbf16> to vector<8x4xbf16>
    %cst_106 = arith.constant dense<0.000000e+00> : vector<8x80xf32>
    %95 = tpu.matmul %94, %92, %cst_106 {dimension_numbers = #tpu.dot_dimension_numbers<[1], [0], [0], [1], [0, 0, 1, 1], [], []>} : vector<8x4xbf16>, vector<4x80xbf16>, vector<8x80xf32> -> vector<8x80xf32>
    %96 = arith.addf %27, %95 : vector<8x80xf32>
    %97 = vector.extract_strided_slice %91 {offsets = [0, 10], sizes = [4, 80], strides = [1, 1]} : vector<4x110xbf16> to vector<4x80xbf16>
    %c0_107 = arith.constant 0 : index
    %c1_108 = arith.constant 1 : index
    %c1_109 = arith.constant 1 : index
    %c0_110 = arith.constant 0 : index
    %c0_111 = arith.constant 0 : index
    %98 = vector.load %arg3[%c0_107, %c1_108, %c1_109, %c0_110, %c0_111] : memref<4x3x4x8x4xbf16, #tpu.memory_space<vmem>>, vector<1x1x1x8x4xbf16>
    %99 = vector.shape_cast %98 : vector<1x1x1x8x4xbf16> to vector<8x4xbf16>
    %cst_112 = arith.constant dense<0.000000e+00> : vector<8x80xf32>
    %100 = tpu.matmul %99, %97, %cst_112 {dimension_numbers = #tpu.dot_dimension_numbers<[1], [0], [0], [1], [0, 0, 1, 1], [], []>} : vector<8x4xbf16>, vector<4x80xbf16>, vector<8x80xf32> -> vector<8x80xf32>
    %101 = arith.addf %96, %100 : vector<8x80xf32>
    %102 = vector.extract_strided_slice %91 {offsets = [0, 1], sizes = [4, 80], strides = [1, 1]} : vector<4x110xbf16> to vector<4x80xbf16>
    %c0_113 = arith.constant 0 : index
    %c1_114 = arith.constant 1 : index
    %c2_115 = arith.constant 2 : index
    %c0_116 = arith.constant 0 : index
    %c0_117 = arith.constant 0 : index
    %103 = vector.load %arg3[%c0_113, %c1_114, %c2_115, %c0_116, %c0_117] : memref<4x3x4x8x4xbf16, #tpu.memory_space<vmem>>, vector<1x1x1x8x4xbf16>
    %104 = vector.shape_cast %103 : vector<1x1x1x8x4xbf16> to vector<8x4xbf16>
    %cst_118 = arith.constant dense<0.000000e+00> : vector<8x80xf32>
    %105 = tpu.matmul %104, %102, %cst_118 {dimension_numbers = #tpu.dot_dimension_numbers<[1], [0], [0], [1], [0, 0, 1, 1], [], []>} : vector<8x4xbf16>, vector<4x80xbf16>, vector<8x80xf32> -> vector<8x80xf32>
    %106 = arith.addf %101, %105 : vector<8x80xf32>
    %107 = vector.extract_strided_slice %91 {offsets = [0, 0], sizes = [4, 80], strides = [1, 1]} : vector<4x110xbf16> to vector<4x80xbf16>
    %c0_119 = arith.constant 0 : index
    %c1_120 = arith.constant 1 : index
    %c3_121 = arith.constant 3 : index
    %c0_122 = arith.constant 0 : index
    %c0_123 = arith.constant 0 : index
    %108 = vector.load %arg3[%c0_119, %c1_120, %c3_121, %c0_122, %c0_123] : memref<4x3x4x8x4xbf16, #tpu.memory_space<vmem>>, vector<1x1x1x8x4xbf16>
    %109 = vector.shape_cast %108 : vector<1x1x1x8x4xbf16> to vector<8x4xbf16>
    %cst_124 = arith.constant dense<0.000000e+00> : vector<8x80xf32>
    %110 = tpu.matmul %109, %107, %cst_124 {dimension_numbers = #tpu.dot_dimension_numbers<[1], [0], [0], [1], [0, 0, 1, 1], [], []>} : vector<8x4xbf16>, vector<4x80xbf16>, vector<8x80xf32> -> vector<8x80xf32>
    %111 = arith.addf %106, %110 : vector<8x80xf32>
    %112 = vector.extract_strided_slice %91 {offsets = [0, 12], sizes = [4, 80], strides = [1, 1]} : vector<4x110xbf16> to vector<4x80xbf16>
    %c1_125 = arith.constant 1 : index
    %c1_126 = arith.constant 1 : index
    %c0_127 = arith.constant 0 : index
    %c0_128 = arith.constant 0 : index
    %c0_129 = arith.constant 0 : index
    %113 = vector.load %arg3[%c1_125, %c1_126, %c0_127, %c0_128, %c0_129] : memref<4x3x4x8x4xbf16, #tpu.memory_space<vmem>>, vector<1x1x1x8x4xbf16>
    %114 = vector.shape_cast %113 : vector<1x1x1x8x4xbf16> to vector<8x4xbf16>
    %cst_130 = arith.constant dense<0.000000e+00> : vector<8x80xf32>
    %115 = tpu.matmul %114, %112, %cst_130 {dimension_numbers = #tpu.dot_dimension_numbers<[1], [0], [0], [1], [0, 0, 1, 1], [], []>} : vector<8x4xbf16>, vector<4x80xbf16>, vector<8x80xf32> -> vector<8x80xf32>
    %116 = arith.addf %47, %115 : vector<8x80xf32>
    %117 = vector.extract_strided_slice %91 {offsets = [0, 11], sizes = [4, 80], strides = [1, 1]} : vector<4x110xbf16> to vector<4x80xbf16>
    %c1_131 = arith.constant 1 : index
    %c1_132 = arith.constant 1 : index
    %c1_133 = arith.constant 1 : index
    %c0_134 = arith.constant 0 : index
    %c0_135 = arith.constant 0 : index
    %118 = vector.load %arg3[%c1_131, %c1_132, %c1_133, %c0_134, %c0_135] : memref<4x3x4x8x4xbf16, #tpu.memory_space<vmem>>, vector<1x1x1x8x4xbf16>
    %119 = vector.shape_cast %118 : vector<1x1x1x8x4xbf16> to vector<8x4xbf16>
    %cst_136 = arith.constant dense<0.000000e+00> : vector<8x80xf32>
    %120 = tpu.matmul %119, %117, %cst_136 {dimension_numbers = #tpu.dot_dimension_numbers<[1], [0], [0], [1], [0, 0, 1, 1], [], []>} : vector<8x4xbf16>, vector<4x80xbf16>, vector<8x80xf32> -> vector<8x80xf32>
    %121 = arith.addf %116, %120 : vector<8x80xf32>
    %122 = vector.extract_strided_slice %91 {offsets = [0, 2], sizes = [4, 80], strides = [1, 1]} : vector<4x110xbf16> to vector<4x80xbf16>
    %c1_137 = arith.constant 1 : index
    %c1_138 = arith.constant 1 : index
    %c2_139 = arith.constant 2 : index
    %c0_140 = arith.constant 0 : index
    %c0_141 = arith.constant 0 : index
    %123 = vector.load %arg3[%c1_137, %c1_138, %c2_139, %c0_140, %c0_141] : memref<4x3x4x8x4xbf16, #tpu.memory_space<vmem>>, vector<1x1x1x8x4xbf16>
    %124 = vector.shape_cast %123 : vector<1x1x1x8x4xbf16> to vector<8x4xbf16>
    %cst_142 = arith.constant dense<0.000000e+00> : vector<8x80xf32>
    %125 = tpu.matmul %124, %122, %cst_142 {dimension_numbers = #tpu.dot_dimension_numbers<[1], [0], [0], [1], [0, 0, 1, 1], [], []>} : vector<8x4xbf16>, vector<4x80xbf16>, vector<8x80xf32> -> vector<8x80xf32>
    %126 = arith.addf %121, %125 : vector<8x80xf32>
    %127 = vector.extract_strided_slice %91 {offsets = [0, 1], sizes = [4, 80], strides = [1, 1]} : vector<4x110xbf16> to vector<4x80xbf16>
    %c1_143 = arith.constant 1 : index
    %c1_144 = arith.constant 1 : index
    %c3_145 = arith.constant 3 : index
    %c0_146 = arith.constant 0 : index
    %c0_147 = arith.constant 0 : index
    %128 = vector.load %arg3[%c1_143, %c1_144, %c3_145, %c0_146, %c0_147] : memref<4x3x4x8x4xbf16, #tpu.memory_space<vmem>>, vector<1x1x1x8x4xbf16>
    %129 = vector.shape_cast %128 : vector<1x1x1x8x4xbf16> to vector<8x4xbf16>
    %cst_148 = arith.constant dense<0.000000e+00> : vector<8x80xf32>
    %130 = tpu.matmul %129, %127, %cst_148 {dimension_numbers = #tpu.dot_dimension_numbers<[1], [0], [0], [1], [0, 0, 1, 1], [], []>} : vector<8x4xbf16>, vector<4x80xbf16>, vector<8x80xf32> -> vector<8x80xf32>
    %131 = arith.addf %126, %130 : vector<8x80xf32>
    %132 = vector.extract_strided_slice %91 {offsets = [0, 21], sizes = [4, 80], strides = [1, 1]} : vector<4x110xbf16> to vector<4x80xbf16>
    %c2_149 = arith.constant 2 : index
    %c1_150 = arith.constant 1 : index
    %c0_151 = arith.constant 0 : index
    %c0_152 = arith.constant 0 : index
    %c0_153 = arith.constant 0 : index
    %133 = vector.load %arg3[%c2_149, %c1_150, %c0_151, %c0_152, %c0_153] : memref<4x3x4x8x4xbf16, #tpu.memory_space<vmem>>, vector<1x1x1x8x4xbf16>
    %134 = vector.shape_cast %133 : vector<1x1x1x8x4xbf16> to vector<8x4xbf16>
    %cst_154 = arith.constant dense<0.000000e+00> : vector<8x80xf32>
    %135 = tpu.matmul %134, %132, %cst_154 {dimension_numbers = #tpu.dot_dimension_numbers<[1], [0], [0], [1], [0, 0, 1, 1], [], []>} : vector<8x4xbf16>, vector<4x80xbf16>, vector<8x80xf32> -> vector<8x80xf32>
    %136 = arith.addf %67, %135 : vector<8x80xf32>
    %137 = vector.extract_strided_slice %91 {offsets = [0, 20], sizes = [4, 80], strides = [1, 1]} : vector<4x110xbf16> to vector<4x80xbf16>
    %c2_155 = arith.constant 2 : index
    %c1_156 = arith.constant 1 : index
    %c1_157 = arith.constant 1 : index
    %c0_158 = arith.constant 0 : index
    %c0_159 = arith.constant 0 : index
    %138 = vector.load %arg3[%c2_155, %c1_156, %c1_157, %c0_158, %c0_159] : memref<4x3x4x8x4xbf16, #tpu.memory_space<vmem>>, vector<1x1x1x8x4xbf16>
    %139 = vector.shape_cast %138 : vector<1x1x1x8x4xbf16> to vector<8x4xbf16>
    %cst_160 = arith.constant dense<0.000000e+00> : vector<8x80xf32>
    %140 = tpu.matmul %139, %137, %cst_160 {dimension_numbers = #tpu.dot_dimension_numbers<[1], [0], [0], [1], [0, 0, 1, 1], [], []>} : vector<8x4xbf16>, vector<4x80xbf16>, vector<8x80xf32> -> vector<8x80xf32>
    %141 = arith.addf %136, %140 : vector<8x80xf32>
    %142 = vector.extract_strided_slice %91 {offsets = [0, 11], sizes = [4, 80], strides = [1, 1]} : vector<4x110xbf16> to vector<4x80xbf16>
    %c2_161 = arith.constant 2 : index
    %c1_162 = arith.constant 1 : index
    %c2_163 = arith.constant 2 : index
    %c0_164 = arith.constant 0 : index
    %c0_165 = arith.constant 0 : index
    %143 = vector.load %arg3[%c2_161, %c1_162, %c2_163, %c0_164, %c0_165] : memref<4x3x4x8x4xbf16, #tpu.memory_space<vmem>>, vector<1x1x1x8x4xbf16>
    %144 = vector.shape_cast %143 : vector<1x1x1x8x4xbf16> to vector<8x4xbf16>
    %cst_166 = arith.constant dense<0.000000e+00> : vector<8x80xf32>
    %145 = tpu.matmul %144, %142, %cst_166 {dimension_numbers = #tpu.dot_dimension_numbers<[1], [0], [0], [1], [0, 0, 1, 1], [], []>} : vector<8x4xbf16>, vector<4x80xbf16>, vector<8x80xf32> -> vector<8x80xf32>
    %146 = arith.addf %141, %145 : vector<8x80xf32>
    %147 = vector.extract_strided_slice %91 {offsets = [0, 10], sizes = [4, 80], strides = [1, 1]} : vector<4x110xbf16> to vector<4x80xbf16>
    %c2_167 = arith.constant 2 : index
    %c1_168 = arith.constant 1 : index
    %c3_169 = arith.constant 3 : index
    %c0_170 = arith.constant 0 : index
    %c0_171 = arith.constant 0 : index
    %148 = vector.load %arg3[%c2_167, %c1_168, %c3_169, %c0_170, %c0_171] : memref<4x3x4x8x4xbf16, #tpu.memory_space<vmem>>, vector<1x1x1x8x4xbf16>
    %149 = vector.shape_cast %148 : vector<1x1x1x8x4xbf16> to vector<8x4xbf16>
    %cst_172 = arith.constant dense<0.000000e+00> : vector<8x80xf32>
    %150 = tpu.matmul %149, %147, %cst_172 {dimension_numbers = #tpu.dot_dimension_numbers<[1], [0], [0], [1], [0, 0, 1, 1], [], []>} : vector<8x4xbf16>, vector<4x80xbf16>, vector<8x80xf32> -> vector<8x80xf32>
    %151 = arith.addf %146, %150 : vector<8x80xf32>
    %152 = vector.extract_strided_slice %91 {offsets = [0, 22], sizes = [4, 80], strides = [1, 1]} : vector<4x110xbf16> to vector<4x80xbf16>
    %c3_173 = arith.constant 3 : index
    %c1_174 = arith.constant 1 : index
    %c0_175 = arith.constant 0 : index
    %c0_176 = arith.constant 0 : index
    %c0_177 = arith.constant 0 : index
    %153 = vector.load %arg3[%c3_173, %c1_174, %c0_175, %c0_176, %c0_177] : memref<4x3x4x8x4xbf16, #tpu.memory_space<vmem>>, vector<1x1x1x8x4xbf16>
    %154 = vector.shape_cast %153 : vector<1x1x1x8x4xbf16> to vector<8x4xbf16>
    %cst_178 = arith.constant dense<0.000000e+00> : vector<8x80xf32>
    %155 = tpu.matmul %154, %152, %cst_178 {dimension_numbers = #tpu.dot_dimension_numbers<[1], [0], [0], [1], [0, 0, 1, 1], [], []>} : vector<8x4xbf16>, vector<4x80xbf16>, vector<8x80xf32> -> vector<8x80xf32>
    %156 = arith.addf %87, %155 : vector<8x80xf32>
    %157 = vector.extract_strided_slice %91 {offsets = [0, 21], sizes = [4, 80], strides = [1, 1]} : vector<4x110xbf16> to vector<4x80xbf16>
    %c3_179 = arith.constant 3 : index
    %c1_180 = arith.constant 1 : index
    %c1_181 = arith.constant 1 : index
    %c0_182 = arith.constant 0 : index
    %c0_183 = arith.constant 0 : index
    %158 = vector.load %arg3[%c3_179, %c1_180, %c1_181, %c0_182, %c0_183] : memref<4x3x4x8x4xbf16, #tpu.memory_space<vmem>>, vector<1x1x1x8x4xbf16>
    %159 = vector.shape_cast %158 : vector<1x1x1x8x4xbf16> to vector<8x4xbf16>
    %cst_184 = arith.constant dense<0.000000e+00> : vector<8x80xf32>
    %160 = tpu.matmul %159, %157, %cst_184 {dimension_numbers = #tpu.dot_dimension_numbers<[1], [0], [0], [1], [0, 0, 1, 1], [], []>} : vector<8x4xbf16>, vector<4x80xbf16>, vector<8x80xf32> -> vector<8x80xf32>
    %161 = arith.addf %156, %160 : vector<8x80xf32>
    %162 = vector.extract_strided_slice %91 {offsets = [0, 12], sizes = [4, 80], strides = [1, 1]} : vector<4x110xbf16> to vector<4x80xbf16>
    %c3_185 = arith.constant 3 : index
    %c1_186 = arith.constant 1 : index
    %c2_187 = arith.constant 2 : index
    %c0_188 = arith.constant 0 : index
    %c0_189 = arith.constant 0 : index
    %163 = vector.load %arg3[%c3_185, %c1_186, %c2_187, %c0_188, %c0_189] : memref<4x3x4x8x4xbf16, #tpu.memory_space<vmem>>, vector<1x1x1x8x4xbf16>
    %164 = vector.shape_cast %163 : vector<1x1x1x8x4xbf16> to vector<8x4xbf16>
    %cst_190 = arith.constant dense<0.000000e+00> : vector<8x80xf32>
    %165 = tpu.matmul %164, %162, %cst_190 {dimension_numbers = #tpu.dot_dimension_numbers<[1], [0], [0], [1], [0, 0, 1, 1], [], []>} : vector<8x4xbf16>, vector<4x80xbf16>, vector<8x80xf32> -> vector<8x80xf32>
    %166 = arith.addf %161, %165 : vector<8x80xf32>
    %167 = vector.extract_strided_slice %91 {offsets = [0, 11], sizes = [4, 80], strides = [1, 1]} : vector<4x110xbf16> to vector<4x80xbf16>
    %c3_191 = arith.constant 3 : index
    %c1_192 = arith.constant 1 : index
    %c3_193 = arith.constant 3 : index
    %c0_194 = arith.constant 0 : index
    %c0_195 = arith.constant 0 : index
    %168 = vector.load %arg3[%c3_191, %c1_192, %c3_193, %c0_194, %c0_195] : memref<4x3x4x8x4xbf16, #tpu.memory_space<vmem>>, vector<1x1x1x8x4xbf16>
    %169 = vector.shape_cast %168 : vector<1x1x1x8x4xbf16> to vector<8x4xbf16>
    %cst_196 = arith.constant dense<0.000000e+00> : vector<8x80xf32>
    %170 = tpu.matmul %169, %167, %cst_196 {dimension_numbers = #tpu.dot_dimension_numbers<[1], [0], [0], [1], [0, 0, 1, 1], [], []>} : vector<8x4xbf16>, vector<4x80xbf16>, vector<8x80xf32> -> vector<8x80xf32>
    %171 = arith.addf %166, %170 : vector<8x80xf32>
    %c0_i32 = arith.constant 0 : i32
    %172 = arith.addi %arg1, %c0_i32 : i32
    %c0_197 = arith.constant 0 : index
    %173 = arith.index_cast %172 : i32 to index
    %c0_198 = arith.constant 0 : index
    %c0_199 = arith.constant 0 : index
    %174 = vector.load %arg2[%c0_197, %173, %c0_198, %c0_199] : memref<1x6x4x110xbf16, #tpu.memory_space<vmem>>, vector<1x1x4x110xbf16>
    %175 = vector.shape_cast %174 : vector<1x1x4x110xbf16> to vector<4x110xbf16>
    %176 = vector.extract_strided_slice %175 {offsets = [0, 11], sizes = [4, 80], strides = [1, 1]} : vector<4x110xbf16> to vector<4x80xbf16>
    %c0_200 = arith.constant 0 : index
    %c2_201 = arith.constant 2 : index
    %c0_202 = arith.constant 0 : index
    %c0_203 = arith.constant 0 : index
    %c0_204 = arith.constant 0 : index
    %177 = vector.load %arg3[%c0_200, %c2_201, %c0_202, %c0_203, %c0_204] : memref<4x3x4x8x4xbf16, #tpu.memory_space<vmem>>, vector<1x1x1x8x4xbf16>
    %178 = vector.shape_cast %177 : vector<1x1x1x8x4xbf16> to vector<8x4xbf16>
    %cst_205 = arith.constant dense<0.000000e+00> : vector<8x80xf32>
    %179 = tpu.matmul %178, %176, %cst_205 {dimension_numbers = #tpu.dot_dimension_numbers<[1], [0], [0], [1], [0, 0, 1, 1], [], []>} : vector<8x4xbf16>, vector<4x80xbf16>, vector<8x80xf32> -> vector<8x80xf32>
    %180 = arith.addf %111, %179 : vector<8x80xf32>
    %181 = vector.extract_strided_slice %175 {offsets = [0, 10], sizes = [4, 80], strides = [1, 1]} : vector<4x110xbf16> to vector<4x80xbf16>
    %c0_206 = arith.constant 0 : index
    %c2_207 = arith.constant 2 : index
    %c1_208 = arith.constant 1 : index
    %c0_209 = arith.constant 0 : index
    %c0_210 = arith.constant 0 : index
    %182 = vector.load %arg3[%c0_206, %c2_207, %c1_208, %c0_209, %c0_210] : memref<4x3x4x8x4xbf16, #tpu.memory_space<vmem>>, vector<1x1x1x8x4xbf16>
    %183 = vector.shape_cast %182 : vector<1x1x1x8x4xbf16> to vector<8x4xbf16>
    %cst_211 = arith.constant dense<0.000000e+00> : vector<8x80xf32>
    %184 = tpu.matmul %183, %181, %cst_211 {dimension_numbers = #tpu.dot_dimension_numbers<[1], [0], [0], [1], [0, 0, 1, 1], [], []>} : vector<8x4xbf16>, vector<4x80xbf16>, vector<8x80xf32> -> vector<8x80xf32>
    %185 = arith.addf %180, %184 : vector<8x80xf32>
    %186 = vector.extract_strided_slice %175 {offsets = [0, 1], sizes = [4, 80], strides = [1, 1]} : vector<4x110xbf16> to vector<4x80xbf16>
    %c0_212 = arith.constant 0 : index
    %c2_213 = arith.constant 2 : index
    %c2_214 = arith.constant 2 : index
    %c0_215 = arith.constant 0 : index
    %c0_216 = arith.constant 0 : index
    %187 = vector.load %arg3[%c0_212, %c2_213, %c2_214, %c0_215, %c0_216] : memref<4x3x4x8x4xbf16, #tpu.memory_space<vmem>>, vector<1x1x1x8x4xbf16>
    %188 = vector.shape_cast %187 : vector<1x1x1x8x4xbf16> to vector<8x4xbf16>
    %cst_217 = arith.constant dense<0.000000e+00> : vector<8x80xf32>
    %189 = tpu.matmul %188, %186, %cst_217 {dimension_numbers = #tpu.dot_dimension_numbers<[1], [0], [0], [1], [0, 0, 1, 1], [], []>} : vector<8x4xbf16>, vector<4x80xbf16>, vector<8x80xf32> -> vector<8x80xf32>
    %190 = arith.addf %185, %189 : vector<8x80xf32>
    %191 = vector.extract_strided_slice %175 {offsets = [0, 0], sizes = [4, 80], strides = [1, 1]} : vector<4x110xbf16> to vector<4x80xbf16>
    %c0_218 = arith.constant 0 : index
    %c2_219 = arith.constant 2 : index
    %c3_220 = arith.constant 3 : index
    %c0_221 = arith.constant 0 : index
    %c0_222 = arith.constant 0 : index
    %192 = vector.load %arg3[%c0_218, %c2_219, %c3_220, %c0_221, %c0_222] : memref<4x3x4x8x4xbf16, #tpu.memory_space<vmem>>, vector<1x1x1x8x4xbf16>
    %193 = vector.shape_cast %192 : vector<1x1x1x8x4xbf16> to vector<8x4xbf16>
    %cst_223 = arith.constant dense<0.000000e+00> : vector<8x80xf32>
    %194 = tpu.matmul %193, %191, %cst_223 {dimension_numbers = #tpu.dot_dimension_numbers<[1], [0], [0], [1], [0, 0, 1, 1], [], []>} : vector<8x4xbf16>, vector<4x80xbf16>, vector<8x80xf32> -> vector<8x80xf32>
    %195 = arith.addf %190, %194 : vector<8x80xf32>
    %196 = vector.extract_strided_slice %175 {offsets = [0, 12], sizes = [4, 80], strides = [1, 1]} : vector<4x110xbf16> to vector<4x80xbf16>
    %c1_224 = arith.constant 1 : index
    %c2_225 = arith.constant 2 : index
    %c0_226 = arith.constant 0 : index
    %c0_227 = arith.constant 0 : index
    %c0_228 = arith.constant 0 : index
    %197 = vector.load %arg3[%c1_224, %c2_225, %c0_226, %c0_227, %c0_228] : memref<4x3x4x8x4xbf16, #tpu.memory_space<vmem>>, vector<1x1x1x8x4xbf16>
    %198 = vector.shape_cast %197 : vector<1x1x1x8x4xbf16> to vector<8x4xbf16>
    %cst_229 = arith.constant dense<0.000000e+00> : vector<8x80xf32>
    %199 = tpu.matmul %198, %196, %cst_229 {dimension_numbers = #tpu.dot_dimension_numbers<[1], [0], [0], [1], [0, 0, 1, 1], [], []>} : vector<8x4xbf16>, vector<4x80xbf16>, vector<8x80xf32> -> vector<8x80xf32>
    %200 = arith.addf %131, %199 : vector<8x80xf32>
    %201 = vector.extract_strided_slice %175 {offsets = [0, 11], sizes = [4, 80], strides = [1, 1]} : vector<4x110xbf16> to vector<4x80xbf16>
    %c1_230 = arith.constant 1 : index
    %c2_231 = arith.constant 2 : index
    %c1_232 = arith.constant 1 : index
    %c0_233 = arith.constant 0 : index
    %c0_234 = arith.constant 0 : index
    %202 = vector.load %arg3[%c1_230, %c2_231, %c1_232, %c0_233, %c0_234] : memref<4x3x4x8x4xbf16, #tpu.memory_space<vmem>>, vector<1x1x1x8x4xbf16>
    %203 = vector.shape_cast %202 : vector<1x1x1x8x4xbf16> to vector<8x4xbf16>
    %cst_235 = arith.constant dense<0.000000e+00> : vector<8x80xf32>
    %204 = tpu.matmul %203, %201, %cst_235 {dimension_numbers = #tpu.dot_dimension_numbers<[1], [0], [0], [1], [0, 0, 1, 1], [], []>} : vector<8x4xbf16>, vector<4x80xbf16>, vector<8x80xf32> -> vector<8x80xf32>
    %205 = arith.addf %200, %204 : vector<8x80xf32>
    %206 = vector.extract_strided_slice %175 {offsets = [0, 2], sizes = [4, 80], strides = [1, 1]} : vector<4x110xbf16> to vector<4x80xbf16>
    %c1_236 = arith.constant 1 : index
    %c2_237 = arith.constant 2 : index
    %c2_238 = arith.constant 2 : index
    %c0_239 = arith.constant 0 : index
    %c0_240 = arith.constant 0 : index
    %207 = vector.load %arg3[%c1_236, %c2_237, %c2_238, %c0_239, %c0_240] : memref<4x3x4x8x4xbf16, #tpu.memory_space<vmem>>, vector<1x1x1x8x4xbf16>
    %208 = vector.shape_cast %207 : vector<1x1x1x8x4xbf16> to vector<8x4xbf16>
    %cst_241 = arith.constant dense<0.000000e+00> : vector<8x80xf32>
    %209 = tpu.matmul %208, %206, %cst_241 {dimension_numbers = #tpu.dot_dimension_numbers<[1], [0], [0], [1], [0, 0, 1, 1], [], []>} : vector<8x4xbf16>, vector<4x80xbf16>, vector<8x80xf32> -> vector<8x80xf32>
    %210 = arith.addf %205, %209 : vector<8x80xf32>
    %211 = vector.extract_strided_slice %175 {offsets = [0, 1], sizes = [4, 80], strides = [1, 1]} : vector<4x110xbf16> to vector<4x80xbf16>
    %c1_242 = arith.constant 1 : index
    %c2_243 = arith.constant 2 : index
    %c3_244 = arith.constant 3 : index
    %c0_245 = arith.constant 0 : index
    %c0_246 = arith.constant 0 : index
    %212 = vector.load %arg3[%c1_242, %c2_243, %c3_244, %c0_245, %c0_246] : memref<4x3x4x8x4xbf16, #tpu.memory_space<vmem>>, vector<1x1x1x8x4xbf16>
    %213 = vector.shape_cast %212 : vector<1x1x1x8x4xbf16> to vector<8x4xbf16>
    %cst_247 = arith.constant dense<0.000000e+00> : vector<8x80xf32>
    %214 = tpu.matmul %213, %211, %cst_247 {dimension_numbers = #tpu.dot_dimension_numbers<[1], [0], [0], [1], [0, 0, 1, 1], [], []>} : vector<8x4xbf16>, vector<4x80xbf16>, vector<8x80xf32> -> vector<8x80xf32>
    %215 = arith.addf %210, %214 : vector<8x80xf32>
    %216 = vector.extract_strided_slice %175 {offsets = [0, 21], sizes = [4, 80], strides = [1, 1]} : vector<4x110xbf16> to vector<4x80xbf16>
    %c2_248 = arith.constant 2 : index
    %c2_249 = arith.constant 2 : index
    %c0_250 = arith.constant 0 : index
    %c0_251 = arith.constant 0 : index
    %c0_252 = arith.constant 0 : index
    %217 = vector.load %arg3[%c2_248, %c2_249, %c0_250, %c0_251, %c0_252] : memref<4x3x4x8x4xbf16, #tpu.memory_space<vmem>>, vector<1x1x1x8x4xbf16>
    %218 = vector.shape_cast %217 : vector<1x1x1x8x4xbf16> to vector<8x4xbf16>
    %cst_253 = arith.constant dense<0.000000e+00> : vector<8x80xf32>
    %219 = tpu.matmul %218, %216, %cst_253 {dimension_numbers = #tpu.dot_dimension_numbers<[1], [0], [0], [1], [0, 0, 1, 1], [], []>} : vector<8x4xbf16>, vector<4x80xbf16>, vector<8x80xf32> -> vector<8x80xf32>
    %220 = arith.addf %151, %219 : vector<8x80xf32>
    %221 = vector.extract_strided_slice %175 {offsets = [0, 20], sizes = [4, 80], strides = [1, 1]} : vector<4x110xbf16> to vector<4x80xbf16>
    %c2_254 = arith.constant 2 : index
    %c2_255 = arith.constant 2 : index
    %c1_256 = arith.constant 1 : index
    %c0_257 = arith.constant 0 : index
    %c0_258 = arith.constant 0 : index
    %222 = vector.load %arg3[%c2_254, %c2_255, %c1_256, %c0_257, %c0_258] : memref<4x3x4x8x4xbf16, #tpu.memory_space<vmem>>, vector<1x1x1x8x4xbf16>
    %223 = vector.shape_cast %222 : vector<1x1x1x8x4xbf16> to vector<8x4xbf16>
    %cst_259 = arith.constant dense<0.000000e+00> : vector<8x80xf32>
    %224 = tpu.matmul %223, %221, %cst_259 {dimension_numbers = #tpu.dot_dimension_numbers<[1], [0], [0], [1], [0, 0, 1, 1], [], []>} : vector<8x4xbf16>, vector<4x80xbf16>, vector<8x80xf32> -> vector<8x80xf32>
    %225 = arith.addf %220, %224 : vector<8x80xf32>
    %226 = vector.extract_strided_slice %175 {offsets = [0, 11], sizes = [4, 80], strides = [1, 1]} : vector<4x110xbf16> to vector<4x80xbf16>
    %c2_260 = arith.constant 2 : index
    %c2_261 = arith.constant 2 : index
    %c2_262 = arith.constant 2 : index
    %c0_263 = arith.constant 0 : index
    %c0_264 = arith.constant 0 : index
    %227 = vector.load %arg3[%c2_260, %c2_261, %c2_262, %c0_263, %c0_264] : memref<4x3x4x8x4xbf16, #tpu.memory_space<vmem>>, vector<1x1x1x8x4xbf16>
    %228 = vector.shape_cast %227 : vector<1x1x1x8x4xbf16> to vector<8x4xbf16>
    %cst_265 = arith.constant dense<0.000000e+00> : vector<8x80xf32>
    %229 = tpu.matmul %228, %226, %cst_265 {dimension_numbers = #tpu.dot_dimension_numbers<[1], [0], [0], [1], [0, 0, 1, 1], [], []>} : vector<8x4xbf16>, vector<4x80xbf16>, vector<8x80xf32> -> vector<8x80xf32>
    %230 = arith.addf %225, %229 : vector<8x80xf32>
    %231 = vector.extract_strided_slice %175 {offsets = [0, 10], sizes = [4, 80], strides = [1, 1]} : vector<4x110xbf16> to vector<4x80xbf16>
    %c2_266 = arith.constant 2 : index
    %c2_267 = arith.constant 2 : index
    %c3_268 = arith.constant 3 : index
    %c0_269 = arith.constant 0 : index
    %c0_270 = arith.constant 0 : index
    %232 = vector.load %arg3[%c2_266, %c2_267, %c3_268, %c0_269, %c0_270] : memref<4x3x4x8x4xbf16, #tpu.memory_space<vmem>>, vector<1x1x1x8x4xbf16>
    %233 = vector.shape_cast %232 : vector<1x1x1x8x4xbf16> to vector<8x4xbf16>
    %cst_271 = arith.constant dense<0.000000e+00> : vector<8x80xf32>
    %234 = tpu.matmul %233, %231, %cst_271 {dimension_numbers = #tpu.dot_dimension_numbers<[1], [0], [0], [1], [0, 0, 1, 1], [], []>} : vector<8x4xbf16>, vector<4x80xbf16>, vector<8x80xf32> -> vector<8x80xf32>
    %235 = arith.addf %230, %234 : vector<8x80xf32>
    %236 = vector.extract_strided_slice %175 {offsets = [0, 22], sizes = [4, 80], strides = [1, 1]} : vector<4x110xbf16> to vector<4x80xbf16>
    %c3_272 = arith.constant 3 : index
    %c2_273 = arith.constant 2 : index
    %c0_274 = arith.constant 0 : index
    %c0_275 = arith.constant 0 : index
    %c0_276 = arith.constant 0 : index
    %237 = vector.load %arg3[%c3_272, %c2_273, %c0_274, %c0_275, %c0_276] : memref<4x3x4x8x4xbf16, #tpu.memory_space<vmem>>, vector<1x1x1x8x4xbf16>
    %238 = vector.shape_cast %237 : vector<1x1x1x8x4xbf16> to vector<8x4xbf16>
    %cst_277 = arith.constant dense<0.000000e+00> : vector<8x80xf32>
    %239 = tpu.matmul %238, %236, %cst_277 {dimension_numbers = #tpu.dot_dimension_numbers<[1], [0], [0], [1], [0, 0, 1, 1], [], []>} : vector<8x4xbf16>, vector<4x80xbf16>, vector<8x80xf32> -> vector<8x80xf32>
    %240 = arith.addf %171, %239 : vector<8x80xf32>
    %241 = vector.extract_strided_slice %175 {offsets = [0, 21], sizes = [4, 80], strides = [1, 1]} : vector<4x110xbf16> to vector<4x80xbf16>
    %c3_278 = arith.constant 3 : index
    %c2_279 = arith.constant 2 : index
    %c1_280 = arith.constant 1 : index
    %c0_281 = arith.constant 0 : index
    %c0_282 = arith.constant 0 : index
    %242 = vector.load %arg3[%c3_278, %c2_279, %c1_280, %c0_281, %c0_282] : memref<4x3x4x8x4xbf16, #tpu.memory_space<vmem>>, vector<1x1x1x8x4xbf16>
    %243 = vector.shape_cast %242 : vector<1x1x1x8x4xbf16> to vector<8x4xbf16>
    %cst_283 = arith.constant dense<0.000000e+00> : vector<8x80xf32>
    %244 = tpu.matmul %243, %241, %cst_283 {dimension_numbers = #tpu.dot_dimension_numbers<[1], [0], [0], [1], [0, 0, 1, 1], [], []>} : vector<8x4xbf16>, vector<4x80xbf16>, vector<8x80xf32> -> vector<8x80xf32>
    %245 = arith.addf %240, %244 : vector<8x80xf32>
    %246 = vector.extract_strided_slice %175 {offsets = [0, 12], sizes = [4, 80], strides = [1, 1]} : vector<4x110xbf16> to vector<4x80xbf16>
    %c3_284 = arith.constant 3 : index
    %c2_285 = arith.constant 2 : index
    %c2_286 = arith.constant 2 : index
    %c0_287 = arith.constant 0 : index
    %c0_288 = arith.constant 0 : index
    %247 = vector.load %arg3[%c3_284, %c2_285, %c2_286, %c0_287, %c0_288] : memref<4x3x4x8x4xbf16, #tpu.memory_space<vmem>>, vector<1x1x1x8x4xbf16>
    %248 = vector.shape_cast %247 : vector<1x1x1x8x4xbf16> to vector<8x4xbf16>
    %cst_289 = arith.constant dense<0.000000e+00> : vector<8x80xf32>
    %249 = tpu.matmul %248, %246, %cst_289 {dimension_numbers = #tpu.dot_dimension_numbers<[1], [0], [0], [1], [0, 0, 1, 1], [], []>} : vector<8x4xbf16>, vector<4x80xbf16>, vector<8x80xf32> -> vector<8x80xf32>
    %250 = arith.addf %245, %249 : vector<8x80xf32>
    %251 = vector.extract_strided_slice %175 {offsets = [0, 11], sizes = [4, 80], strides = [1, 1]} : vector<4x110xbf16> to vector<4x80xbf16>
    %c3_290 = arith.constant 3 : index
    %c2_291 = arith.constant 2 : index
    %c3_292 = arith.constant 3 : index
    %c0_293 = arith.constant 0 : index
    %c0_294 = arith.constant 0 : index
    %252 = vector.load %arg3[%c3_290, %c2_291, %c3_292, %c0_293, %c0_294] : memref<4x3x4x8x4xbf16, #tpu.memory_space<vmem>>, vector<1x1x1x8x4xbf16>
    %253 = vector.shape_cast %252 : vector<1x1x1x8x4xbf16> to vector<8x4xbf16>
    %cst_295 = arith.constant dense<0.000000e+00> : vector<8x80xf32>
    %254 = tpu.matmul %253, %251, %cst_295 {dimension_numbers = #tpu.dot_dimension_numbers<[1], [0], [0], [1], [0, 0, 1, 1], [], []>} : vector<8x4xbf16>, vector<4x80xbf16>, vector<8x80xf32> -> vector<8x80xf32>
    %255 = arith.addf %250, %254 : vector<8x80xf32>
    %cst_296 = arith.constant 0.000000e+00 : f32
    %256 = vector.broadcast %cst_296 : f32 to vector<8x1xf32>
    %257 = tpu.iota {dimensions = array<i32: 1>} : vector<8x80xi32>
    %c10_i32 = arith.constant 10 : i32
    %c0_i32_297 = arith.constant 0 : i32
    %258 = arith.cmpi eq, %c10_i32, %c0_i32_297 : i32
    %c1_i32_298 = arith.constant 1 : i32
    %259 = arith.select %258, %c1_i32_298, %c10_i32 : i32
    %260 = vector.broadcast %259 : i32 to vector<8x80xi32>
    %261 = arith.remsi %257, %260 : vector<8x80xi32>
    %c0_i32_299 = arith.constant 0 : i32
    %262 = vector.broadcast %c0_i32_299 : i32 to vector<8x80xi32>
    %263 = arith.cmpi ne, %261, %262 : vector<8x80xi32>
    %c0_i32_300 = arith.constant 0 : i32
    %264 = vector.broadcast %c0_i32_300 : i32 to vector<8x80xi32>
    %265 = arith.cmpi slt, %261, %264 : vector<8x80xi32>
    %c0_i32_301 = arith.constant 0 : i32
    %266 = arith.cmpi slt, %259, %c0_i32_301 : i32
    %267 = vector.broadcast %266 : i1 to vector<8x80xi1>
    %268 = vector.broadcast %267 : vector<8x80xi1> to vector<8x80xi1>
    %269 = arith.xori %265, %268 : vector<8x80xi1>
    %270 = arith.andi %269, %263 : vector<8x80xi1>
    %271 = vector.broadcast %259 : i32 to vector<8x80xi32>
    %272 = arith.addi %261, %271 : vector<8x80xi32>
    %273 = arith.select %270, %272, %261 : vector<8x80xi1>, vector<8x80xi32>
    %c8_i32 = arith.constant 8 : i32
    %274 = vector.broadcast %c8_i32 : i32 to vector<8x80xi32>
    %275 = arith.cmpi slt, %273, %274 : vector<8x80xi32>
    %cst_302 = arith.constant 0.000000e+00 : f32
    %276 = vector.broadcast %cst_302 : f32 to vector<8x80xf32>
    %277 = arith.select %275, %195, %276 : vector<8x80xi1>, vector<8x80xf32>
    %cst_303 = arith.constant dense<0.000000e+00> : vector<8xf32>
    %278 = vector.multi_reduction <add>, %277, %cst_303 [1] : vector<8x80xf32> to vector<8xf32>
    %279 = vector.shape_cast %278 : vector<8xf32> to vector<8x1xf32>
    %280 = arith.addf %256, %279 : vector<8x1xf32>
    %c0_304 = arith.constant 0 : index
    %c0_305 = arith.constant 0 : index
    %281 = vector.load %arg4[%c0_304, %c0_305] : memref<8x1xf32, #tpu.memory_space<vmem>>, vector<8x1xf32>
    %282 = vector.broadcast %281 : vector<8x1xf32> to vector<8x80xf32>
    %283 = arith.addf %195, %282 : vector<8x80xf32>
    %284 = arith.truncf %283 : vector<8x80xf32> to vector<8x80xbf16>
    %c0_306 = arith.constant 0 : index
    %c0_307 = arith.constant 0 : index
    %c0_308 = arith.constant 0 : index
    %c0_309 = arith.constant 0 : index
    %c0_310 = arith.constant 0 : index
    %285 = vector.load %arg5[%c0_306, %c0_307, %c0_308, %c0_309, %c0_310] : memref<1x1x4x8x80xbf16, #tpu.memory_space<vmem>>, vector<1x1x1x8x80xbf16>
    %286 = vector.shape_cast %285 : vector<1x1x1x8x80xbf16> to vector<8x80xbf16>
    %287 = vector.shape_cast %284 : vector<8x80xbf16> to vector<1x1x1x8x80xbf16>
    tpu.vector_store %arg5[%c0_306, %c0_307, %c0_308, %c0_309, %c0_310], %287 {strides = array<i32>} : memref<1x1x4x8x80xbf16, #tpu.memory_space<vmem>>, vector<1x1x1x8x80xbf16>,
    %288 = tpu.iota {dimensions = array<i32: 1>} : vector<8x80xi32>
    %c10_i32_311 = arith.constant 10 : i32
    %c0_i32_312 = arith.constant 0 : i32
    %289 = arith.cmpi eq, %c10_i32_311, %c0_i32_312 : i32
    %c1_i32_313 = arith.constant 1 : i32
    %290 = arith.select %289, %c1_i32_313, %c10_i32_311 : i32
    %291 = vector.broadcast %290 : i32 to vector<8x80xi32>
    %292 = arith.remsi %288, %291 : vector<8x80xi32>
    %c0_i32_314 = arith.constant 0 : i32
    %293 = vector.broadcast %c0_i32_314 : i32 to vector<8x80xi32>
    %294 = arith.cmpi ne, %292, %293 : vector<8x80xi32>
    %c0_i32_315 = arith.constant 0 : i32
    %295 = vector.broadcast %c0_i32_315 : i32 to vector<8x80xi32>
    %296 = arith.cmpi slt, %292, %295 : vector<8x80xi32>
    %c0_i32_316 = arith.constant 0 : i32
    %297 = arith.cmpi slt, %290, %c0_i32_316 : i32
    %298 = vector.broadcast %297 : i1 to vector<8x80xi1>
    %299 = vector.broadcast %298 : vector<8x80xi1> to vector<8x80xi1>
    %300 = arith.xori %296, %299 : vector<8x80xi1>
    %301 = arith.andi %300, %294 : vector<8x80xi1>
    %302 = vector.broadcast %290 : i32 to vector<8x80xi32>
    %303 = arith.addi %292, %302 : vector<8x80xi32>
    %304 = arith.select %301, %303, %292 : vector<8x80xi1>, vector<8x80xi32>
    %c8_i32_317 = arith.constant 8 : i32
    %305 = vector.broadcast %c8_i32_317 : i32 to vector<8x80xi32>
    %306 = arith.cmpi slt, %304, %305 : vector<8x80xi32>
    %cst_318 = arith.constant 0.000000e+00 : f32
    %307 = vector.broadcast %cst_318 : f32 to vector<8x80xf32>
    %308 = arith.select %306, %215, %307 : vector<8x80xi1>, vector<8x80xf32>
    %cst_319 = arith.constant dense<0.000000e+00> : vector<8xf32>
    %309 = vector.multi_reduction <add>, %308, %cst_319 [1] : vector<8x80xf32> to vector<8xf32>
    %310 = vector.shape_cast %309 : vector<8xf32> to vector<8x1xf32>
    %311 = arith.addf %280, %310 : vector<8x1xf32>
    %c0_320 = arith.constant 0 : index
    %c0_321 = arith.constant 0 : index
    %312 = vector.load %arg4[%c0_320, %c0_321] : memref<8x1xf32, #tpu.memory_space<vmem>>, vector<8x1xf32>
    %313 = vector.broadcast %312 : vector<8x1xf32> to vector<8x80xf32>
    %314 = arith.addf %215, %313 : vector<8x80xf32>
    %315 = arith.truncf %314 : vector<8x80xf32> to vector<8x80xbf16>
    %c0_322 = arith.constant 0 : index
    %c0_323 = arith.constant 0 : index
    %c1_324 = arith.constant 1 : index
    %c0_325 = arith.constant 0 : index
    %c0_326 = arith.constant 0 : index
    %316 = vector.load %arg5[%c0_322, %c0_323, %c1_324, %c0_325, %c0_326] : memref<1x1x4x8x80xbf16, #tpu.memory_space<vmem>>, vector<1x1x1x8x80xbf16>
    %317 = vector.shape_cast %316 : vector<1x1x1x8x80xbf16> to vector<8x80xbf16>
    %318 = vector.shape_cast %315 : vector<8x80xbf16> to vector<1x1x1x8x80xbf16>
    tpu.vector_store %arg5[%c0_322, %c0_323, %c1_324, %c0_325, %c0_326], %318 {strides = array<i32>} : memref<1x1x4x8x80xbf16, #tpu.memory_space<vmem>>, vector<1x1x1x8x80xbf16>,
    %319 = tpu.iota {dimensions = array<i32: 1>} : vector<8x80xi32>
    %c10_i32_327 = arith.constant 10 : i32
    %c0_i32_328 = arith.constant 0 : i32
    %320 = arith.cmpi eq, %c10_i32_327, %c0_i32_328 : i32
    %c1_i32_329 = arith.constant 1 : i32
    %321 = arith.select %320, %c1_i32_329, %c10_i32_327 : i32
    %322 = vector.broadcast %321 : i32 to vector<8x80xi32>
    %323 = arith.remsi %319, %322 : vector<8x80xi32>
    %c0_i32_330 = arith.constant 0 : i32
    %324 = vector.broadcast %c0_i32_330 : i32 to vector<8x80xi32>
    %325 = arith.cmpi ne, %323, %324 : vector<8x80xi32>
    %c0_i32_331 = arith.constant 0 : i32
    %326 = vector.broadcast %c0_i32_331 : i32 to vector<8x80xi32>
    %327 = arith.cmpi slt, %323, %326 : vector<8x80xi32>
    %c0_i32_332 = arith.constant 0 : i32
    %328 = arith.cmpi slt, %321, %c0_i32_332 : i32
    %329 = vector.broadcast %328 : i1 to vector<8x80xi1>
    %330 = vector.broadcast %329 : vector<8x80xi1> to vector<8x80xi1>
    %331 = arith.xori %327, %330 : vector<8x80xi1>
    %332 = arith.andi %331, %325 : vector<8x80xi1>
    %333 = vector.broadcast %321 : i32 to vector<8x80xi32>
    %334 = arith.addi %323, %333 : vector<8x80xi32>
    %335 = arith.select %332, %334, %323 : vector<8x80xi1>, vector<8x80xi32>
    %c8_i32_333 = arith.constant 8 : i32
    %336 = vector.broadcast %c8_i32_333 : i32 to vector<8x80xi32>
    %337 = arith.cmpi slt, %335, %336 : vector<8x80xi32>
    %cst_334 = arith.constant 0.000000e+00 : f32
    %338 = vector.broadcast %cst_334 : f32 to vector<8x80xf32>
    %339 = arith.select %337, %235, %338 : vector<8x80xi1>, vector<8x80xf32>
    %cst_335 = arith.constant dense<0.000000e+00> : vector<8xf32>
    %340 = vector.multi_reduction <add>, %339, %cst_335 [1] : vector<8x80xf32> to vector<8xf32>
    %341 = vector.shape_cast %340 : vector<8xf32> to vector<8x1xf32>
    %342 = arith.addf %311, %341 : vector<8x1xf32>
    %c0_336 = arith.constant 0 : index
    %c0_337 = arith.constant 0 : index
    %343 = vector.load %arg4[%c0_336, %c0_337] : memref<8x1xf32, #tpu.memory_space<vmem>>, vector<8x1xf32>
    %344 = vector.broadcast %343 : vector<8x1xf32> to vector<8x80xf32>
    %345 = arith.addf %235, %344 : vector<8x80xf32>
    %346 = arith.truncf %345 : vector<8x80xf32> to vector<8x80xbf16>
    %c0_338 = arith.constant 0 : index
    %c0_339 = arith.constant 0 : index
    %c2_340 = arith.constant 2 : index
    %c0_341 = arith.constant 0 : index
    %c0_342 = arith.constant 0 : index
    %347 = vector.load %arg5[%c0_338, %c0_339, %c2_340, %c0_341, %c0_342] : memref<1x1x4x8x80xbf16, #tpu.memory_space<vmem>>, vector<1x1x1x8x80xbf16>
    %348 = vector.shape_cast %347 : vector<1x1x1x8x80xbf16> to vector<8x80xbf16>
    %349 = vector.shape_cast %346 : vector<8x80xbf16> to vector<1x1x1x8x80xbf16>
    tpu.vector_store %arg5[%c0_338, %c0_339, %c2_340, %c0_341, %c0_342], %349 {strides = array<i32>} : memref<1x1x4x8x80xbf16, #tpu.memory_space<vmem>>, vector<1x1x1x8x80xbf16>,
    %350 = tpu.iota {dimensions = array<i32: 1>} : vector<8x80xi32>
    %c10_i32_343 = arith.constant 10 : i32
    %c0_i32_344 = arith.constant 0 : i32
    %351 = arith.cmpi eq, %c10_i32_343, %c0_i32_344 : i32
    %c1_i32_345 = arith.constant 1 : i32
    %352 = arith.select %351, %c1_i32_345, %c10_i32_343 : i32
    %353 = vector.broadcast %352 : i32 to vector<8x80xi32>
    %354 = arith.remsi %350, %353 : vector<8x80xi32>
    %c0_i32_346 = arith.constant 0 : i32
    %355 = vector.broadcast %c0_i32_346 : i32 to vector<8x80xi32>
    %356 = arith.cmpi ne, %354, %355 : vector<8x80xi32>
    %c0_i32_347 = arith.constant 0 : i32
    %357 = vector.broadcast %c0_i32_347 : i32 to vector<8x80xi32>
    %358 = arith.cmpi slt, %354, %357 : vector<8x80xi32>
    %c0_i32_348 = arith.constant 0 : i32
    %359 = arith.cmpi slt, %352, %c0_i32_348 : i32
    %360 = vector.broadcast %359 : i1 to vector<8x80xi1>
    %361 = vector.broadcast %360 : vector<8x80xi1> to vector<8x80xi1>
    %362 = arith.xori %358, %361 : vector<8x80xi1>
    %363 = arith.andi %362, %356 : vector<8x80xi1>
    %364 = vector.broadcast %352 : i32 to vector<8x80xi32>
    %365 = arith.addi %354, %364 : vector<8x80xi32>
    %366 = arith.select %363, %365, %354 : vector<8x80xi1>, vector<8x80xi32>
    %c8_i32_349 = arith.constant 8 : i32
    %367 = vector.broadcast %c8_i32_349 : i32 to vector<8x80xi32>
    %368 = arith.cmpi slt, %366, %367 : vector<8x80xi32>
    %cst_350 = arith.constant 0.000000e+00 : f32
    %369 = vector.broadcast %cst_350 : f32 to vector<8x80xf32>
    %370 = arith.select %368, %255, %369 : vector<8x80xi1>, vector<8x80xf32>
    %cst_351 = arith.constant dense<0.000000e+00> : vector<8xf32>
    %371 = vector.multi_reduction <add>, %370, %cst_351 [1] : vector<8x80xf32> to vector<8xf32>
    %372 = vector.shape_cast %371 : vector<8xf32> to vector<8x1xf32>
    %373 = arith.addf %342, %372 : vector<8x1xf32>
    %c0_352 = arith.constant 0 : index
    %c0_353 = arith.constant 0 : index
    %374 = vector.load %arg4[%c0_352, %c0_353] : memref<8x1xf32, #tpu.memory_space<vmem>>, vector<8x1xf32>
    %375 = vector.broadcast %374 : vector<8x1xf32> to vector<8x80xf32>
    %376 = arith.addf %255, %375 : vector<8x80xf32>
    %377 = arith.truncf %376 : vector<8x80xf32> to vector<8x80xbf16>
    %c0_354 = arith.constant 0 : index
    %c0_355 = arith.constant 0 : index
    %c3_356 = arith.constant 3 : index
    %c0_357 = arith.constant 0 : index
    %c0_358 = arith.constant 0 : index
    %378 = vector.load %arg5[%c0_354, %c0_355, %c3_356, %c0_357, %c0_358] : memref<1x1x4x8x80xbf16, #tpu.memory_space<vmem>>, vector<1x1x1x8x80xbf16>
    %379 = vector.shape_cast %378 : vector<1x1x1x8x80xbf16> to vector<8x80xbf16>
    %380 = vector.shape_cast %377 : vector<8x80xbf16> to vector<1x1x1x8x80xbf16>
    tpu.vector_store %arg5[%c0_354, %c0_355, %c3_356, %c0_357, %c0_358], %380 {strides = array<i32>} : memref<1x1x4x8x80xbf16, #tpu.memory_space<vmem>>, vector<1x1x1x8x80xbf16>,
    %c0_359 = arith.constant 0 : index
    %c0_360 = arith.constant 0 : index
    %c0_361 = arith.constant 0 : index
    %c0_362 = arith.constant 0 : index
    %381 = vector.load %arg6[%c0_359, %c0_360, %c0_361, %c0_362] : memref<1x1x8x1xf32, #tpu.memory_space<vmem>>, vector<1x1x8x1xf32>
    %382 = vector.shape_cast %381 : vector<1x1x8x1xf32> to vector<8x1xf32>
    %383 = vector.shape_cast %373 : vector<8x1xf32> to vector<1x1x8x1xf32>
    tpu.vector_store %arg6[%c0_359, %c0_360, %c0_361, %c0_362], %383 {strides = array<i32>} : memref<1x1x8x1xf32, #tpu.memory_space<vmem>>, vector<1x1x8x1xf32>,
    return
  }
  func.func @transform_0(%arg0: i32, %arg1: i32) -> (i32, i32, i32, i32) {
    %c0_i32 = arith.constant 0 : i32
    %c0_i32_0 = arith.constant 0 : i32
    %c0_i32_1 = arith.constant 0 : i32
    %c0_i32_2 = arith.constant 0 : i32
    return %arg0, %c0_i32, %c0_i32_0, %c0_i32_1 : i32, i32, i32, i32
  }
  func.func @transform_1(%arg0: i32, %arg1: i32) -> (i32, i32, i32, i32, i32) {
    %c0_i32 = arith.constant 0 : i32
    %c0_i32_0 = arith.constant 0 : i32
    %c0_i32_1 = arith.constant 0 : i32
    %c0_i32_2 = arith.constant 0 : i32
    %c0_i32_3 = arith.constant 0 : i32
    %c0_i32_4 = arith.constant 0 : i32
    return %c0_i32, %c0_i32_0, %c0_i32_1, %c0_i32_2, %c0_i32_3 : i32, i32, i32, i32, i32
  }
  func.func @transform_2(%arg0: i32, %arg1: i32) -> (i32, i32) {
    %c0_i32 = arith.constant 0 : i32
    %c0_i32_0 = arith.constant 0 : i32
    %c0_i32_1 = arith.constant 0 : i32
    return %c0_i32, %c0_i32_0 : i32, i32
  }
  func.func @transform_3(%arg0: i32, %arg1: i32) -> (i32, i32, i32, i32, i32) {
    %c0_i32 = arith.constant 0 : i32
    %c0_i32_0 = arith.constant 0 : i32
    %c0_i32_1 = arith.constant 0 : i32
    %c0_i32_2 = arith.constant 0 : i32
    return %arg0, %arg1, %c0_i32, %c0_i32_0, %c0_i32_1 : i32, i32, i32, i32, i32
  }
  func.func @transform_4(%arg0: i32, %arg1: i32) -> (i32, i32, i32, i32) {
    %c0_i32 = arith.constant 0 : i32
    %c0_i32_0 = arith.constant 0 : i32
    %c0_i32_1 = arith.constant 0 : i32
    return %arg0, %arg1, %c0_i32, %c0_i32_0 : i32, i32, i32, i32
  }
}

</mosaic_0001>

<llo_original>
// kernel: up_conv3d_forward.1
$region0: #{up_conv3d_forward.1}
  #allocation0 [shape = 'u32[]', space=smem, size = 0x4, offset = 0x4, fixed_abs, tag = 'smem constant byte address 0x4 - core index']
  #allocation1 [shape = 'u32[144,128]{1,0:T(1,128)}', space=vmem, size = 0x12000, scoped, tag = 'internal scratch']
  %s0 = inlined_call_operand.vmem [shape: bf16[2,6,4,110], index: 0, kind: input, shape index: {}]
  %s1 = inlined_call_operand.vmem [shape: bf16[4,3,4,8,4], index: 1, kind: input, shape index: {}]
  %s2 = inlined_call_operand.vmem [shape: f32[8,1], index: 2, kind: input, shape index: {}]
  %s3 = inlined_call_operand.vmem [shape: bf16[2,4,4,8,80], index: 3, kind: output, shape index: {0}]
  %s4 = inlined_call_operand.vmem [shape: f32[2,4,8,1], index: 4, kind: output, shape index: {1}]
  %5 = xla_tuple %s3, %s4
  %s6 = sld [smem:[#allocation0]]
  $region53: #{up_conv3d_forward.1} parent=0
    _
  %s8 = ssub.s32 1, %s6
  %s9 = scalar_select 0, %s8, %s6
  loop: start=0, step=1, limit=10
  $region2: #{up_conv3d_forward.1} parent=0 // loop_pre_header
    _
  $region3: #{up_conv3d_forward.1} parent=0 // loop_header
    %s11 = sphi 0, %s15
    %p12 = scmp.ge.s32.totalorder %s11, 10
    %s18 = sphi 0, %s30
    %s19 = sphi 0, %s26
    %s20 = sphi 0, %s18
    %s21 = sphi 0, %s19
    %s22 = sphi 0, %s20
    %s23 = sphi 0, %s21
    %s33 = sphi 0, %s35
    %s36 = sphi 0, %s33
    %s37 = sphi 0, %s36
    %s53 = sphi 0, %s37
    %s57 = sphi 0, %s57
    %s59 = sphi 0, %s57
    %s60 = sphi 0, %s59
    %s74 = sphi 0, %s60
    %s78 = sphi 0, %s78
    %s80 = sphi 0, %s78
    %s81 = sphi 0, %s80
    %s95 = sphi 0, %s81
    %s103 = sphi 0, %s105
    %s106 = sphi 0, %s103
    %s107 = sphi 0, %s106
    %s123 = sphi 0, %s107
    %s131 = sphi 0, %s133
    %s134 = sphi 0, %s131
    %s135 = sphi 0, %s134
    %s151 = sphi 0, %s135
  $region4: #{up_conv3d_forward.1} parent=0 // loop_header_branch
    %14 = sbr.rel (%p12) target = $region8
  $region5: #{up_conv3d_forward.1} parent=0 // loop_body
    %s16 = ssub.s32 %s11, 1
    %s17 = ssub.s32 %s11, 2
    %s24 = sadd.s32 1, %s19
    %p25 = scmp.ge.s32.totalorder %s24, 4
    %s26 = scalar_select %p25, 0, %s24
    %s27 = sadd.s32 1, %s18
    %s28 = scalar_select %p25, %s27, %s18
    %p29 = scmp.ge.s32.totalorder %s28, 2
    %s30 = scalar_select %p29, 0, %s28
    %s31 = ssub.s32 %s18, %s30
    %p32 = scmp.eq.s32.totalorder %s31, 0
    %s34 = sadd.s32 %s33, 1
    %s35 = scalar_select %p32, %s33, %s34
    %p38 = pneg %p32
    %p39 = scmp.eq.s32.totalorder %s11, 7
    %p40 = por %p38, %p39
    %p41 = scmp.ne.s32.totalorder %s33, %s36
    %p42 = scmp.eq.s32.totalorder %s11, 0
    %p43 = por %p41, %p42
    %p44 = scmp.ne.s32.totalorder %s33, %s36
    %p45 = scmp.eq.s32.totalorder %s16, 7
    %p46 = por %p44, %p45
    %p47 = scmp.ne.s32.totalorder %s36, %s37
    %p48 = scmp.eq.s32.totalorder %s16, 0
    %p49 = por %p47, %p48
    %p50 = scmp.ne.s32.totalorder %s36, %s37
    %p51 = scmp.eq.s32.totalorder %s17, 7
    %p52 = por %p50, %p51
    %p54 = scmp.ne.s32.totalorder %s37, %s53
    %p55 = scmp.eq.s32.totalorder %s17, 0
    %p56 = por %p54, %p55
    %s58 = sadd.s32 %s57, 1
    %p61 = scmp.eq.s32.totalorder %s11, 7
    %p62 = scmp.ne.s32.totalorder %s57, %s59
    %p63 = scmp.eq.s32.totalorder %s11, 0
    %p64 = por %p62, %p63
    %p65 = scmp.ne.s32.totalorder %s57, %s59
    %p66 = scmp.eq.s32.totalorder %s16, 7
    %p67 = por %p65, %p66
    %p68 = scmp.ne.s32.totalorder %s59, %s60
    %p69 = scmp.eq.s32.totalorder %s16, 0
    %p70 = por %p68, %p69
    %p71 = scmp.ne.s32.totalorder %s59, %s60
    %p72 = scmp.eq.s32.totalorder %s17, 7
    %p73 = por %p71, %p72
    %p75 = scmp.ne.s32.totalorder %s60, %s74
    %p76 = scmp.eq.s32.totalorder %s17, 0
    %p77 = por %p75, %p76
    %s79 = sadd.s32 %s78, 1
    %p82 = scmp.eq.s32.totalorder %s11, 7
    %p83 = scmp.ne.s32.totalorder %s78, %s80
    %p84 = scmp.eq.s32.totalorder %s11, 0
    %p85 = por %p83, %p84
    %p86 = scmp.ne.s32.totalorder %s78, %s80
    %p87 = scmp.eq.s32.totalorder %s16, 7
    %p88 = por %p86, %p87
    %p89 = scmp.ne.s32.totalorder %s80, %s81
    %p90 = scmp.eq.s32.totalorder %s16, 0
    %p91 = por %p89, %p90
    %p92 = scmp.ne.s32.totalorder %s80, %s81
    %p93 = scmp.eq.s32.totalorder %s17, 7
    %p94 = por %p92, %p93
    %p96 = scmp.ne.s32.totalorder %s81, %s95
    %p97 = scmp.eq.s32.totalorder %s17, 0
    %p98 = por %p96, %p97
    %s99 = ssub.s32 %s18, %s30
    %s100 = ssub.s32 %s19, %s26
    %s101 = sor.u32 %s99, %s100
    %p102 = scmp.eq.s32.totalorder %s101, 0
    %s104 = sadd.s32 %s103, 1
    %s105 = scalar_select %p102, %s103, %s104
    %p108 = pneg %p102
    %p109 = scmp.eq.s32.totalorder %s11, 7
    %p110 = por %p108, %p109
    %p111 = scmp.ne.s32.totalorder %s103, %s106
    %p112 = scmp.eq.s32.totalorder %s11, 0
    %p113 = por %p111, %p112
    %p114 = scmp.ne.s32.totalorder %s103, %s106
    %p115 = scmp.eq.s32.totalorder %s16, 7
    %p116 = por %p114, %p115
    %p117 = scmp.ne.s32.totalorder %s106, %s107
    %p118 = scmp.eq.s32.totalorder %s16, 0
    %p119 = por %p117, %p118
    %p120 = scmp.ne.s32.totalorder %s106, %s107
    %p121 = scmp.eq.s32.totalorder %s17, 7
    %p122 = por %p120, %p121
    %p124 = scmp.ne.s32.totalorder %s107, %s123
    %p125 = scmp.eq.s32.totalorder %s17, 0
    %p126 = por %p124, %p125
    %s127 = ssub.s32 %s18, %s30
    %s128 = ssub.s32 %s19, %s26
    %s129 = sor.u32 %s127, %s128
    %p130 = scmp.eq.s32.totalorder %s129, 0
    %s132 = sadd.s32 %s131, 1
    %s133 = scalar_select %p130, %s131, %s132
    %p136 = pneg %p130
    %p137 = scmp.eq.s32.totalorder %s11, 7
    %p138 = por %p136, %p137
    %p139 = scmp.ne.s32.totalorder %s131, %s134
    %p140 = scmp.eq.s32.totalorder %s11, 0
    %p141 = por %p139, %p140
    %p142 = scmp.ne.s32.totalorder %s131, %s134
    %p143 = scmp.eq.s32.totalorder %s16, 7
    %p144 = por %p142, %p143
    %p145 = scmp.ne.s32.totalorder %s134, %s135
    %p146 = scmp.eq.s32.totalorder %s16, 0
    %p147 = por %p145, %p146
    %p148 = scmp.ne.s32.totalorder %s134, %s135
    %p149 = scmp.eq.s32.totalorder %s17, 7
    %p150 = por %p148, %p149
    %p152 = scmp.ne.s32.totalorder %s135, %s151
    %p153 = scmp.eq.s32.totalorder %s17, 0
    %p154 = por %p152, %p153
    %p155 = scmp.le.s32.totalorder 1, %s11
    %p156 = scmp.lt.s32.totalorder %s11, 9
    %p157 = pnand %p155, %p156
    %p158 = pneg %p157
    // Predicated region
    $region9: #{up_conv3d_forward.1} parent=5 // pred_check
      _
    $region10: #{up_conv3d_forward.1} parent=5 // pred_check_branch
      %160 = sbr.rel (%p157) target = $region12
    $region11: #{up_conv3d_forward.1} parent=5 // pred_region
      %s161 = ssub.s32 %s11, 1
      // Predicated region
      $region13: #{up_conv3d_forward.1} parent=11 // pred_check
        %p162 = pneg %p70
      $region14: #{up_conv3d_forward.1} parent=11 // pred_check_branch
        %164 = sbr.rel (%p162) target = $region16
      $region15: #{up_conv3d_forward.1} parent=11 // pred_region
        _
      $region16: #{up_conv3d_forward.1} parent=11 // pred_fallthru
        _
      // Predicated region
      $region17: #{up_conv3d_forward.1} parent=11 // pred_check
        %p165 = pneg %p91
      $region18: #{up_conv3d_forward.1} parent=11 // pred_check_branch
        %167 = sbr.rel (%p165) target = $region20
      $region19: #{up_conv3d_forward.1} parent=11 // pred_region
        _
      $region20: #{up_conv3d_forward.1} parent=11 // pred_fallthru
        _
    $region12: #{up_conv3d_forward.1} parent=5 // pred_fallthru
      _
    %p168 = scmp.lt.s32.totalorder %s11, 8
    // Predicated region
    $region21: #{up_conv3d_forward.1} parent=5 // pred_check
      %p169 = pneg %p168
    $region22: #{up_conv3d_forward.1} parent=5 // pred_check_branch
      %171 = sbr.rel (%p169) target = $region24
    $region23: #{up_conv3d_forward.1} parent=5 // pred_region
      // Predicated region
      $region25: #{up_conv3d_forward.1} parent=23 // pred_check
        %p172 = pneg %p43
      $region26: #{up_conv3d_forward.1} parent=23 // pred_check_branch
        %174 = sbr.rel (%p172) target = $region28
      $region27: #{up_conv3d_forward.1} parent=23 // pred_region
        %p175 = scmp.lt.s32.totalorder %s18, 1
        %s176 = scalar_select %p175, %s18, 1
        %s177 = smul.addr %s176, 6
        %s178 = smul.addr %s177, 2
        %s179 = scalar_lea.vmem %s0, %s178
      $region28: #{up_conv3d_forward.1} parent=23 // pred_fallthru
        _
    $region24: #{up_conv3d_forward.1} parent=5 // pred_fallthru
      _
    %p180 = scmp.le.s32.totalorder 1, %s11
    %p181 = scmp.lt.s32.totalorder %s11, 9
    %p182 = pnand %p180, %p181
    %p183 = pneg %p182
    // Predicated region
    $region29: #{up_conv3d_forward.1} parent=5 // pred_check
      _
    $region30: #{up_conv3d_forward.1} parent=5 // pred_check_branch
      %185 = sbr.rel (%p182) target = $region32
    $region31: #{up_conv3d_forward.1} parent=5 // pred_region
      %s186 = ssub.s32 %s11, 1
      %p187 = scmp.lt.s32.totalorder %s20, 1
      %s188 = scalar_select %p187, %s20, 1
      %s189 = smul.addr %s188, 6
      %s190 = smul.addr %s189, 2
      %s191 = scalar_lea.vmem %s0, %s190
      %p192 = pneg %p49
      %p193 = pneg %p46
      %p194 = pneg %p70
      %p195 = pneg %p67
      %p196 = pneg %p91
      %p197 = pneg %p88
      %p198 = pneg %p119
      %p199 = pneg %p116
      %p200 = scmp.lt.s32.totalorder %s20, 1
      %s201 = scalar_select %p200, %s20, 1
      %p202 = scmp.lt.s32.totalorder %s21, 3
      %s203 = scalar_select %p202, %s21, 3
      %s204 = smul.addr %s203, 4
      %s205 = smul.addr %s201, 16
      %s206 = sadd.s32 %s204, %s205
      %s207 = smul.addr %s206, 4
      %s208 = scalar_lea.vmem %s3, %s207
      %p209 = pneg %p147
      %p210 = pneg %p144
      %p211 = scmp.lt.s32.totalorder %s20, 1
      %s212 = scalar_select %p211, %s20, 1
      %p213 = scmp.lt.s32.totalorder %s21, 3
      %s214 = scalar_select %p213, %s21, 3
      %s215 = smul.addr %s212, 4
      %s216 = sadd.s32 %s214, %s215
      %s217 = smul.addr %s216, 8
      %s218 = scalar_lea.vmem %s4, %s217
      %p219 = scmp.lt.s32.totalorder %s20, 1
      %s220 = scalar_select %p219, %s20, 1
      %s221 = smul.addr %s220, 6
      %s222 = smul.addr %s221, 2
      %s223 = scalar_lea.vmem %s0, %s222
      %p224 = scmp.lt.s32.totalorder %s20, 1
      %s225 = scalar_select %p224, %s20, 1
      %p226 = scmp.lt.s32.totalorder %s21, 3
      %s227 = scalar_select %p226, %s21, 3
      %s228 = smul.addr %s227, 4
      %s229 = smul.addr %s225, 16
      %s230 = sadd.s32 %s228, %s229
      %s231 = smul.addr %s230, 4
      %s232 = scalar_lea.vmem %s3, %s231
      %p233 = scmp.lt.s32.totalorder %s20, 1
      %s234 = scalar_select %p233, %s20, 1
      %p235 = scmp.lt.s32.totalorder %s21, 3
      %s236 = scalar_select %p235, %s21, 3
      %s237 = smul.addr %s234, 4
      %s238 = sadd.s32 %s236, %s237
      %s239 = smul.addr %s238, 8
      %s240 = scalar_lea.vmem %s4, %s239
      %s242 = sadd.s32 %s21, 2
      %s243 = smul.addr %s242, 2
      %s244 = scalar_lea.vmem %s223, %s243
      %v245 = vld [vmem:[%s244] sm:$0x3]
      %v246 = vld [vmem:[%s1] sm:$0xf]
      %s247 = scalar_lea.vmem %s1, 4
      %v248 = vld [vmem:[%s247] sm:$0xf]
      %v251 = vunpack.c.l.s4 1983009808
      %v252 = vunpack.c.0.s8 %v251
      %v253 = vlaneseq
      %v254 = vshrl.u32 %v253, 7
      %v255 = vsub.s32 %v252, %v254
      %v256 = vrot.slane %v245, %v255
      %257 = vrot.lane.b32.xlu0 %v256, 118
      %v258 = vpop.permute.xlu0 %257
      %vm259 = vcmask 31744
      %v261 = vsel %vm259, %v248, 0
      %vm263 = vcmask 1041408
      %v265 = vsel %vm263, %v258, 0
      %267 = vmatprep.subr.bf16.mxu0 0
      %268 = vmatpush1.bf16.msra.mxu0 %v265
      %269 = vmatprep.subr.bf16.mxu0 0
      %270 = vmatpush1.bf16.msra.mxu0 0
      %271 = vmatprep.subr.bf16.mxu0 0
      %272 = vmatpush1.bf16.msra.mxu0 0
      %273 = vmatprep.subr.bf16.mxu0 0
      %274 = vmatpush1.bf16.msra.mxu0 0
      %275 = vmatprep.subr.bf16.mxu0 0
      %276 = vmatpush1.bf16.msra.mxu0 0
      %277 = vmatprep.subr.bf16.mxu0 0
      %278 = vmatpush1.bf16.msra.mxu0 0
      %279 = vmatprep.subr.bf16.mxu0 0
      %280 = vmatpush1.bf16.msra.mxu0 0
      %281 = vmatprep.subr.bf16.mxu0 0
      %282 = vmatpush1.bf16.msra.mxu0 0
      %283 = vmatprep.subr.bf16.mxu0 0
      %284 = vmatpush1.bf16.msra.mxu0 0
      %285 = vmatprep.subr.bf16.mxu0 0
      %286 = vmatpush1.bf16.msra.mxu0 0
      %287 = vmatprep.subr.bf16.mxu0 0
      %288 = vmatpush1.bf16.msra.mxu0 0
      %289 = vmatprep.subr.bf16.mxu0 0
      %290 = vmatpush1.bf16.msra.mxu0 0
      %291 = vmatprep.subr.bf16.mxu0 0
      %292 = vmatpush1.bf16.msra.mxu0 0
      %293 = vmatprep.subr.bf16.mxu0 0
      %294 = vmatpush1.bf16.msra.mxu0 0
      %295 = vmatprep.subr.bf16.mxu0 0
      %296 = vmatpush1.bf16.msra.mxu0 0
      %297 = vmatprep.subr.bf16.mxu0 0
      %298 = vmatpush1.bf16.msra.mxu0 0
      %299 = vmatprep.mubr.bf16.mxu0 0
      %300 = vmatmul.mubr.bf16.gmra.mrb[0].mxu0 %v261
      %v301 = vpop.f32.mrb[0].mxu0
      %v302 = vadd.f32 0.0, %v301
      %v303 = vpop.f32.mrb[0].mxu0
      %v304 = vpop.f32.mrb[0].mxu0
      %v305 = vpop.f32.mrb[0].mxu0
      %306 = vdwg.mxu0
      %307 = vrot.lane.b32.xlu0 %v256, 117
      %v308 = vpop.permute.xlu0 %307
      %v310 = vsel %vm259, %v246, 0
      %v313 = vsel %vm263, %v308, 0
      %315 = vmatprep.subr.bf16.mxu0 0
      %316 = vmatpush1.bf16.msra.mxu0 %v313
      %317 = vmatprep.subr.bf16.mxu0 0
      %318 = vmatpush1.bf16.msra.mxu0 0
      %319 = vmatprep.subr.bf16.mxu0 0
      %320 = vmatpush1.bf16.msra.mxu0 0
      %321 = vmatprep.subr.bf16.mxu0 0
      %322 = vmatpush1.bf16.msra.mxu0 0
      %323 = vmatprep.subr.bf16.mxu0 0
      %324 = vmatpush1.bf16.msra.mxu0 0
      %325 = vmatprep.subr.bf16.mxu0 0
      %326 = vmatpush1.bf16.msra.mxu0 0
      %327 = vmatprep.subr.bf16.mxu0 0
      %328 = vmatpush1.bf16.msra.mxu0 0
      %329 = vmatprep.subr.bf16.mxu0 0
      %330 = vmatpush1.bf16.msra.mxu0 0
      %331 = vmatprep.subr.bf16.mxu0 0
      %332 = vmatpush1.bf16.msra.mxu0 0
      %333 = vmatprep.subr.bf16.mxu0 0
      %334 = vmatpush1.bf16.msra.mxu0 0
      %335 = vmatprep.subr.bf16.mxu0 0
      %336 = vmatpush1.bf16.msra.mxu0 0
      %337 = vmatprep.subr.bf16.mxu0 0
      %338 = vmatpush1.bf16.msra.mxu0 0
      %339 = vmatprep.subr.bf16.mxu0 0
      %340 = vmatpush1.bf16.msra.mxu0 0
      %341 = vmatprep.subr.bf16.mxu0 0
      %342 = vmatpush1.bf16.msra.mxu0 0
      %343 = vmatprep.subr.bf16.mxu0 0
      %344 = vmatpush1.bf16.msra.mxu0 0
      %345 = vmatprep.subr.bf16.mxu0 0
      %346 = vmatpush1.bf16.msra.mxu0 0
      %347 = vmatprep.mubr.bf16.mxu0 0
      %348 = vmatmul.mubr.bf16.gmra.mrb[0].mxu0 %v310
      %v349 = vpop.f32.mrb[0].mxu0
      %v350 = vadd.f32 %v302, %v349
      %v351 = vpop.f32.mrb[0].mxu0
      %v352 = vpop.f32.mrb[0].mxu0
      %v353 = vpop.f32.mrb[0].mxu0
      %354 = vdwg.mxu0
      %s355 = scalar_lea.vmem %s1, 8
      %v356 = vld [vmem:[%s355] sm:$0xf]
      %357 = vrot.lane.b32.xlu0 %v256, 127
      %v358 = vpop.permute.xlu0 %357
      %v360 = vsel %vm259, %v356, 0
      %v363 = vsel %vm263, %v358, 0
      %365 = vmatprep.subr.bf16.mxu0 0
      %366 = vmatpush1.bf16.msra.mxu0 %v363
      %367 = vmatprep.subr.bf16.mxu0 0
      %368 = vmatpush1.bf16.msra.mxu0 0
      %369 = vmatprep.subr.bf16.mxu0 0
      %370 = vmatpush1.bf16.msra.mxu0 0
      %371 = vmatprep.subr.bf16.mxu0 0
      %372 = vmatpush1.bf16.msra.mxu0 0
      %373 = vmatprep.subr.bf16.mxu0 0
      %374 = vmatpush1.bf16.msra.mxu0 0
      %375 = vmatprep.subr.bf16.mxu0 0
      %376 = vmatpush1.bf16.msra.mxu0 0
      %377 = vmatprep.subr.bf16.mxu0 0
      %378 = vmatpush1.bf16.msra.mxu0 0
      %379 = vmatprep.subr.bf16.mxu0 0
      %380 = vmatpush1.bf16.msra.mxu0 0
      %381 = vmatprep.subr.bf16.mxu0 0
      %382 = vmatpush1.bf16.msra.mxu0 0
      %383 = vmatprep.subr.bf16.mxu0 0
      %384 = vmatpush1.bf16.msra.mxu0 0
      %385 = vmatprep.subr.bf16.mxu0 0
      %386 = vmatpush1.bf16.msra.mxu0 0
      %387 = vmatprep.subr.bf16.mxu0 0
      %388 = vmatpush1.bf16.msra.mxu0 0
      %389 = vmatprep.subr.bf16.mxu0 0
      %390 = vmatpush1.bf16.msra.mxu0 0
      %391 = vmatprep.subr.bf16.mxu0 0
      %392 = vmatpush1.bf16.msra.mxu0 0
      %393 = vmatprep.subr.bf16.mxu0 0
      %394 = vmatpush1.bf16.msra.mxu0 0
      %395 = vmatprep.subr.bf16.mxu0 0
      %396 = vmatpush1.bf16.msra.mxu0 0
      %397 = vmatprep.mubr.bf16.mxu0 0
      %398 = vmatmul.mubr.bf16.gmra.mrb[0].mxu0 %v360
      %v399 = vpop.f32.mrb[0].mxu0
      %v400 = vadd.f32 0.0, %v399
      %v401 = vpop.f32.mrb[0].mxu0
      %v402 = vpop.f32.mrb[0].mxu0
      %v403 = vpop.f32.mrb[0].mxu0
      %404 = vdwg.mxu0
      %v405 = vadd.f32 %v350, %v400
      %s406 = scalar_lea.vmem %s1, 12
      %v407 = vld [vmem:[%s406] sm:$0xf]
      %v409 = vsel %vm259, %v407, 0
      %v412 = vsel %vm263, %v245, 0
      %414 = vmatprep.subr.bf16.mxu0 0
      %415 = vmatpush1.bf16.msra.mxu0 %v412
      %416 = vmatprep.subr.bf16.mxu0 0
      %417 = vmatpush1.bf16.msra.mxu0 0
      %418 = vmatprep.subr.bf16.mxu0 0
      %419 = vmatpush1.bf16.msra.mxu0 0
      %420 = vmatprep.subr.bf16.mxu0 0
      %421 = vmatpush1.bf16.msra.mxu0 0
      %422 = vmatprep.subr.bf16.mxu0 0
      %423 = vmatpush1.bf16.msra.mxu0 0
      %424 = vmatprep.subr.bf16.mxu0 0
      %425 = vmatpush1.bf16.msra.mxu0 0
      %426 = vmatprep.subr.bf16.mxu0 0
      %427 = vmatpush1.bf16.msra.mxu0 0
      %428 = vmatprep.subr.bf16.mxu0 0
      %429 = vmatpush1.bf16.msra.mxu0 0
      %430 = vmatprep.subr.bf16.mxu0 0
      %431 = vmatpush1.bf16.msra.mxu0 0
      %432 = vmatprep.subr.bf16.mxu0 0
      %433 = vmatpush1.bf16.msra.mxu0 0
      %434 = vmatprep.subr.bf16.mxu0 0
      %435 = vmatpush1.bf16.msra.mxu0 0
      %436 = vmatprep.subr.bf16.mxu0 0
      %437 = vmatpush1.bf16.msra.mxu0 0
      %438 = vmatprep.subr.bf16.mxu0 0
      %439 = vmatpush1.bf16.msra.mxu0 0
      %440 = vmatprep.subr.bf16.mxu0 0
      %441 = vmatpush1.bf16.msra.mxu0 0
      %442 = vmatprep.subr.bf16.mxu0 0
      %443 = vmatpush1.bf16.msra.mxu0 0
      %444 = vmatprep.subr.bf16.mxu0 0
      %445 = vmatpush1.bf16.msra.mxu0 0
      %446 = vmatprep.mubr.bf16.mxu0 0
      %447 = vmatmul.mubr.bf16.gmra.mrb[0].mxu0 %v409
      %v448 = vpop.f32.mrb[0].mxu0
      %v449 = vadd.f32 0.0, %v448
      %v450 = vpop.f32.mrb[0].mxu0
      %v451 = vpop.f32.mrb[0].mxu0
      %v452 = vpop.f32.mrb[0].mxu0
      %453 = vdwg.mxu0
      %v454 = vadd.f32 %v405, %v449
      %s455 = scalar_lea.vmem %s1, 48
      %v456 = vld [vmem:[%s455] sm:$0xf]
      %s457 = scalar_lea.vmem %s1, 52
      %v458 = vld [vmem:[%s457] sm:$0xf]
      %v460 = vsel %vm259, %v458, 0
      %462 = vmatprep.subr.bf16.mxu0 0
      %463 = vmatpush1.bf16.msra.mxu0 %v313
      %464 = vmatprep.subr.bf16.mxu0 0
      %465 = vmatpush1.bf16.msra.mxu0 0
      %466 = vmatprep.subr.bf16.mxu0 0
      %467 = vmatpush1.bf16.msra.mxu0 0
      %468 = vmatprep.subr.bf16.mxu0 0
      %469 = vmatpush1.bf16.msra.mxu0 0
      %470 = vmatprep.subr.bf16.mxu0 0
      %471 = vmatpush1.bf16.msra.mxu0 0
      %472 = vmatprep.subr.bf16.mxu0 0
      %473 = vmatpush1.bf16.msra.mxu0 0
      %474 = vmatprep.subr.bf16.mxu0 0
      %475 = vmatpush1.bf16.msra.mxu0 0
      %476 = vmatprep.subr.bf16.mxu0 0
      %477 = vmatpush1.bf16.msra.mxu0 0
      %478 = vmatprep.subr.bf16.mxu0 0
      %479 = vmatpush1.bf16.msra.mxu0 0
      %480 = vmatprep.subr.bf16.mxu0 0
      %481 = vmatpush1.bf16.msra.mxu0 0
      %482 = vmatprep.subr.bf16.mxu0 0
      %483 = vmatpush1.bf16.msra.mxu0 0
      %484 = vmatprep.subr.bf16.mxu0 0
      %485 = vmatpush1.bf16.msra.mxu0 0
      %486 = vmatprep.subr.bf16.mxu0 0
      %487 = vmatpush1.bf16.msra.mxu0 0
      %488 = vmatprep.subr.bf16.mxu0 0
      %489 = vmatpush1.bf16.msra.mxu0 0
      %490 = vmatprep.subr.bf16.mxu0 0
      %491 = vmatpush1.bf16.msra.mxu0 0
      %492 = vmatprep.subr.bf16.mxu0 0
      %493 = vmatpush1.bf16.msra.mxu0 0
      %494 = vmatprep.mubr.bf16.mxu0 0
      %495 = vmatmul.mubr.bf16.gmra.mrb[0].mxu0 %v460
      %v496 = vpop.f32.mrb[0].mxu0
      %v497 = vadd.f32 0.0, %v496
      %v498 = vpop.f32.mrb[0].mxu0
      %v499 = vpop.f32.mrb[0].mxu0
      %v500 = vpop.f32.mrb[0].mxu0
      %501 = vdwg.mxu0
      %502 = vrot.lane.b32.xlu0 %v256, 116
      %v503 = vpop.permute.xlu0 %502
      %v505 = vsel %vm259, %v456, 0
      %v508 = vsel %vm263, %v503, 0
      %510 = vmatprep.subr.bf16.mxu0 0
      %511 = vmatpush1.bf16.msra.mxu0 %v508
      %512 = vmatprep.subr.bf16.mxu0 0
      %513 = vmatpush1.bf16.msra.mxu0 0
      %514 = vmatprep.subr.bf16.mxu0 0
      %515 = vmatpush1.bf16.msra.mxu0 0
      %516 = vmatprep.subr.bf16.mxu0 0
      %517 = vmatpush1.bf16.msra.mxu0 0
      %518 = vmatprep.subr.bf16.mxu0 0
      %519 = vmatpush1.bf16.msra.mxu0 0
      %520 = vmatprep.subr.bf16.mxu0 0
      %521 = vmatpush1.bf16.msra.mxu0 0
      %522 = vmatprep.subr.bf16.mxu0 0
      %523 = vmatpush1.bf16.msra.mxu0 0
      %524 = vmatprep.subr.bf16.mxu0 0
      %525 = vmatpush1.bf16.msra.mxu0 0
      %526 = vmatprep.subr.bf16.mxu0 0
      %527 = vmatpush1.bf16.msra.mxu0 0
      %528 = vmatprep.subr.bf16.mxu0 0
      %529 = vmatpush1.bf16.msra.mxu0 0
      %530 = vmatprep.subr.bf16.mxu0 0
      %531 = vmatpush1.bf16.msra.mxu0 0
      %532 = vmatprep.subr.bf16.mxu0 0
      %533 = vmatpush1.bf16.msra.mxu0 0
      %534 = vmatprep.subr.bf16.mxu0 0
      %535 = vmatpush1.bf16.msra.mxu0 0
      %536 = vmatprep.subr.bf16.mxu0 0
      %537 = vmatpush1.bf16.msra.mxu0 0
      %538 = vmatprep.subr.bf16.mxu0 0
      %539 = vmatpush1.bf16.msra.mxu0 0
      %540 = vmatprep.subr.bf16.mxu0 0
      %541 = vmatpush1.bf16.msra.mxu0 0
      %542 = vmatprep.mubr.bf16.mxu0 0
      %543 = vmatmul.mubr.bf16.gmra.mrb[0].mxu0 %v505
      %v544 = vpop.f32.mrb[0].mxu0
      %v545 = vadd.f32 %v497, %v544
      %v546 = vpop.f32.mrb[0].mxu0
      %v547 = vpop.f32.mrb[0].mxu0
      %v548 = vpop.f32.mrb[0].mxu0
      %549 = vdwg.mxu0
      %s550 = scalar_lea.vmem %s1, 56
      %v551 = vld [vmem:[%s550] sm:$0xf]
      %552 = vrot.lane.b32.xlu0 %v256, 126
      %v553 = vpop.permute.xlu0 %552
      %v555 = vsel %vm259, %v551, 0
      %v558 = vsel %vm263, %v553, 0
      %560 = vmatprep.subr.bf16.mxu0 0
      %561 = vmatpush1.bf16.msra.mxu0 %v558
      %562 = vmatprep.subr.bf16.mxu0 0
      %563 = vmatpush1.bf16.msra.mxu0 0
      %564 = vmatprep.subr.bf16.mxu0 0
      %565 = vmatpush1.bf16.msra.mxu0 0
      %566 = vmatprep.subr.bf16.mxu0 0
      %567 = vmatpush1.bf16.msra.mxu0 0
      %568 = vmatprep.subr.bf16.mxu0 0
      %569 = vmatpush1.bf16.msra.mxu0 0
      %570 = vmatprep.subr.bf16.mxu0 0
      %571 = vmatpush1.bf16.msra.mxu0 0
      %572 = vmatprep.subr.bf16.mxu0 0
      %573 = vmatpush1.bf16.msra.mxu0 0
      %574 = vmatprep.subr.bf16.mxu0 0
      %575 = vmatpush1.bf16.msra.mxu0 0
      %576 = vmatprep.subr.bf16.mxu0 0
      %577 = vmatpush1.bf16.msra.mxu0 0
      %578 = vmatprep.subr.bf16.mxu0 0
      %579 = vmatpush1.bf16.msra.mxu0 0
      %580 = vmatprep.subr.bf16.mxu0 0
      %581 = vmatpush1.bf16.msra.mxu0 0
      %582 = vmatprep.subr.bf16.mxu0 0
      %583 = vmatpush1.bf16.msra.mxu0 0
      %584 = vmatprep.subr.bf16.mxu0 0
      %585 = vmatpush1.bf16.msra.mxu0 0
      %586 = vmatprep.subr.bf16.mxu0 0
      %587 = vmatpush1.bf16.msra.mxu0 0
      %588 = vmatprep.subr.bf16.mxu0 0
      %589 = vmatpush1.bf16.msra.mxu0 0
      %590 = vmatprep.subr.bf16.mxu0 0
      %591 = vmatpush1.bf16.msra.mxu0 0
      %592 = vmatprep.mubr.bf16.mxu0 0
      %593 = vmatmul.mubr.bf16.gmra.mrb[0].mxu0 %v555
      %v594 = vpop.f32.mrb[0].mxu0
      %v595 = vadd.f32 0.0, %v594
      %v596 = vpop.f32.mrb[0].mxu0
      %v597 = vpop.f32.mrb[0].mxu0
      %v598 = vpop.f32.mrb[0].mxu0
      %599 = vdwg.mxu0
      %v600 = vadd.f32 %v545, %v595
      %s601 = scalar_lea.vmem %s1, 60
      %v602 = vld [vmem:[%s601] sm:$0xf]
      %v604 = vsel %vm259, %v602, 0
      %606 = vmatprep.subr.bf16.mxu0 0
      %607 = vmatpush1.bf16.msra.mxu0 %v363
      %608 = vmatprep.subr.bf16.mxu0 0
      %609 = vmatpush1.bf16.msra.mxu0 0
      %610 = vmatprep.subr.bf16.mxu0 0
      %611 = vmatpush1.bf16.msra.mxu0 0
      %612 = vmatprep.subr.bf16.mxu0 0
      %613 = vmatpush1.bf16.msra.mxu0 0
      %614 = vmatprep.subr.bf16.mxu0 0
      %615 = vmatpush1.bf16.msra.mxu0 0
      %616 = vmatprep.subr.bf16.mxu0 0
      %617 = vmatpush1.bf16.msra.mxu0 0
      %618 = vmatprep.subr.bf16.mxu0 0
      %619 = vmatpush1.bf16.msra.mxu0 0
      %620 = vmatprep.subr.bf16.mxu0 0
      %621 = vmatpush1.bf16.msra.mxu0 0
      %622 = vmatprep.subr.bf16.mxu0 0
      %623 = vmatpush1.bf16.msra.mxu0 0
      %624 = vmatprep.subr.bf16.mxu0 0
      %625 = vmatpush1.bf16.msra.mxu0 0
      %626 = vmatprep.subr.bf16.mxu0 0
      %627 = vmatpush1.bf16.msra.mxu0 0
      %628 = vmatprep.subr.bf16.mxu0 0
      %629 = vmatpush1.bf16.msra.mxu0 0
      %630 = vmatprep.subr.bf16.mxu0 0
      %631 = vmatpush1.bf16.msra.mxu0 0
      %632 = vmatprep.subr.bf16.mxu0 0
      %633 = vmatpush1.bf16.msra.mxu0 0
      %634 = vmatprep.subr.bf16.mxu0 0
      %635 = vmatpush1.bf16.msra.mxu0 0
      %636 = vmatprep.subr.bf16.mxu0 0
      %637 = vmatpush1.bf16.msra.mxu0 0
      %638 = vmatprep.mubr.bf16.mxu0 0
      %639 = vmatmul.mubr.bf16.gmra.mrb[0].mxu0 %v604
      %v640 = vpop.f32.mrb[0].mxu0
      %v641 = vadd.f32 0.0, %v640
      %v642 = vpop.f32.mrb[0].mxu0
      %v643 = vpop.f32.mrb[0].mxu0
      %v644 = vpop.f32.mrb[0].mxu0
      %645 = vdwg.mxu0
      %v646 = vadd.f32 %v600, %v641
      %s647 = scalar_lea.vmem %s1, 96
      %v648 = vld [vmem:[%s647] sm:$0xf]
      %s649 = scalar_lea.vmem %s1, 100
      %v650 = vld [vmem:[%s649] sm:$0xf]
      %651 = vrot.lane.b32.xlu0 %v256, 108
      %v652 = vpop.permute.xlu0 %651
      %v654 = vsel %vm259, %v650, 0
      %v657 = vsel %vm263, %v652, 0
      %659 = vmatprep.subr.bf16.mxu0 0
      %660 = vmatpush1.bf16.msra.mxu0 %v657
      %661 = vmatprep.subr.bf16.mxu0 0
      %662 = vmatpush1.bf16.msra.mxu0 0
      %663 = vmatprep.subr.bf16.mxu0 0
      %664 = vmatpush1.bf16.msra.mxu0 0
      %665 = vmatprep.subr.bf16.mxu0 0
      %666 = vmatpush1.bf16.msra.mxu0 0
      %667 = vmatprep.subr.bf16.mxu0 0
      %668 = vmatpush1.bf16.msra.mxu0 0
      %669 = vmatprep.subr.bf16.mxu0 0
      %670 = vmatpush1.bf16.msra.mxu0 0
      %671 = vmatprep.subr.bf16.mxu0 0
      %672 = vmatpush1.bf16.msra.mxu0 0
      %673 = vmatprep.subr.bf16.mxu0 0
      %674 = vmatpush1.bf16.msra.mxu0 0
      %675 = vmatprep.subr.bf16.mxu0 0
      %676 = vmatpush1.bf16.msra.mxu0 0
      %677 = vmatprep.subr.bf16.mxu0 0
      %678 = vmatpush1.bf16.msra.mxu0 0
      %679 = vmatprep.subr.bf16.mxu0 0
      %680 = vmatpush1.bf16.msra.mxu0 0
      %681 = vmatprep.subr.bf16.mxu0 0
      %682 = vmatpush1.bf16.msra.mxu0 0
      %683 = vmatprep.subr.bf16.mxu0 0
      %684 = vmatpush1.bf16.msra.mxu0 0
      %685 = vmatprep.subr.bf16.mxu0 0
      %686 = vmatpush1.bf16.msra.mxu0 0
      %687 = vmatprep.subr.bf16.mxu0 0
      %688 = vmatpush1.bf16.msra.mxu0 0
      %689 = vmatprep.subr.bf16.mxu0 0
      %690 = vmatpush1.bf16.msra.mxu0 0
      %691 = vmatprep.mubr.bf16.mxu0 0
      %692 = vmatmul.mubr.bf16.gmra.mrb[0].mxu0 %v654
      %v693 = vpop.f32.mrb[0].mxu0
      %v694 = vadd.f32 0.0, %v693
      %v695 = vpop.f32.mrb[0].mxu0
      %v696 = vpop.f32.mrb[0].mxu0
      %v697 = vpop.f32.mrb[0].mxu0
      %698 = vdwg.mxu0
      %699 = vrot.lane.b32.xlu0 %v256, 107
      %v700 = vpop.permute.xlu0 %699
      %v702 = vsel %vm259, %v648, 0
      %v705 = vsel %vm263, %v700, 0
      %707 = vmatprep.subr.bf16.mxu0 0
      %708 = vmatpush1.bf16.msra.mxu0 %v705
      %709 = vmatprep.subr.bf16.mxu0 0
      %710 = vmatpush1.bf16.msra.mxu0 0
      %711 = vmatprep.subr.bf16.mxu0 0
      %712 = vmatpush1.bf16.msra.mxu0 0
      %713 = vmatprep.subr.bf16.mxu0 0
      %714 = vmatpush1.bf16.msra.mxu0 0
      %715 = vmatprep.subr.bf16.mxu0 0
      %716 = vmatpush1.bf16.msra.mxu0 0
      %717 = vmatprep.subr.bf16.mxu0 0
      %718 = vmatpush1.bf16.msra.mxu0 0
      %719 = vmatprep.subr.bf16.mxu0 0
      %720 = vmatpush1.bf16.msra.mxu0 0
      %721 = vmatprep.subr.bf16.mxu0 0
      %722 = vmatpush1.bf16.msra.mxu0 0
      %723 = vmatprep.subr.bf16.mxu0 0
      %724 = vmatpush1.bf16.msra.mxu0 0
      %725 = vmatprep.subr.bf16.mxu0 0
      %726 = vmatpush1.bf16.msra.mxu0 0
      %727 = vmatprep.subr.bf16.mxu0 0
      %728 = vmatpush1.bf16.msra.mxu0 0
      %729 = vmatprep.subr.bf16.mxu0 0
      %730 = vmatpush1.bf16.msra.mxu0 0
      %731 = vmatprep.subr.bf16.mxu0 0
      %732 = vmatpush1.bf16.msra.mxu0 0
      %733 = vmatprep.subr.bf16.mxu0 0
      %734 = vmatpush1.bf16.msra.mxu0 0
      %735 = vmatprep.subr.bf16.mxu0 0
      %736 = vmatpush1.bf16.msra.mxu0 0
      %737 = vmatprep.subr.bf16.mxu0 0
      %738 = vmatpush1.bf16.msra.mxu0 0
      %739 = vmatprep.mubr.bf16.mxu0 0
      %740 = vmatmul.mubr.bf16.gmra.mrb[0].mxu0 %v702
      %v741 = vpop.f32.mrb[0].mxu0
      %v742 = vadd.f32 %v694, %v741
      %v743 = vpop.f32.mrb[0].mxu0
      %v744 = vpop.f32.mrb[0].mxu0
      %v745 = vpop.f32.mrb[0].mxu0
      %746 = vdwg.mxu0
      %s747 = scalar_lea.vmem %s1, 104
      %v748 = vld [vmem:[%s747] sm:$0xf]
      %v750 = vsel %vm259, %v748, 0
      %752 = vmatprep.subr.bf16.mxu0 0
      %753 = vmatpush1.bf16.msra.mxu0 %v313
      %754 = vmatprep.subr.bf16.mxu0 0
      %755 = vmatpush1.bf16.msra.mxu0 0
      %756 = vmatprep.subr.bf16.mxu0 0
      %757 = vmatpush1.bf16.msra.mxu0 0
      %758 = vmatprep.subr.bf16.mxu0 0
      %759 = vmatpush1.bf16.msra.mxu0 0
      %760 = vmatprep.subr.bf16.mxu0 0
      %761 = vmatpush1.bf16.msra.mxu0 0
      %762 = vmatprep.subr.bf16.mxu0 0
      %763 = vmatpush1.bf16.msra.mxu0 0
      %764 = vmatprep.subr.bf16.mxu0 0
      %765 = vmatpush1.bf16.msra.mxu0 0
      %766 = vmatprep.subr.bf16.mxu0 0
      %767 = vmatpush1.bf16.msra.mxu0 0
      %768 = vmatprep.subr.bf16.mxu0 0
      %769 = vmatpush1.bf16.msra.mxu0 0
      %770 = vmatprep.subr.bf16.mxu0 0
      %771 = vmatpush1.bf16.msra.mxu0 0
      %772 = vmatprep.subr.bf16.mxu0 0
      %773 = vmatpush1.bf16.msra.mxu0 0
      %774 = vmatprep.subr.bf16.mxu0 0
      %775 = vmatpush1.bf16.msra.mxu0 0
      %776 = vmatprep.subr.bf16.mxu0 0
      %777 = vmatpush1.bf16.msra.mxu0 0
      %778 = vmatprep.subr.bf16.mxu0 0
      %779 = vmatpush1.bf16.msra.mxu0 0
      %780 = vmatprep.subr.bf16.mxu0 0
      %781 = vmatpush1.bf16.msra.mxu0 0
      %782 = vmatprep.subr.bf16.mxu0 0
      %783 = vmatpush1.bf16.msra.mxu0 0
      %784 = vmatprep.mubr.bf16.mxu0 0
      %785 = vmatmul.mubr.bf16.gmra.mrb[0].mxu0 %v750
      %v786 = vpop.f32.mrb[0].mxu0
      %v787 = vadd.f32 0.0, %v786
      %v788 = vpop.f32.mrb[0].mxu0
      %v789 = vpop.f32.mrb[0].mxu0
      %v790 = vpop.f32.mrb[0].mxu0
      %791 = vdwg.mxu0
      %v792 = vadd.f32 %v742, %v787
      %s793 = scalar_lea.vmem %s1, 108
      %v794 = vld [vmem:[%s793] sm:$0xf]
      %v796 = vsel %vm259, %v794, 0
      %798 = vmatprep.subr.bf16.mxu0 0
      %799 = vmatpush1.bf16.msra.mxu0 %v265
      %800 = vmatprep.subr.bf16.mxu0 0
      %801 = vmatpush1.bf16.msra.mxu0 0
      %802 = vmatprep.subr.bf16.mxu0 0
      %803 = vmatpush1.bf16.msra.mxu0 0
      %804 = vmatprep.subr.bf16.mxu0 0
      %805 = vmatpush1.bf16.msra.mxu0 0
      %806 = vmatprep.subr.bf16.mxu0 0
      %807 = vmatpush1.bf16.msra.mxu0 0
      %808 = vmatprep.subr.bf16.mxu0 0
      %809 = vmatpush1.bf16.msra.mxu0 0
      %810 = vmatprep.subr.bf16.mxu0 0
      %811 = vmatpush1.bf16.msra.mxu0 0
      %812 = vmatprep.subr.bf16.mxu0 0
      %813 = vmatpush1.bf16.msra.mxu0 0
      %814 = vmatprep.subr.bf16.mxu0 0
      %815 = vmatpush1.bf16.msra.mxu0 0
      %816 = vmatprep.subr.bf16.mxu0 0
      %817 = vmatpush1.bf16.msra.mxu0 0
      %818 = vmatprep.subr.bf16.mxu0 0
      %819 = vmatpush1.bf16.msra.mxu0 0
      %820 = vmatprep.subr.bf16.mxu0 0
      %821 = vmatpush1.bf16.msra.mxu0 0
      %822 = vmatprep.subr.bf16.mxu0 0
      %823 = vmatpush1.bf16.msra.mxu0 0
      %824 = vmatprep.subr.bf16.mxu0 0
      %825 = vmatpush1.bf16.msra.mxu0 0
      %826 = vmatprep.subr.bf16.mxu0 0
      %827 = vmatpush1.bf16.msra.mxu0 0
      %828 = vmatprep.subr.bf16.mxu0 0
      %829 = vmatpush1.bf16.msra.mxu0 0
      %830 = vmatprep.mubr.bf16.mxu0 0
      %831 = vmatmul.mubr.bf16.gmra.mrb[0].mxu0 %v796
      %v832 = vpop.f32.mrb[0].mxu0
      %v833 = vadd.f32 0.0, %v832
      %v834 = vpop.f32.mrb[0].mxu0
      %v835 = vpop.f32.mrb[0].mxu0
      %v836 = vpop.f32.mrb[0].mxu0
      %837 = vdwg.mxu0
      %v838 = vadd.f32 %v792, %v833
      %s839 = scalar_lea.vmem %s1, 144
      %v840 = vld [vmem:[%s839] sm:$0xf]
      %s841 = scalar_lea.vmem %s1, 148
      %v842 = vld [vmem:[%s841] sm:$0xf]
      %v844 = vsel %vm259, %v842, 0
      %846 = vmatprep.subr.bf16.mxu0 0
      %847 = vmatpush1.bf16.msra.mxu0 %v705
      %848 = vmatprep.subr.bf16.mxu0 0
      %849 = vmatpush1.bf16.msra.mxu0 0
      %850 = vmatprep.subr.bf16.mxu0 0
      %851 = vmatpush1.bf16.msra.mxu0 0
      %852 = vmatprep.subr.bf16.mxu0 0
      %853 = vmatpush1.bf16.msra.mxu0 0
      %854 = vmatprep.subr.bf16.mxu0 0
      %855 = vmatpush1.bf16.msra.mxu0 0
      %856 = vmatprep.subr.bf16.mxu0 0
      %857 = vmatpush1.bf16.msra.mxu0 0
      %858 = vmatprep.subr.bf16.mxu0 0
      %859 = vmatpush1.bf16.msra.mxu0 0
      %860 = vmatprep.subr.bf16.mxu0 0
      %861 = vmatpush1.bf16.msra.mxu0 0
      %862 = vmatprep.subr.bf16.mxu0 0
      %863 = vmatpush1.bf16.msra.mxu0 0
      %864 = vmatprep.subr.bf16.mxu0 0
      %865 = vmatpush1.bf16.msra.mxu0 0
      %866 = vmatprep.subr.bf16.mxu0 0
      %867 = vmatpush1.bf16.msra.mxu0 0
      %868 = vmatprep.subr.bf16.mxu0 0
      %869 = vmatpush1.bf16.msra.mxu0 0
      %870 = vmatprep.subr.bf16.mxu0 0
      %871 = vmatpush1.bf16.msra.mxu0 0
      %872 = vmatprep.subr.bf16.mxu0 0
      %873 = vmatpush1.bf16.msra.mxu0 0
      %874 = vmatprep.subr.bf16.mxu0 0
      %875 = vmatpush1.bf16.msra.mxu0 0
      %876 = vmatprep.subr.bf16.mxu0 0
      %877 = vmatpush1.bf16.msra.mxu0 0
      %878 = vmatprep.mubr.bf16.mxu0 0
      %879 = vmatmul.mubr.bf16.gmra.mrb[0].mxu0 %v844
      %v880 = vpop.f32.mrb[0].mxu0
      %v881 = vadd.f32 0.0, %v880
      %v882 = vpop.f32.mrb[0].mxu0
      %v883 = vpop.f32.mrb[0].mxu0
      %v884 = vpop.f32.mrb[0].mxu0
      %885 = vdwg.mxu0
      %886 = vrot.lane.b32.xlu0 %v256, 106
      %v887 = vpop.permute.xlu0 %886
      %v889 = vsel %vm259, %v840, 0
      %v892 = vsel %vm263, %v887, 0
      %894 = vmatprep.subr.bf16.mxu0 0
      %895 = vmatpush1.bf16.msra.mxu0 %v892
      %896 = vmatprep.subr.bf16.mxu0 0
      %897 = vmatpush1.bf16.msra.mxu0 0
      %898 = vmatprep.subr.bf16.mxu0 0
      %899 = vmatpush1.bf16.msra.mxu0 0
      %900 = vmatprep.subr.bf16.mxu0 0
      %901 = vmatpush1.bf16.msra.mxu0 0
      %902 = vmatprep.subr.bf16.mxu0 0
      %903 = vmatpush1.bf16.msra.mxu0 0
      %904 = vmatprep.subr.bf16.mxu0 0
      %905 = vmatpush1.bf16.msra.mxu0 0
      %906 = vmatprep.subr.bf16.mxu0 0
      %907 = vmatpush1.bf16.msra.mxu0 0
      %908 = vmatprep.subr.bf16.mxu0 0
      %909 = vmatpush1.bf16.msra.mxu0 0
      %910 = vmatprep.subr.bf16.mxu0 0
      %911 = vmatpush1.bf16.msra.mxu0 0
      %912 = vmatprep.subr.bf16.mxu0 0
      %913 = vmatpush1.bf16.msra.mxu0 0
      %914 = vmatprep.subr.bf16.mxu0 0
      %915 = vmatpush1.bf16.msra.mxu0 0
      %916 = vmatprep.subr.bf16.mxu0 0
      %917 = vmatpush1.bf16.msra.mxu0 0
      %918 = vmatprep.subr.bf16.mxu0 0
      %919 = vmatpush1.bf16.msra.mxu0 0
      %920 = vmatprep.subr.bf16.mxu0 0
      %921 = vmatpush1.bf16.msra.mxu0 0
      %922 = vmatprep.subr.bf16.mxu0 0
      %923 = vmatpush1.bf16.msra.mxu0 0
      %924 = vmatprep.subr.bf16.mxu0 0
      %925 = vmatpush1.bf16.msra.mxu0 0
      %926 = vmatprep.mubr.bf16.mxu0 0
      %927 = vmatmul.mubr.bf16.gmra.mrb[0].mxu0 %v889
      %v928 = vpop.f32.mrb[0].mxu0
      %v929 = vadd.f32 %v881, %v928
      %v930 = vpop.f32.mrb[0].mxu0
      %v931 = vpop.f32.mrb[0].mxu0
      %v932 = vpop.f32.mrb[0].mxu0
      %933 = vdwg.mxu0
      %s934 = scalar_lea.vmem %s1, 152
      %v935 = vld [vmem:[%s934] sm:$0xf]
      %v937 = vsel %vm259, %v935, 0
      %939 = vmatprep.subr.bf16.mxu0 0
      %940 = vmatpush1.bf16.msra.mxu0 %v508
      %941 = vmatprep.subr.bf16.mxu0 0
      %942 = vmatpush1.bf16.msra.mxu0 0
      %943 = vmatprep.subr.bf16.mxu0 0
      %944 = vmatpush1.bf16.msra.mxu0 0
      %945 = vmatprep.subr.bf16.mxu0 0
      %946 = vmatpush1.bf16.msra.mxu0 0
      %947 = vmatprep.subr.bf16.mxu0 0
      %948 = vmatpush1.bf16.msra.mxu0 0
      %949 = vmatprep.subr.bf16.mxu0 0
      %950 = vmatpush1.bf16.msra.mxu0 0
      %951 = vmatprep.subr.bf16.mxu0 0
      %952 = vmatpush1.bf16.msra.mxu0 0
      %953 = vmatprep.subr.bf16.mxu0 0
      %954 = vmatpush1.bf16.msra.mxu0 0
      %955 = vmatprep.subr.bf16.mxu0 0
      %956 = vmatpush1.bf16.msra.mxu0 0
      %957 = vmatprep.subr.bf16.mxu0 0
      %958 = vmatpush1.bf16.msra.mxu0 0
      %959 = vmatprep.subr.bf16.mxu0 0
      %960 = vmatpush1.bf16.msra.mxu0 0
      %961 = vmatprep.subr.bf16.mxu0 0
      %962 = vmatpush1.bf16.msra.mxu0 0
      %963 = vmatprep.subr.bf16.mxu0 0
      %964 = vmatpush1.bf16.msra.mxu0 0
      %965 = vmatprep.subr.bf16.mxu0 0
      %966 = vmatpush1.bf16.msra.mxu0 0
      %967 = vmatprep.subr.bf16.mxu0 0
      %968 = vmatpush1.bf16.msra.mxu0 0
      %969 = vmatprep.subr.bf16.mxu0 0
      %970 = vmatpush1.bf16.msra.mxu0 0
      %971 = vmatprep.mubr.bf16.mxu0 0
      %972 = vmatmul.mubr.bf16.gmra.mrb[0].mxu0 %v937
      %v973 = vpop.f32.mrb[0].mxu0
      %v974 = vadd.f32 0.0, %v973
      %v975 = vpop.f32.mrb[0].mxu0
      %v976 = vpop.f32.mrb[0].mxu0
      %v977 = vpop.f32.mrb[0].mxu0
      %978 = vdwg.mxu0
      %v979 = vadd.f32 %v929, %v974
      %s980 = scalar_lea.vmem %s1, 156
      %v981 = vld [vmem:[%s980] sm:$0xf]
      %v983 = vsel %vm259, %v981, 0
      %985 = vmatprep.subr.bf16.mxu0 0
      %986 = vmatpush1.bf16.msra.mxu0 %v313
      %987 = vmatprep.subr.bf16.mxu0 0
      %988 = vmatpush1.bf16.msra.mxu0 0
      %989 = vmatprep.subr.bf16.mxu0 0
      %990 = vmatpush1.bf16.msra.mxu0 0
      %991 = vmatprep.subr.bf16.mxu0 0
      %992 = vmatpush1.bf16.msra.mxu0 0
      %993 = vmatprep.subr.bf16.mxu0 0
      %994 = vmatpush1.bf16.msra.mxu0 0
      %995 = vmatprep.subr.bf16.mxu0 0
      %996 = vmatpush1.bf16.msra.mxu0 0
      %997 = vmatprep.subr.bf16.mxu0 0
      %998 = vmatpush1.bf16.msra.mxu0 0
      %999 = vmatprep.subr.bf16.mxu0 0
      %1000 = vmatpush1.bf16.msra.mxu0 0
      %1001 = vmatprep.subr.bf16.mxu0 0
      %1002 = vmatpush1.bf16.msra.mxu0 0
      %1003 = vmatprep.subr.bf16.mxu0 0
      %1004 = vmatpush1.bf16.msra.mxu0 0
      %1005 = vmatprep.subr.bf16.mxu0 0
      %1006 = vmatpush1.bf16.msra.mxu0 0
      %1007 = vmatprep.subr.bf16.mxu0 0
      %1008 = vmatpush1.bf16.msra.mxu0 0
      %1009 = vmatprep.subr.bf16.mxu0 0
      %1010 = vmatpush1.bf16.msra.mxu0 0
      %1011 = vmatprep.subr.bf16.mxu0 0
      %1012 = vmatpush1.bf16.msra.mxu0 0
      %1013 = vmatprep.subr.bf16.mxu0 0
      %1014 = vmatpush1.bf16.msra.mxu0 0
      %1015 = vmatprep.subr.bf16.mxu0 0
      %1016 = vmatpush1.bf16.msra.mxu0 0
      %1017 = vmatprep.mubr.bf16.mxu0 0
      %1018 = vmatmul.mubr.bf16.gmra.mrb[0].mxu0 %v983
      %v1019 = vpop.f32.mrb[0].mxu0
      %v1020 = vadd.f32 0.0, %v1019
      %v1021 = vpop.f32.mrb[0].mxu0
      %v1022 = vpop.f32.mrb[0].mxu0
      %v1023 = vpop.f32.mrb[0].mxu0
      %1024 = vdwg.mxu0
      %v1025 = vadd.f32 %v979, %v1020
      %s1026 = sadd.s32 %s21, 1
      %s1027 = smul.addr %s1026, 2
      %s1028 = scalar_lea.vmem %s223, %s1027
      %v1029 = vld [vmem:[%s1028] sm:$0x3]
      %s1030 = scalar_lea.vmem %s1, 16
      %v1031 = vld [vmem:[%s1030] sm:$0xf]
      %v1034 = vunpack.c.l.s4 1983009808
      %v1035 = vunpack.c.0.s8 %v1034
      %v1036 = vlaneseq
      %v1037 = vshrl.u32 %v1036, 7
      %v1038 = vsub.s32 %v1035, %v1037
      %v1039 = vrot.slane %v1029, %v1038
      %1040 = vrot.lane.b32.xlu0 %v1039, 117
      %v1041 = vpop.permute.xlu0 %1040
      %v1043 = vsel %vm259, %v1031, 0
      %v1046 = vsel %vm263, %v1041, 0
      %1048 = vmatprep.subr.bf16.mxu0 0
      %1049 = vmatpush1.bf16.msra.mxu0 %v1046
      %1050 = vmatprep.subr.bf16.mxu0 0
      %1051 = vmatpush1.bf16.msra.mxu0 0
      %1052 = vmatprep.subr.bf16.mxu0 0
      %1053 = vmatpush1.bf16.msra.mxu0 0
      %1054 = vmatprep.subr.bf16.mxu0 0
      %1055 = vmatpush1.bf16.msra.mxu0 0
      %1056 = vmatprep.subr.bf16.mxu0 0
      %1057 = vmatpush1.bf16.msra.mxu0 0
      %1058 = vmatprep.subr.bf16.mxu0 0
      %1059 = vmatpush1.bf16.msra.mxu0 0
      %1060 = vmatprep.subr.bf16.mxu0 0
      %1061 = vmatpush1.bf16.msra.mxu0 0
      %1062 = vmatprep.subr.bf16.mxu0 0
      %1063 = vmatpush1.bf16.msra.mxu0 0
      %1064 = vmatprep.subr.bf16.mxu0 0
      %1065 = vmatpush1.bf16.msra.mxu0 0
      %1066 = vmatprep.subr.bf16.mxu0 0
      %1067 = vmatpush1.bf16.msra.mxu0 0
      %1068 = vmatprep.subr.bf16.mxu0 0
      %1069 = vmatpush1.bf16.msra.mxu0 0
      %1070 = vmatprep.subr.bf16.mxu0 0
      %1071 = vmatpush1.bf16.msra.mxu0 0
      %1072 = vmatprep.subr.bf16.mxu0 0
      %1073 = vmatpush1.bf16.msra.mxu0 0
      %1074 = vmatprep.subr.bf16.mxu0 0
      %1075 = vmatpush1.bf16.msra.mxu0 0
      %1076 = vmatprep.subr.bf16.mxu0 0
      %1077 = vmatpush1.bf16.msra.mxu0 0
      %1078 = vmatprep.subr.bf16.mxu0 0
      %1079 = vmatpush1.bf16.msra.mxu0 0
      %1080 = vmatprep.mubr.bf16.mxu0 0
      %1081 = vmatmul.mubr.bf16.gmra.mrb[0].mxu0 %v1043
      %v1082 = vpop.f32.mrb[0].mxu0
      %v1083 = vadd.f32 0.0, %v1082
      %v1084 = vpop.f32.mrb[0].mxu0
      %v1085 = vpop.f32.mrb[0].mxu0
      %v1086 = vpop.f32.mrb[0].mxu0
      %1087 = vdwg.mxu0
      %v1088 = vadd.f32 %v454, %v1083
      %s1089 = scalar_lea.vmem %s1, 20
      %v1090 = vld [vmem:[%s1089] sm:$0xf]
      %1091 = vrot.lane.b32.xlu0 %v1039, 118
      %v1092 = vpop.permute.xlu0 %1091
      %v1094 = vsel %vm259, %v1090, 0
      %v1097 = vsel %vm263, %v1092, 0
      %1099 = vmatprep.subr.bf16.mxu0 0
      %1100 = vmatpush1.bf16.msra.mxu0 %v1097
      %1101 = vmatprep.subr.bf16.mxu0 0
      %1102 = vmatpush1.bf16.msra.mxu0 0
      %1103 = vmatprep.subr.bf16.mxu0 0
      %1104 = vmatpush1.bf16.msra.mxu0 0
      %1105 = vmatprep.subr.bf16.mxu0 0
      %1106 = vmatpush1.bf16.msra.mxu0 0
      %1107 = vmatprep.subr.bf16.mxu0 0
      %1108 = vmatpush1.bf16.msra.mxu0 0
      %1109 = vmatprep.subr.bf16.mxu0 0
      %1110 = vmatpush1.bf16.msra.mxu0 0
      %1111 = vmatprep.subr.bf16.mxu0 0
      %1112 = vmatpush1.bf16.msra.mxu0 0
      %1113 = vmatprep.subr.bf16.mxu0 0
      %1114 = vmatpush1.bf16.msra.mxu0 0
      %1115 = vmatprep.subr.bf16.mxu0 0
      %1116 = vmatpush1.bf16.msra.mxu0 0
      %1117 = vmatprep.subr.bf16.mxu0 0
      %1118 = vmatpush1.bf16.msra.mxu0 0
      %1119 = vmatprep.subr.bf16.mxu0 0
      %1120 = vmatpush1.bf16.msra.mxu0 0
      %1121 = vmatprep.subr.bf16.mxu0 0
      %1122 = vmatpush1.bf16.msra.mxu0 0
      %1123 = vmatprep.subr.bf16.mxu0 0
      %1124 = vmatpush1.bf16.msra.mxu0 0
      %1125 = vmatprep.subr.bf16.mxu0 0
      %1126 = vmatpush1.bf16.msra.mxu0 0
      %1127 = vmatprep.subr.bf16.mxu0 0
      %1128 = vmatpush1.bf16.msra.mxu0 0
      %1129 = vmatprep.subr.bf16.mxu0 0
      %1130 = vmatpush1.bf16.msra.mxu0 0
      %1131 = vmatprep.mubr.bf16.mxu0 0
      %1132 = vmatmul.mubr.bf16.gmra.mrb[0].mxu0 %v1094
      %v1133 = vpop.f32.mrb[0].mxu0
      %v1134 = vadd.f32 0.0, %v1133
      %v1135 = vpop.f32.mrb[0].mxu0
      %v1136 = vpop.f32.mrb[0].mxu0
      %v1137 = vpop.f32.mrb[0].mxu0
      %1138 = vdwg.mxu0
      %v1139 = vadd.f32 %v1088, %v1134
      %s1140 = scalar_lea.vmem %s1, 24
      %v1141 = vld [vmem:[%s1140] sm:$0xf]
      %1142 = vrot.lane.b32.xlu0 %v1039, 127
      %v1143 = vpop.permute.xlu0 %1142
      %v1145 = vsel %vm259, %v1141, 0
      %v1148 = vsel %vm263, %v1143, 0
      %1150 = vmatprep.subr.bf16.mxu0 0
      %1151 = vmatpush1.bf16.msra.mxu0 %v1148
      %1152 = vmatprep.subr.bf16.mxu0 0
      %1153 = vmatpush1.bf16.msra.mxu0 0
      %1154 = vmatprep.subr.bf16.mxu0 0
      %1155 = vmatpush1.bf16.msra.mxu0 0
      %1156 = vmatprep.subr.bf16.mxu0 0
      %1157 = vmatpush1.bf16.msra.mxu0 0
      %1158 = vmatprep.subr.bf16.mxu0 0
      %1159 = vmatpush1.bf16.msra.mxu0 0
      %1160 = vmatprep.subr.bf16.mxu0 0
      %1161 = vmatpush1.bf16.msra.mxu0 0
      %1162 = vmatprep.subr.bf16.mxu0 0
      %1163 = vmatpush1.bf16.msra.mxu0 0
      %1164 = vmatprep.subr.bf16.mxu0 0
      %1165 = vmatpush1.bf16.msra.mxu0 0
      %1166 = vmatprep.subr.bf16.mxu0 0
      %1167 = vmatpush1.bf16.msra.mxu0 0
      %1168 = vmatprep.subr.bf16.mxu0 0
      %1169 = vmatpush1.bf16.msra.mxu0 0
      %1170 = vmatprep.subr.bf16.mxu0 0
      %1171 = vmatpush1.bf16.msra.mxu0 0
      %1172 = vmatprep.subr.bf16.mxu0 0
      %1173 = vmatpush1.bf16.msra.mxu0 0
      %1174 = vmatprep.subr.bf16.mxu0 0
      %1175 = vmatpush1.bf16.msra.mxu0 0
      %1176 = vmatprep.subr.bf16.mxu0 0
      %1177 = vmatpush1.bf16.msra.mxu0 0
      %1178 = vmatprep.subr.bf16.mxu0 0
      %1179 = vmatpush1.bf16.msra.mxu0 0
      %1180 = vmatprep.subr.bf16.mxu0 0
      %1181 = vmatpush1.bf16.msra.mxu0 0
      %1182 = vmatprep.mubr.bf16.mxu0 0
      %1183 = vmatmul.mubr.bf16.gmra.mrb[0].mxu0 %v1145
      %v1184 = vpop.f32.mrb[0].mxu0
      %v1185 = vadd.f32 0.0, %v1184
      %v1186 = vpop.f32.mrb[0].mxu0
      %v1187 = vpop.f32.mrb[0].mxu0
      %v1188 = vpop.f32.mrb[0].mxu0
      %1189 = vdwg.mxu0
      %v1190 = vadd.f32 %v1139, %v1185
      %s1191 = scalar_lea.vmem %s1, 28
      %v1192 = vld [vmem:[%s1191] sm:$0xf]
      %v1194 = vsel %vm259, %v1192, 0
      %v1197 = vsel %vm263, %v1029, 0
      %1199 = vmatprep.subr.bf16.mxu0 0
      %1200 = vmatpush1.bf16.msra.mxu0 %v1197
      %1201 = vmatprep.subr.bf16.mxu0 0
      %1202 = vmatpush1.bf16.msra.mxu0 0
      %1203 = vmatprep.subr.bf16.mxu0 0
      %1204 = vmatpush1.bf16.msra.mxu0 0
      %1205 = vmatprep.subr.bf16.mxu0 0
      %1206 = vmatpush1.bf16.msra.mxu0 0
      %1207 = vmatprep.subr.bf16.mxu0 0
      %1208 = vmatpush1.bf16.msra.mxu0 0
      %1209 = vmatprep.subr.bf16.mxu0 0
      %1210 = vmatpush1.bf16.msra.mxu0 0
      %1211 = vmatprep.subr.bf16.mxu0 0
      %1212 = vmatpush1.bf16.msra.mxu0 0
      %1213 = vmatprep.subr.bf16.mxu0 0
      %1214 = vmatpush1.bf16.msra.mxu0 0
      %1215 = vmatprep.subr.bf16.mxu0 0
      %1216 = vmatpush1.bf16.msra.mxu0 0
      %1217 = vmatprep.subr.bf16.mxu0 0
      %1218 = vmatpush1.bf16.msra.mxu0 0
      %1219 = vmatprep.subr.bf16.mxu0 0
      %1220 = vmatpush1.bf16.msra.mxu0 0
      %1221 = vmatprep.subr.bf16.mxu0 0
      %1222 = vmatpush1.bf16.msra.mxu0 0
      %1223 = vmatprep.subr.bf16.mxu0 0
      %1224 = vmatpush1.bf16.msra.mxu0 0
      %1225 = vmatprep.subr.bf16.mxu0 0
      %1226 = vmatpush1.bf16.msra.mxu0 0
      %1227 = vmatprep.subr.bf16.mxu0 0
      %1228 = vmatpush1.bf16.msra.mxu0 0
      %1229 = vmatprep.subr.bf16.mxu0 0
      %1230 = vmatpush1.bf16.msra.mxu0 0
      %1231 = vmatprep.mubr.bf16.mxu0 0
      %1232 = vmatmul.mubr.bf16.gmra.mrb[0].mxu0 %v1194
      %v1233 = vpop.f32.mrb[0].mxu0
      %v1234 = vadd.f32 0.0, %v1233
      %v1235 = vpop.f32.mrb[0].mxu0
      %v1236 = vpop.f32.mrb[0].mxu0
      %v1237 = vpop.f32.mrb[0].mxu0
      %1238 = vdwg.mxu0
      %v1239 = vadd.f32 %v1190, %v1234
      %s1240 = scalar_lea.vmem %s1, 64
      %v1241 = vld [vmem:[%s1240] sm:$0xf]
      %1242 = vrot.lane.b32.xlu0 %v1039, 116
      %v1243 = vpop.permute.xlu0 %1242
      %v1245 = vsel %vm259, %v1241, 0
      %v1248 = vsel %vm263, %v1243, 0
      %1250 = vmatprep.subr.bf16.mxu0 0
      %1251 = vmatpush1.bf16.msra.mxu0 %v1248
      %1252 = vmatprep.subr.bf16.mxu0 0
      %1253 = vmatpush1.bf16.msra.mxu0 0
      %1254 = vmatprep.subr.bf16.mxu0 0
      %1255 = vmatpush1.bf16.msra.mxu0 0
      %1256 = vmatprep.subr.bf16.mxu0 0
      %1257 = vmatpush1.bf16.msra.mxu0 0
      %1258 = vmatprep.subr.bf16.mxu0 0
      %1259 = vmatpush1.bf16.msra.mxu0 0
      %1260 = vmatprep.subr.bf16.mxu0 0
      %1261 = vmatpush1.bf16.msra.mxu0 0
      %1262 = vmatprep.subr.bf16.mxu0 0
      %1263 = vmatpush1.bf16.msra.mxu0 0
      %1264 = vmatprep.subr.bf16.mxu0 0
      %1265 = vmatpush1.bf16.msra.mxu0 0
      %1266 = vmatprep.subr.bf16.mxu0 0
      %1267 = vmatpush1.bf16.msra.mxu0 0
      %1268 = vmatprep.subr.bf16.mxu0 0
      %1269 = vmatpush1.bf16.msra.mxu0 0
      %1270 = vmatprep.subr.bf16.mxu0 0
      %1271 = vmatpush1.bf16.msra.mxu0 0
      %1272 = vmatprep.subr.bf16.mxu0 0
      %1273 = vmatpush1.bf16.msra.mxu0 0
      %1274 = vmatprep.subr.bf16.mxu0 0
      %1275 = vmatpush1.bf16.msra.mxu0 0
      %1276 = vmatprep.subr.bf16.mxu0 0
      %1277 = vmatpush1.bf16.msra.mxu0 0
      %1278 = vmatprep.subr.bf16.mxu0 0
      %1279 = vmatpush1.bf16.msra.mxu0 0
      %1280 = vmatprep.subr.bf16.mxu0 0
      %1281 = vmatpush1.bf16.msra.mxu0 0
      %1282 = vmatprep.mubr.bf16.mxu0 0
      %1283 = vmatmul.mubr.bf16.gmra.mrb[0].mxu0 %v1245
      %v1284 = vpop.f32.mrb[0].mxu0
      %v1285 = vadd.f32 0.0, %v1284
      %v1286 = vpop.f32.mrb[0].mxu0
      %v1287 = vpop.f32.mrb[0].mxu0
      %v1288 = vpop.f32.mrb[0].mxu0
      %1289 = vdwg.mxu0
      %v1290 = vadd.f32 %v646, %v1285
      %s1291 = scalar_lea.vmem %s1, 68
      %v1292 = vld [vmem:[%s1291] sm:$0xf]
      %v1294 = vsel %vm259, %v1292, 0
      %1296 = vmatprep.subr.bf16.mxu0 0
      %1297 = vmatpush1.bf16.msra.mxu0 %v1046
      %1298 = vmatprep.subr.bf16.mxu0 0
      %1299 = vmatpush1.bf16.msra.mxu0 0
      %1300 = vmatprep.subr.bf16.mxu0 0
      %1301 = vmatpush1.bf16.msra.mxu0 0
      %1302 = vmatprep.subr.bf16.mxu0 0
      %1303 = vmatpush1.bf16.msra.mxu0 0
      %1304 = vmatprep.subr.bf16.mxu0 0
      %1305 = vmatpush1.bf16.msra.mxu0 0
      %1306 = vmatprep.subr.bf16.mxu0 0
      %1307 = vmatpush1.bf16.msra.mxu0 0
      %1308 = vmatprep.subr.bf16.mxu0 0
      %1309 = vmatpush1.bf16.msra.mxu0 0
      %1310 = vmatprep.subr.bf16.mxu0 0
      %1311 = vmatpush1.bf16.msra.mxu0 0
      %1312 = vmatprep.subr.bf16.mxu0 0
      %1313 = vmatpush1.bf16.msra.mxu0 0
      %1314 = vmatprep.subr.bf16.mxu0 0
      %1315 = vmatpush1.bf16.msra.mxu0 0
      %1316 = vmatprep.subr.bf16.mxu0 0
      %1317 = vmatpush1.bf16.msra.mxu0 0
      %1318 = vmatprep.subr.bf16.mxu0 0
      %1319 = vmatpush1.bf16.msra.mxu0 0
      %1320 = vmatprep.subr.bf16.mxu0 0
      %1321 = vmatpush1.bf16.msra.mxu0 0
      %1322 = vmatprep.subr.bf16.mxu0 0
      %1323 = vmatpush1.bf16.msra.mxu0 0
      %1324 = vmatprep.subr.bf16.mxu0 0
      %1325 = vmatpush1.bf16.msra.mxu0 0
      %1326 = vmatprep.subr.bf16.mxu0 0
      %1327 = vmatpush1.bf16.msra.mxu0 0
      %1328 = vmatprep.mubr.bf16.mxu0 0
      %1329 = vmatmul.mubr.bf16.gmra.mrb[0].mxu0 %v1294
      %v1330 = vpop.f32.mrb[0].mxu0
      %v1331 = vadd.f32 0.0, %v1330
      %v1332 = vpop.f32.mrb[0].mxu0
      %v1333 = vpop.f32.mrb[0].mxu0
      %v1334 = vpop.f32.mrb[0].mxu0
      %1335 = vdwg.mxu0
      %v1336 = vadd.f32 %v1290, %v1331
      %s1337 = scalar_lea.vmem %s1, 72
      %v1338 = vld [vmem:[%s1337] sm:$0xf]
      %1339 = vrot.lane.b32.xlu0 %v1039, 126
      %v1340 = vpop.permute.xlu0 %1339
      %v1342 = vsel %vm259, %v1338, 0
      %v1345 = vsel %vm263, %v1340, 0
      %1347 = vmatprep.subr.bf16.mxu0 0
      %1348 = vmatpush1.bf16.msra.mxu0 %v1345
      %1349 = vmatprep.subr.bf16.mxu0 0
      %1350 = vmatpush1.bf16.msra.mxu0 0
      %1351 = vmatprep.subr.bf16.mxu0 0
      %1352 = vmatpush1.bf16.msra.mxu0 0
      %1353 = vmatprep.subr.bf16.mxu0 0
      %1354 = vmatpush1.bf16.msra.mxu0 0
      %1355 = vmatprep.subr.bf16.mxu0 0
      %1356 = vmatpush1.bf16.msra.mxu0 0
      %1357 = vmatprep.subr.bf16.mxu0 0
      %1358 = vmatpush1.bf16.msra.mxu0 0
      %1359 = vmatprep.subr.bf16.mxu0 0
      %1360 = vmatpush1.bf16.msra.mxu0 0
      %1361 = vmatprep.subr.bf16.mxu0 0
      %1362 = vmatpush1.bf16.msra.mxu0 0
      %1363 = vmatprep.subr.bf16.mxu0 0
      %1364 = vmatpush1.bf16.msra.mxu0 0
      %1365 = vmatprep.subr.bf16.mxu0 0
      %1366 = vmatpush1.bf16.msra.mxu0 0
      %1367 = vmatprep.subr.bf16.mxu0 0
      %1368 = vmatpush1.bf16.msra.mxu0 0
      %1369 = vmatprep.subr.bf16.mxu0 0
      %1370 = vmatpush1.bf16.msra.mxu0 0
      %1371 = vmatprep.subr.bf16.mxu0 0
      %1372 = vmatpush1.bf16.msra.mxu0 0
      %1373 = vmatprep.subr.bf16.mxu0 0
      %1374 = vmatpush1.bf16.msra.mxu0 0
      %1375 = vmatprep.subr.bf16.mxu0 0
      %1376 = vmatpush1.bf16.msra.mxu0 0
      %1377 = vmatprep.subr.bf16.mxu0 0
      %1378 = vmatpush1.bf16.msra.mxu0 0
      %1379 = vmatprep.mubr.bf16.mxu0 0
      %1380 = vmatmul.mubr.bf16.gmra.mrb[0].mxu0 %v1342
      %v1381 = vpop.f32.mrb[0].mxu0
      %v1382 = vadd.f32 0.0, %v1381
      %v1383 = vpop.f32.mrb[0].mxu0
      %v1384 = vpop.f32.mrb[0].mxu0
      %v1385 = vpop.f32.mrb[0].mxu0
      %1386 = vdwg.mxu0
      %v1387 = vadd.f32 %v1336, %v1382
      %s1388 = scalar_lea.vmem %s1, 76
      %v1389 = vld [vmem:[%s1388] sm:$0xf]
      %v1391 = vsel %vm259, %v1389, 0
      %1393 = vmatprep.subr.bf16.mxu0 0
      %1394 = vmatpush1.bf16.msra.mxu0 %v1148
      %1395 = vmatprep.subr.bf16.mxu0 0
      %1396 = vmatpush1.bf16.msra.mxu0 0
      %1397 = vmatprep.subr.bf16.mxu0 0
      %1398 = vmatpush1.bf16.msra.mxu0 0
      %1399 = vmatprep.subr.bf16.mxu0 0
      %1400 = vmatpush1.bf16.msra.mxu0 0
      %1401 = vmatprep.subr.bf16.mxu0 0
      %1402 = vmatpush1.bf16.msra.mxu0 0
      %1403 = vmatprep.subr.bf16.mxu0 0
      %1404 = vmatpush1.bf16.msra.mxu0 0
      %1405 = vmatprep.subr.bf16.mxu0 0
      %1406 = vmatpush1.bf16.msra.mxu0 0
      %1407 = vmatprep.subr.bf16.mxu0 0
      %1408 = vmatpush1.bf16.msra.mxu0 0
      %1409 = vmatprep.subr.bf16.mxu0 0
      %1410 = vmatpush1.bf16.msra.mxu0 0
      %1411 = vmatprep.subr.bf16.mxu0 0
      %1412 = vmatpush1.bf16.msra.mxu0 0
      %1413 = vmatprep.subr.bf16.mxu0 0
      %1414 = vmatpush1.bf16.msra.mxu0 0
      %1415 = vmatprep.subr.bf16.mxu0 0
      %1416 = vmatpush1.bf16.msra.mxu0 0
      %1417 = vmatprep.subr.bf16.mxu0 0
      %1418 = vmatpush1.bf16.msra.mxu0 0
      %1419 = vmatprep.subr.bf16.mxu0 0
      %1420 = vmatpush1.bf16.msra.mxu0 0
      %1421 = vmatprep.subr.bf16.mxu0 0
      %1422 = vmatpush1.bf16.msra.mxu0 0
      %1423 = vmatprep.subr.bf16.mxu0 0
      %1424 = vmatpush1.bf16.msra.mxu0 0
      %1425 = vmatprep.mubr.bf16.mxu0 0
      %1426 = vmatmul.mubr.bf16.gmra.mrb[0].mxu0 %v1391
      %v1427 = vpop.f32.mrb[0].mxu0
      %v1428 = vadd.f32 0.0, %v1427
      %v1429 = vpop.f32.mrb[0].mxu0
      %v1430 = vpop.f32.mrb[0].mxu0
      %v1431 = vpop.f32.mrb[0].mxu0
      %1432 = vdwg.mxu0
      %v1433 = vadd.f32 %v1387, %v1428
      %s1434 = scalar_lea.vmem %s1, 112
      %v1435 = vld [vmem:[%s1434] sm:$0xf]
      %1436 = vrot.lane.b32.xlu0 %v1039, 107
      %v1437 = vpop.permute.xlu0 %1436
      %v1439 = vsel %vm259, %v1435, 0
      %v1442 = vsel %vm263, %v1437, 0
      %1444 = vmatprep.subr.bf16.mxu0 0
      %1445 = vmatpush1.bf16.msra.mxu0 %v1442
      %1446 = vmatprep.subr.bf16.mxu0 0
      %1447 = vmatpush1.bf16.msra.mxu0 0
      %1448 = vmatprep.subr.bf16.mxu0 0
      %1449 = vmatpush1.bf16.msra.mxu0 0
      %1450 = vmatprep.subr.bf16.mxu0 0
      %1451 = vmatpush1.bf16.msra.mxu0 0
      %1452 = vmatprep.subr.bf16.mxu0 0
      %1453 = vmatpush1.bf16.msra.mxu0 0
      %1454 = vmatprep.subr.bf16.mxu0 0
      %1455 = vmatpush1.bf16.msra.mxu0 0
      %1456 = vmatprep.subr.bf16.mxu0 0
      %1457 = vmatpush1.bf16.msra.mxu0 0
      %1458 = vmatprep.subr.bf16.mxu0 0
      %1459 = vmatpush1.bf16.msra.mxu0 0
      %1460 = vmatprep.subr.bf16.mxu0 0
      %1461 = vmatpush1.bf16.msra.mxu0 0
      %1462 = vmatprep.subr.bf16.mxu0 0
      %1463 = vmatpush1.bf16.msra.mxu0 0
      %1464 = vmatprep.subr.bf16.mxu0 0
      %1465 = vmatpush1.bf16.msra.mxu0 0
      %1466 = vmatprep.subr.bf16.mxu0 0
      %1467 = vmatpush1.bf16.msra.mxu0 0
      %1468 = vmatprep.subr.bf16.mxu0 0
      %1469 = vmatpush1.bf16.msra.mxu0 0
      %1470 = vmatprep.subr.bf16.mxu0 0
      %1471 = vmatpush1.bf16.msra.mxu0 0
      %1472 = vmatprep.subr.bf16.mxu0 0
      %1473 = vmatpush1.bf16.msra.mxu0 0
      %1474 = vmatprep.subr.bf16.mxu0 0
      %1475 = vmatpush1.bf16.msra.mxu0 0
      %1476 = vmatprep.mubr.bf16.mxu0 0
      %1477 = vmatmul.mubr.bf16.gmra.mrb[0].mxu0 %v1439
      %v1478 = vpop.f32.mrb[0].mxu0
      %v1479 = vadd.f32 0.0, %v1478
      %v1480 = vpop.f32.mrb[0].mxu0
      %v1481 = vpop.f32.mrb[0].mxu0
      %v1482 = vpop.f32.mrb[0].mxu0
      %1483 = vdwg.mxu0
      %v1484 = vadd.f32 %v838, %v1479
      %s1485 = scalar_lea.vmem %s1, 116
      %v1486 = vld [vmem:[%s1485] sm:$0xf]
      %1487 = vrot.lane.b32.xlu0 %v1039, 108
      %v1488 = vpop.permute.xlu0 %1487
      %v1490 = vsel %vm259, %v1486, 0
      %v1493 = vsel %vm263, %v1488, 0
      %1495 = vmatprep.subr.bf16.mxu0 0
      %1496 = vmatpush1.bf16.msra.mxu0 %v1493
      %1497 = vmatprep.subr.bf16.mxu0 0
      %1498 = vmatpush1.bf16.msra.mxu0 0
      %1499 = vmatprep.subr.bf16.mxu0 0
      %1500 = vmatpush1.bf16.msra.mxu0 0
      %1501 = vmatprep.subr.bf16.mxu0 0
      %1502 = vmatpush1.bf16.msra.mxu0 0
      %1503 = vmatprep.subr.bf16.mxu0 0
      %1504 = vmatpush1.bf16.msra.mxu0 0
      %1505 = vmatprep.subr.bf16.mxu0 0
      %1506 = vmatpush1.bf16.msra.mxu0 0
      %1507 = vmatprep.subr.bf16.mxu0 0
      %1508 = vmatpush1.bf16.msra.mxu0 0
      %1509 = vmatprep.subr.bf16.mxu0 0
      %1510 = vmatpush1.bf16.msra.mxu0 0
      %1511 = vmatprep.subr.bf16.mxu0 0
      %1512 = vmatpush1.bf16.msra.mxu0 0
      %1513 = vmatprep.subr.bf16.mxu0 0
      %1514 = vmatpush1.bf16.msra.mxu0 0
      %1515 = vmatprep.subr.bf16.mxu0 0
      %1516 = vmatpush1.bf16.msra.mxu0 0
      %1517 = vmatprep.subr.bf16.mxu0 0
      %1518 = vmatpush1.bf16.msra.mxu0 0
      %1519 = vmatprep.subr.bf16.mxu0 0
      %1520 = vmatpush1.bf16.msra.mxu0 0
      %1521 = vmatprep.subr.bf16.mxu0 0
      %1522 = vmatpush1.bf16.msra.mxu0 0
      %1523 = vmatprep.subr.bf16.mxu0 0
      %1524 = vmatpush1.bf16.msra.mxu0 0
      %1525 = vmatprep.subr.bf16.mxu0 0
      %1526 = vmatpush1.bf16.msra.mxu0 0
      %1527 = vmatprep.mubr.bf16.mxu0 0
      %1528 = vmatmul.mubr.bf16.gmra.mrb[0].mxu0 %v1490
      %v1529 = vpop.f32.mrb[0].mxu0
      %v1530 = vadd.f32 0.0, %v1529
      %v1531 = vpop.f32.mrb[0].mxu0
      %v1532 = vpop.f32.mrb[0].mxu0
      %v1533 = vpop.f32.mrb[0].mxu0
      %1534 = vdwg.mxu0
      %v1535 = vadd.f32 %v1484, %v1530
      %s1536 = scalar_lea.vmem %s1, 120
      %v1537 = vld [vmem:[%s1536] sm:$0xf]
      %v1539 = vsel %vm259, %v1537, 0
      %1541 = vmatprep.subr.bf16.mxu0 0
      %1542 = vmatpush1.bf16.msra.mxu0 %v1046
      %1543 = vmatprep.subr.bf16.mxu0 0
      %1544 = vmatpush1.bf16.msra.mxu0 0
      %1545 = vmatprep.subr.bf16.mxu0 0
      %1546 = vmatpush1.bf16.msra.mxu0 0
      %1547 = vmatprep.subr.bf16.mxu0 0
      %1548 = vmatpush1.bf16.msra.mxu0 0
      %1549 = vmatprep.subr.bf16.mxu0 0
      %1550 = vmatpush1.bf16.msra.mxu0 0
      %1551 = vmatprep.subr.bf16.mxu0 0
      %1552 = vmatpush1.bf16.msra.mxu0 0
      %1553 = vmatprep.subr.bf16.mxu0 0
      %1554 = vmatpush1.bf16.msra.mxu0 0
      %1555 = vmatprep.subr.bf16.mxu0 0
      %1556 = vmatpush1.bf16.msra.mxu0 0
      %1557 = vmatprep.subr.bf16.mxu0 0
      %1558 = vmatpush1.bf16.msra.mxu0 0
      %1559 = vmatprep.subr.bf16.mxu0 0
      %1560 = vmatpush1.bf16.msra.mxu0 0
      %1561 = vmatprep.subr.bf16.mxu0 0
      %1562 = vmatpush1.bf16.msra.mxu0 0
      %1563 = vmatprep.subr.bf16.mxu0 0
      %1564 = vmatpush1.bf16.msra.mxu0 0
      %1565 = vmatprep.subr.bf16.mxu0 0
      %1566 = vmatpush1.bf16.msra.mxu0 0
      %1567 = vmatprep.subr.bf16.mxu0 0
      %1568 = vmatpush1.bf16.msra.mxu0 0
      %1569 = vmatprep.subr.bf16.mxu0 0
      %1570 = vmatpush1.bf16.msra.mxu0 0
      %1571 = vmatprep.subr.bf16.mxu0 0
      %1572 = vmatpush1.bf16.msra.mxu0 0
      %1573 = vmatprep.mubr.bf16.mxu0 0
      %1574 = vmatmul.mubr.bf16.gmra.mrb[0].mxu0 %v1539
      %v1575 = vpop.f32.mrb[0].mxu0
      %v1576 = vadd.f32 0.0, %v1575
      %v1577 = vpop.f32.mrb[0].mxu0
      %v1578 = vpop.f32.mrb[0].mxu0
      %v1579 = vpop.f32.mrb[0].mxu0
      %1580 = vdwg.mxu0
      %v1581 = vadd.f32 %v1535, %v1576
      %s1582 = scalar_lea.vmem %s1, 124
      %v1583 = vld [vmem:[%s1582] sm:$0xf]
      %v1585 = vsel %vm259, %v1583, 0
      %1587 = vmatprep.subr.bf16.mxu0 0
      %1588 = vmatpush1.bf16.msra.mxu0 %v1097
      %1589 = vmatprep.subr.bf16.mxu0 0
      %1590 = vmatpush1.bf16.msra.mxu0 0
      %1591 = vmatprep.subr.bf16.mxu0 0
      %1592 = vmatpush1.bf16.msra.mxu0 0
      %1593 = vmatprep.subr.bf16.mxu0 0
      %1594 = vmatpush1.bf16.msra.mxu0 0
      %1595 = vmatprep.subr.bf16.mxu0 0
      %1596 = vmatpush1.bf16.msra.mxu0 0
      %1597 = vmatprep.subr.bf16.mxu0 0
      %1598 = vmatpush1.bf16.msra.mxu0 0
      %1599 = vmatprep.subr.bf16.mxu0 0
      %1600 = vmatpush1.bf16.msra.mxu0 0
      %1601 = vmatprep.subr.bf16.mxu0 0
      %1602 = vmatpush1.bf16.msra.mxu0 0
      %1603 = vmatprep.subr.bf16.mxu0 0
      %1604 = vmatpush1.bf16.msra.mxu0 0
      %1605 = vmatprep.subr.bf16.mxu0 0
      %1606 = vmatpush1.bf16.msra.mxu0 0
      %1607 = vmatprep.subr.bf16.mxu0 0
      %1608 = vmatpush1.bf16.msra.mxu0 0
      %1609 = vmatprep.subr.bf16.mxu0 0
      %1610 = vmatpush1.bf16.msra.mxu0 0
      %1611 = vmatprep.subr.bf16.mxu0 0
      %1612 = vmatpush1.bf16.msra.mxu0 0
      %1613 = vmatprep.subr.bf16.mxu0 0
      %1614 = vmatpush1.bf16.msra.mxu0 0
      %1615 = vmatprep.subr.bf16.mxu0 0
      %1616 = vmatpush1.bf16.msra.mxu0 0
      %1617 = vmatprep.subr.bf16.mxu0 0
      %1618 = vmatpush1.bf16.msra.mxu0 0
      %1619 = vmatprep.mubr.bf16.mxu0 0
      %1620 = vmatmul.mubr.bf16.gmra.mrb[0].mxu0 %v1585
      %v1621 = vpop.f32.mrb[0].mxu0
      %v1622 = vadd.f32 0.0, %v1621
      %v1623 = vpop.f32.mrb[0].mxu0
      %v1624 = vpop.f32.mrb[0].mxu0
      %v1625 = vpop.f32.mrb[0].mxu0
      %1626 = vdwg.mxu0
      %v1627 = vadd.f32 %v1581, %v1622
      %s1628 = scalar_lea.vmem %s1, 160
      %v1629 = vld [vmem:[%s1628] sm:$0xf]
      %1630 = vrot.lane.b32.xlu0 %v1039, 106
      %v1631 = vpop.permute.xlu0 %1630
      %v1633 = vsel %vm259, %v1629, 0
      %v1636 = vsel %vm263, %v1631, 0
      %1638 = vmatprep.subr.bf16.mxu0 0
      %1639 = vmatpush1.bf16.msra.mxu0 %v1636
      %1640 = vmatprep.subr.bf16.mxu0 0
      %1641 = vmatpush1.bf16.msra.mxu0 0
      %1642 = vmatprep.subr.bf16.mxu0 0
      %1643 = vmatpush1.bf16.msra.mxu0 0
      %1644 = vmatprep.subr.bf16.mxu0 0
      %1645 = vmatpush1.bf16.msra.mxu0 0
      %1646 = vmatprep.subr.bf16.mxu0 0
      %1647 = vmatpush1.bf16.msra.mxu0 0
      %1648 = vmatprep.subr.bf16.mxu0 0
      %1649 = vmatpush1.bf16.msra.mxu0 0
      %1650 = vmatprep.subr.bf16.mxu0 0
      %1651 = vmatpush1.bf16.msra.mxu0 0
      %1652 = vmatprep.subr.bf16.mxu0 0
      %1653 = vmatpush1.bf16.msra.mxu0 0
      %1654 = vmatprep.subr.bf16.mxu0 0
      %1655 = vmatpush1.bf16.msra.mxu0 0
      %1656 = vmatprep.subr.bf16.mxu0 0
      %1657 = vmatpush1.bf16.msra.mxu0 0
      %1658 = vmatprep.subr.bf16.mxu0 0
      %1659 = vmatpush1.bf16.msra.mxu0 0
      %1660 = vmatprep.subr.bf16.mxu0 0
      %1661 = vmatpush1.bf16.msra.mxu0 0
      %1662 = vmatprep.subr.bf16.mxu0 0
      %1663 = vmatpush1.bf16.msra.mxu0 0
      %1664 = vmatprep.subr.bf16.mxu0 0
      %1665 = vmatpush1.bf16.msra.mxu0 0
      %1666 = vmatprep.subr.bf16.mxu0 0
      %1667 = vmatpush1.bf16.msra.mxu0 0
      %1668 = vmatprep.subr.bf16.mxu0 0
      %1669 = vmatpush1.bf16.msra.mxu0 0
      %1670 = vmatprep.mubr.bf16.mxu0 0
      %1671 = vmatmul.mubr.bf16.gmra.mrb[0].mxu0 %v1633
      %v1672 = vpop.f32.mrb[0].mxu0
      %v1673 = vadd.f32 0.0, %v1672
      %v1674 = vpop.f32.mrb[0].mxu0
      %v1675 = vpop.f32.mrb[0].mxu0
      %v1676 = vpop.f32.mrb[0].mxu0
      %1677 = vdwg.mxu0
      %v1678 = vadd.f32 %v1025, %v1673
      %s1679 = scalar_lea.vmem %s1, 164
      %v1680 = vld [vmem:[%s1679] sm:$0xf]
      %v1682 = vsel %vm259, %v1680, 0
      %1684 = vmatprep.subr.bf16.mxu0 0
      %1685 = vmatpush1.bf16.msra.mxu0 %v1442
      %1686 = vmatprep.subr.bf16.mxu0 0
      %1687 = vmatpush1.bf16.msra.mxu0 0
      %1688 = vmatprep.subr.bf16.mxu0 0
      %1689 = vmatpush1.bf16.msra.mxu0 0
      %1690 = vmatprep.subr.bf16.mxu0 0
      %1691 = vmatpush1.bf16.msra.mxu0 0
      %1692 = vmatprep.subr.bf16.mxu0 0
      %1693 = vmatpush1.bf16.msra.mxu0 0
      %1694 = vmatprep.subr.bf16.mxu0 0
      %1695 = vmatpush1.bf16.msra.mxu0 0
      %1696 = vmatprep.subr.bf16.mxu0 0
      %1697 = vmatpush1.bf16.msra.mxu0 0
      %1698 = vmatprep.subr.bf16.mxu0 0
      %1699 = vmatpush1.bf16.msra.mxu0 0
      %1700 = vmatprep.subr.bf16.mxu0 0
      %1701 = vmatpush1.bf16.msra.mxu0 0
      %1702 = vmatprep.subr.bf16.mxu0 0
      %1703 = vmatpush1.bf16.msra.mxu0 0
      %1704 = vmatprep.subr.bf16.mxu0 0
      %1705 = vmatpush1.bf16.msra.mxu0 0
      %1706 = vmatprep.subr.bf16.mxu0 0
      %1707 = vmatpush1.bf16.msra.mxu0 0
      %1708 = vmatprep.subr.bf16.mxu0 0
      %1709 = vmatpush1.bf16.msra.mxu0 0
      %1710 = vmatprep.subr.bf16.mxu0 0
      %1711 = vmatpush1.bf16.msra.mxu0 0
      %1712 = vmatprep.subr.bf16.mxu0 0
      %1713 = vmatpush1.bf16.msra.mxu0 0
      %1714 = vmatprep.subr.bf16.mxu0 0
      %1715 = vmatpush1.bf16.msra.mxu0 0
      %1716 = vmatprep.mubr.bf16.mxu0 0
      %1717 = vmatmul.mubr.bf16.gmra.mrb[0].mxu0 %v1682
      %v1718 = vpop.f32.mrb[0].mxu0
      %v1719 = vadd.f32 0.0, %v1718
      %v1720 = vpop.f32.mrb[0].mxu0
      %v1721 = vpop.f32.mrb[0].mxu0
      %v1722 = vpop.f32.mrb[0].mxu0
      %1723 = vdwg.mxu0
      %v1724 = vadd.f32 %v1678, %v1719
      %s1725 = scalar_lea.vmem %s1, 168
      %v1726 = vld [vmem:[%s1725] sm:$0xf]
      %v1728 = vsel %vm259, %v1726, 0
      %1730 = vmatprep.subr.bf16.mxu0 0
      %1731 = vmatpush1.bf16.msra.mxu0 %v1248
      %1732 = vmatprep.subr.bf16.mxu0 0
      %1733 = vmatpush1.bf16.msra.mxu0 0
      %1734 = vmatprep.subr.bf16.mxu0 0
      %1735 = vmatpush1.bf16.msra.mxu0 0
      %1736 = vmatprep.subr.bf16.mxu0 0
      %1737 = vmatpush1.bf16.msra.mxu0 0
      %1738 = vmatprep.subr.bf16.mxu0 0
      %1739 = vmatpush1.bf16.msra.mxu0 0
      %1740 = vmatprep.subr.bf16.mxu0 0
      %1741 = vmatpush1.bf16.msra.mxu0 0
      %1742 = vmatprep.subr.bf16.mxu0 0
      %1743 = vmatpush1.bf16.msra.mxu0 0
      %1744 = vmatprep.subr.bf16.mxu0 0
      %1745 = vmatpush1.bf16.msra.mxu0 0
      %1746 = vmatprep.subr.bf16.mxu0 0
      %1747 = vmatpush1.bf16.msra.mxu0 0
      %1748 = vmatprep.subr.bf16.mxu0 0
      %1749 = vmatpush1.bf16.msra.mxu0 0
      %1750 = vmatprep.subr.bf16.mxu0 0
      %1751 = vmatpush1.bf16.msra.mxu0 0
      %1752 = vmatprep.subr.bf16.mxu0 0
      %1753 = vmatpush1.bf16.msra.mxu0 0
      %1754 = vmatprep.subr.bf16.mxu0 0
      %1755 = vmatpush1.bf16.msra.mxu0 0
      %1756 = vmatprep.subr.bf16.mxu0 0
      %1757 = vmatpush1.bf16.msra.mxu0 0
      %1758 = vmatprep.subr.bf16.mxu0 0
      %1759 = vmatpush1.bf16.msra.mxu0 0
      %1760 = vmatprep.subr.bf16.mxu0 0
      %1761 = vmatpush1.bf16.msra.mxu0 0
      %1762 = vmatprep.mubr.bf16.mxu0 0
      %1763 = vmatmul.mubr.bf16.gmra.mrb[0].mxu0 %v1728
      %v1764 = vpop.f32.mrb[0].mxu0
      %v1765 = vadd.f32 0.0, %v1764
      %v1766 = vpop.f32.mrb[0].mxu0
      %v1767 = vpop.f32.mrb[0].mxu0
      %v1768 = vpop.f32.mrb[0].mxu0
      %1769 = vdwg.mxu0
      %v1770 = vadd.f32 %v1724, %v1765
      %s1771 = scalar_lea.vmem %s1, 172
      %v1772 = vld [vmem:[%s1771] sm:$0xf]
      %v1774 = vsel %vm259, %v1772, 0
      %1776 = vmatprep.subr.bf16.mxu0 0
      %1777 = vmatpush1.bf16.msra.mxu0 %v1046
      %1778 = vmatprep.subr.bf16.mxu0 0
      %1779 = vmatpush1.bf16.msra.mxu0 0
      %1780 = vmatprep.subr.bf16.mxu0 0
      %1781 = vmatpush1.bf16.msra.mxu0 0
      %1782 = vmatprep.subr.bf16.mxu0 0
      %1783 = vmatpush1.bf16.msra.mxu0 0
      %1784 = vmatprep.subr.bf16.mxu0 0
      %1785 = vmatpush1.bf16.msra.mxu0 0
      %1786 = vmatprep.subr.bf16.mxu0 0
      %1787 = vmatpush1.bf16.msra.mxu0 0
      %1788 = vmatprep.subr.bf16.mxu0 0
      %1789 = vmatpush1.bf16.msra.mxu0 0
      %1790 = vmatprep.subr.bf16.mxu0 0
      %1791 = vmatpush1.bf16.msra.mxu0 0
      %1792 = vmatprep.subr.bf16.mxu0 0
      %1793 = vmatpush1.bf16.msra.mxu0 0
      %1794 = vmatprep.subr.bf16.mxu0 0
      %1795 = vmatpush1.bf16.msra.mxu0 0
      %1796 = vmatprep.subr.bf16.mxu0 0
      %1797 = vmatpush1.bf16.msra.mxu0 0
      %1798 = vmatprep.subr.bf16.mxu0 0
      %1799 = vmatpush1.bf16.msra.mxu0 0
      %1800 = vmatprep.subr.bf16.mxu0 0
      %1801 = vmatpush1.bf16.msra.mxu0 0
      %1802 = vmatprep.subr.bf16.mxu0 0
      %1803 = vmatpush1.bf16.msra.mxu0 0
      %1804 = vmatprep.subr.bf16.mxu0 0
      %1805 = vmatpush1.bf16.msra.mxu0 0
      %1806 = vmatprep.subr.bf16.mxu0 0
      %1807 = vmatpush1.bf16.msra.mxu0 0
      %1808 = vmatprep.mubr.bf16.mxu0 0
      %1809 = vmatmul.mubr.bf16.gmra.mrb[0].mxu0 %v1774
      %v1810 = vpop.f32.mrb[0].mxu0
      %v1811 = vadd.f32 0.0, %v1810
      %v1812 = vpop.f32.mrb[0].mxu0
      %v1813 = vpop.f32.mrb[0].mxu0
      %v1814 = vpop.f32.mrb[0].mxu0
      %1815 = vdwg.mxu0
      %v1816 = vadd.f32 %v1770, %v1811
      %s1817 = smul.addr %s21, 2
      %s1818 = scalar_lea.vmem %s223, %s1817
      %v1819 = vld [vmem:[%s1818] sm:$0x3]
      %s1820 = scalar_lea.vmem %s1, 32
      %v1821 = vld [vmem:[%s1820] sm:$0xf]
      %v1824 = vunpack.c.l.s4 1983009808
      %v1825 = vunpack.c.0.s8 %v1824
      %v1826 = vlaneseq
      %v1827 = vshrl.u32 %v1826, 7
      %v1828 = vsub.s32 %v1825, %v1827
      %v1829 = vrot.slane %v1819, %v1828
      %1830 = vrot.lane.b32.xlu0 %v1829, 117
      %v1831 = vpop.permute.xlu0 %1830
      %v1833 = vsel %vm259, %v1821, 0
      %v1836 = vsel %vm263, %v1831, 0
      %1838 = vmatprep.subr.bf16.mxu0 0
      %1839 = vmatpush1.bf16.msra.mxu0 %v1836
      %1840 = vmatprep.subr.bf16.mxu0 0
      %1841 = vmatpush1.bf16.msra.mxu0 0
      %1842 = vmatprep.subr.bf16.mxu0 0
      %1843 = vmatpush1.bf16.msra.mxu0 0
      %1844 = vmatprep.subr.bf16.mxu0 0
      %1845 = vmatpush1.bf16.msra.mxu0 0
      %1846 = vmatprep.subr.bf16.mxu0 0
      %1847 = vmatpush1.bf16.msra.mxu0 0
      %1848 = vmatprep.subr.bf16.mxu0 0
      %1849 = vmatpush1.bf16.msra.mxu0 0
      %1850 = vmatprep.subr.bf16.mxu0 0
      %1851 = vmatpush1.bf16.msra.mxu0 0
      %1852 = vmatprep.subr.bf16.mxu0 0
      %1853 = vmatpush1.bf16.msra.mxu0 0
      %1854 = vmatprep.subr.bf16.mxu0 0
      %1855 = vmatpush1.bf16.msra.mxu0 0
      %1856 = vmatprep.subr.bf16.mxu0 0
      %1857 = vmatpush1.bf16.msra.mxu0 0
      %1858 = vmatprep.subr.bf16.mxu0 0
      %1859 = vmatpush1.bf16.msra.mxu0 0
      %1860 = vmatprep.subr.bf16.mxu0 0
      %1861 = vmatpush1.bf16.msra.mxu0 0
      %1862 = vmatprep.subr.bf16.mxu0 0
      %1863 = vmatpush1.bf16.msra.mxu0 0
      %1864 = vmatprep.subr.bf16.mxu0 0
      %1865 = vmatpush1.bf16.msra.mxu0 0
      %1866 = vmatprep.subr.bf16.mxu0 0
      %1867 = vmatpush1.bf16.msra.mxu0 0
      %1868 = vmatprep.subr.bf16.mxu0 0
      %1869 = vmatpush1.bf16.msra.mxu0 0
      %1870 = vmatprep.mubr.bf16.mxu0 0
      %1871 = vmatmul.mubr.bf16.gmra.mrb[0].mxu0 %v1833
      %v1872 = vpop.f32.mrb[0].mxu0
      %v1873 = vadd.f32 0.0, %v1872
      %v1874 = vpop.f32.mrb[0].mxu0
      %v1875 = vpop.f32.mrb[0].mxu0
      %v1876 = vpop.f32.mrb[0].mxu0
      %1877 = vdwg.mxu0
      %v1878 = vadd.f32 %v1239, %v1873
      %s1879 = scalar_lea.vmem %s1, 36
      %v1880 = vld [vmem:[%s1879] sm:$0xf]
      %1881 = vrot.lane.b32.xlu0 %v1829, 118
      %v1882 = vpop.permute.xlu0 %1881
      %v1884 = vsel %vm259, %v1880, 0
      %v1887 = vsel %vm263, %v1882, 0
      %1889 = vmatprep.subr.bf16.mxu0 0
      %1890 = vmatpush1.bf16.msra.mxu0 %v1887
      %1891 = vmatprep.subr.bf16.mxu0 0
      %1892 = vmatpush1.bf16.msra.mxu0 0
      %1893 = vmatprep.subr.bf16.mxu0 0
      %1894 = vmatpush1.bf16.msra.mxu0 0
      %1895 = vmatprep.subr.bf16.mxu0 0
      %1896 = vmatpush1.bf16.msra.mxu0 0
      %1897 = vmatprep.subr.bf16.mxu0 0
      %1898 = vmatpush1.bf16.msra.mxu0 0
      %1899 = vmatprep.subr.bf16.mxu0 0
      %1900 = vmatpush1.bf16.msra.mxu0 0
      %1901 = vmatprep.subr.bf16.mxu0 0
      %1902 = vmatpush1.bf16.msra.mxu0 0
      %1903 = vmatprep.subr.bf16.mxu0 0
      %1904 = vmatpush1.bf16.msra.mxu0 0
      %1905 = vmatprep.subr.bf16.mxu0 0
      %1906 = vmatpush1.bf16.msra.mxu0 0
      %1907 = vmatprep.subr.bf16.mxu0 0
      %1908 = vmatpush1.bf16.msra.mxu0 0
      %1909 = vmatprep.subr.bf16.mxu0 0
      %1910 = vmatpush1.bf16.msra.mxu0 0
      %1911 = vmatprep.subr.bf16.mxu0 0
      %1912 = vmatpush1.bf16.msra.mxu0 0
      %1913 = vmatprep.subr.bf16.mxu0 0
      %1914 = vmatpush1.bf16.msra.mxu0 0
      %1915 = vmatprep.subr.bf16.mxu0 0
      %1916 = vmatpush1.bf16.msra.mxu0 0
      %1917 = vmatprep.subr.bf16.mxu0 0
      %1918 = vmatpush1.bf16.msra.mxu0 0
      %1919 = vmatprep.subr.bf16.mxu0 0
      %1920 = vmatpush1.bf16.msra.mxu0 0
      %1921 = vmatprep.mubr.bf16.mxu0 0
      %1922 = vmatmul.mubr.bf16.gmra.mrb[0].mxu0 %v1884
      %v1923 = vpop.f32.mrb[0].mxu0
      %v1924 = vadd.f32 0.0, %v1923
      %v1925 = vpop.f32.mrb[0].mxu0
      %v1926 = vpop.f32.mrb[0].mxu0
      %v1927 = vpop.f32.mrb[0].mxu0
      %1928 = vdwg.mxu0
      %v1929 = vadd.f32 %v1878, %v1924
      %s1930 = scalar_lea.vmem %s1, 40
      %v1931 = vld [vmem:[%s1930] sm:$0xf]
      %1932 = vrot.lane.b32.xlu0 %v1829, 127
      %v1933 = vpop.permute.xlu0 %1932
      %v1935 = vsel %vm259, %v1931, 0
      %v1938 = vsel %vm263, %v1933, 0
      %1940 = vmatprep.subr.bf16.mxu0 0
      %1941 = vmatpush1.bf16.msra.mxu0 %v1938
      %1942 = vmatprep.subr.bf16.mxu0 0
      %1943 = vmatpush1.bf16.msra.mxu0 0
      %1944 = vmatprep.subr.bf16.mxu0 0
      %1945 = vmatpush1.bf16.msra.mxu0 0
      %1946 = vmatprep.subr.bf16.mxu0 0
      %1947 = vmatpush1.bf16.msra.mxu0 0
      %1948 = vmatprep.subr.bf16.mxu0 0
      %1949 = vmatpush1.bf16.msra.mxu0 0
      %1950 = vmatprep.subr.bf16.mxu0 0
      %1951 = vmatpush1.bf16.msra.mxu0 0
      %1952 = vmatprep.subr.bf16.mxu0 0
      %1953 = vmatpush1.bf16.msra.mxu0 0
      %1954 = vmatprep.subr.bf16.mxu0 0
      %1955 = vmatpush1.bf16.msra.mxu0 0
      %1956 = vmatprep.subr.bf16.mxu0 0
      %1957 = vmatpush1.bf16.msra.mxu0 0
      %1958 = vmatprep.subr.bf16.mxu0 0
      %1959 = vmatpush1.bf16.msra.mxu0 0
      %1960 = vmatprep.subr.bf16.mxu0 0
      %1961 = vmatpush1.bf16.msra.mxu0 0
      %1962 = vmatprep.subr.bf16.mxu0 0
      %1963 = vmatpush1.bf16.msra.mxu0 0
      %1964 = vmatprep.subr.bf16.mxu0 0
      %1965 = vmatpush1.bf16.msra.mxu0 0
      %1966 = vmatprep.subr.bf16.mxu0 0
      %1967 = vmatpush1.bf16.msra.mxu0 0
      %1968 = vmatprep.subr.bf16.mxu0 0
      %1969 = vmatpush1.bf16.msra.mxu0 0
      %1970 = vmatprep.subr.bf16.mxu0 0
      %1971 = vmatpush1.bf16.msra.mxu0 0
      %1972 = vmatprep.mubr.bf16.mxu0 0
      %1973 = vmatmul.mubr.bf16.gmra.mrb[0].mxu0 %v1935
      %v1974 = vpop.f32.mrb[0].mxu0
      %v1975 = vadd.f32 0.0, %v1974
      %v1976 = vpop.f32.mrb[0].mxu0
      %v1977 = vpop.f32.mrb[0].mxu0
      %v1978 = vpop.f32.mrb[0].mxu0
      %1979 = vdwg.mxu0
      %v1980 = vadd.f32 %v1929, %v1975
      %s1981 = scalar_lea.vmem %s1, 44
      %v1982 = vld [vmem:[%s1981] sm:$0xf]
      %v1984 = vsel %vm259, %v1982, 0
      %v1987 = vsel %vm263, %v1819, 0
      %1989 = vmatprep.subr.bf16.mxu0 0
      %1990 = vmatpush1.bf16.msra.mxu0 %v1987
      %1991 = vmatprep.subr.bf16.mxu0 0
      %1992 = vmatpush1.bf16.msra.mxu0 0
      %1993 = vmatprep.subr.bf16.mxu0 0
      %1994 = vmatpush1.bf16.msra.mxu0 0
      %1995 = vmatprep.subr.bf16.mxu0 0
      %1996 = vmatpush1.bf16.msra.mxu0 0
      %1997 = vmatprep.subr.bf16.mxu0 0
      %1998 = vmatpush1.bf16.msra.mxu0 0
      %1999 = vmatprep.subr.bf16.mxu0 0
      %2000 = vmatpush1.bf16.msra.mxu0 0
      %2001 = vmatprep.subr.bf16.mxu0 0
      %2002 = vmatpush1.bf16.msra.mxu0 0
      %2003 = vmatprep.subr.bf16.mxu0 0
      %2004 = vmatpush1.bf16.msra.mxu0 0
      %2005 = vmatprep.subr.bf16.mxu0 0
      %2006 = vmatpush1.bf16.msra.mxu0 0
      %2007 = vmatprep.subr.bf16.mxu0 0
      %2008 = vmatpush1.bf16.msra.mxu0 0
      %2009 = vmatprep.subr.bf16.mxu0 0
      %2010 = vmatpush1.bf16.msra.mxu0 0
      %2011 = vmatprep.subr.bf16.mxu0 0
      %2012 = vmatpush1.bf16.msra.mxu0 0
      %2013 = vmatprep.subr.bf16.mxu0 0
      %2014 = vmatpush1.bf16.msra.mxu0 0
      %2015 = vmatprep.subr.bf16.mxu0 0
      %2016 = vmatpush1.bf16.msra.mxu0 0
      %2017 = vmatprep.subr.bf16.mxu0 0
      %2018 = vmatpush1.bf16.msra.mxu0 0
      %2019 = vmatprep.subr.bf16.mxu0 0
      %2020 = vmatpush1.bf16.msra.mxu0 0
      %2021 = vmatprep.mubr.bf16.mxu0 0
      %2022 = vmatmul.mubr.bf16.gmra.mrb[0].mxu0 %v1984
      %v2023 = vpop.f32.mrb[0].mxu0
      %v2024 = vadd.f32 0.0, %v2023
      %v2025 = vpop.f32.mrb[0].mxu0
      %v2026 = vpop.f32.mrb[0].mxu0
      %v2027 = vpop.f32.mrb[0].mxu0
      %2028 = vdwg.mxu0
      %v2029 = vadd.f32 %v1980, %v2024
      %s2030 = scalar_lea.vmem %s1, 80
      %v2031 = vld [vmem:[%s2030] sm:$0xf]
      %2032 = vrot.lane.b32.xlu0 %v1829, 116
      %v2033 = vpop.permute.xlu0 %2032
      %v2035 = vsel %vm259, %v2031, 0
      %v2038 = vsel %vm263, %v2033, 0
      %2040 = vmatprep.subr.bf16.mxu0 0
      %2041 = vmatpush1.bf16.msra.mxu0 %v2038
      %2042 = vmatprep.subr.bf16.mxu0 0
      %2043 = vmatpush1.bf16.msra.mxu0 0
      %2044 = vmatprep.subr.bf16.mxu0 0
      %2045 = vmatpush1.bf16.msra.mxu0 0
      %2046 = vmatprep.subr.bf16.mxu0 0
      %2047 = vmatpush1.bf16.msra.mxu0 0
      %2048 = vmatprep.subr.bf16.mxu0 0
      %2049 = vmatpush1.bf16.msra.mxu0 0
      %2050 = vmatprep.subr.bf16.mxu0 0
      %2051 = vmatpush1.bf16.msra.mxu0 0
      %2052 = vmatprep.subr.bf16.mxu0 0
      %2053 = vmatpush1.bf16.msra.mxu0 0
      %2054 = vmatprep.subr.bf16.mxu0 0
      %2055 = vmatpush1.bf16.msra.mxu0 0
      %2056 = vmatprep.subr.bf16.mxu0 0
      %2057 = vmatpush1.bf16.msra.mxu0 0
      %2058 = vmatprep.subr.bf16.mxu0 0
      %2059 = vmatpush1.bf16.msra.mxu0 0
      %2060 = vmatprep.subr.bf16.mxu0 0
      %2061 = vmatpush1.bf16.msra.mxu0 0
      %2062 = vmatprep.subr.bf16.mxu0 0
      %2063 = vmatpush1.bf16.msra.mxu0 0
      %2064 = vmatprep.subr.bf16.mxu0 0
      %2065 = vmatpush1.bf16.msra.mxu0 0
      %2066 = vmatprep.subr.bf16.mxu0 0
      %2067 = vmatpush1.bf16.msra.mxu0 0
      %2068 = vmatprep.subr.bf16.mxu0 0
      %2069 = vmatpush1.bf16.msra.mxu0 0
      %2070 = vmatprep.subr.bf16.mxu0 0
      %2071 = vmatpush1.bf16.msra.mxu0 0
      %2072 = vmatprep.mubr.bf16.mxu0 0
      %2073 = vmatmul.mubr.bf16.gmra.mrb[0].mxu0 %v2035
      %v2074 = vpop.f32.mrb[0].mxu0
      %v2075 = vadd.f32 0.0, %v2074
      %v2076 = vpop.f32.mrb[0].mxu0
      %v2077 = vpop.f32.mrb[0].mxu0
      %v2078 = vpop.f32.mrb[0].mxu0
      %2079 = vdwg.mxu0
      %v2080 = vadd.f32 %v1433, %v2075
      %s2081 = scalar_lea.vmem %s1, 84
      %v2082 = vld [vmem:[%s2081] sm:$0xf]
      %v2084 = vsel %vm259, %v2082, 0
      %2086 = vmatprep.subr.bf16.mxu0 0
      %2087 = vmatpush1.bf16.msra.mxu0 %v1836
      %2088 = vmatprep.subr.bf16.mxu0 0
      %2089 = vmatpush1.bf16.msra.mxu0 0
      %2090 = vmatprep.subr.bf16.mxu0 0
      %2091 = vmatpush1.bf16.msra.mxu0 0
      %2092 = vmatprep.subr.bf16.mxu0 0
      %2093 = vmatpush1.bf16.msra.mxu0 0
      %2094 = vmatprep.subr.bf16.mxu0 0
      %2095 = vmatpush1.bf16.msra.mxu0 0
      %2096 = vmatprep.subr.bf16.mxu0 0
      %2097 = vmatpush1.bf16.msra.mxu0 0
      %2098 = vmatprep.subr.bf16.mxu0 0
      %2099 = vmatpush1.bf16.msra.mxu0 0
      %2100 = vmatprep.subr.bf16.mxu0 0
      %2101 = vmatpush1.bf16.msra.mxu0 0
      %2102 = vmatprep.subr.bf16.mxu0 0
      %2103 = vmatpush1.bf16.msra.mxu0 0
      %2104 = vmatprep.subr.bf16.mxu0 0
      %2105 = vmatpush1.bf16.msra.mxu0 0
      %2106 = vmatprep.subr.bf16.mxu0 0
      %2107 = vmatpush1.bf16.msra.mxu0 0
      %2108 = vmatprep.subr.bf16.mxu0 0
      %2109 = vmatpush1.bf16.msra.mxu0 0
      %2110 = vmatprep.subr.bf16.mxu0 0
      %2111 = vmatpush1.bf16.msra.mxu0 0
      %2112 = vmatprep.subr.bf16.mxu0 0
      %2113 = vmatpush1.bf16.msra.mxu0 0
      %2114 = vmatprep.subr.bf16.mxu0 0
      %2115 = vmatpush1.bf16.msra.mxu0 0
      %2116 = vmatprep.subr.bf16.mxu0 0
      %2117 = vmatpush1.bf16.msra.mxu0 0
      %2118 = vmatprep.mubr.bf16.mxu0 0
      %2119 = vmatmul.mubr.bf16.gmra.mrb[0].mxu0 %v2084
      %v2120 = vpop.f32.mrb[0].mxu0
      %v2121 = vadd.f32 0.0, %v2120
      %v2122 = vpop.f32.mrb[0].mxu0
      %v2123 = vpop.f32.mrb[0].mxu0
      %v2124 = vpop.f32.mrb[0].mxu0
      %2125 = vdwg.mxu0
      %v2126 = vadd.f32 %v2080, %v2121
      %s2127 = scalar_lea.vmem %s1, 88
      %v2128 = vld [vmem:[%s2127] sm:$0xf]
      %2129 = vrot.lane.b32.xlu0 %v1829, 126
      %v2130 = vpop.permute.xlu0 %2129
      %v2132 = vsel %vm259, %v2128, 0
      %v2135 = vsel %vm263, %v2130, 0
      %2137 = vmatprep.subr.bf16.mxu0 0
      %2138 = vmatpush1.bf16.msra.mxu0 %v2135
      %2139 = vmatprep.subr.bf16.mxu0 0
      %2140 = vmatpush1.bf16.msra.mxu0 0
      %2141 = vmatprep.subr.bf16.mxu0 0
      %2142 = vmatpush1.bf16.msra.mxu0 0
      %2143 = vmatprep.subr.bf16.mxu0 0
      %2144 = vmatpush1.bf16.msra.mxu0 0
      %2145 = vmatprep.subr.bf16.mxu0 0
      %2146 = vmatpush1.bf16.msra.mxu0 0
      %2147 = vmatprep.subr.bf16.mxu0 0
      %2148 = vmatpush1.bf16.msra.mxu0 0
      %2149 = vmatprep.subr.bf16.mxu0 0
      %2150 = vmatpush1.bf16.msra.mxu0 0
      %2151 = vmatprep.subr.bf16.mxu0 0
      %2152 = vmatpush1.bf16.msra.mxu0 0
      %2153 = vmatprep.subr.bf16.mxu0 0
      %2154 = vmatpush1.bf16.msra.mxu0 0
      %2155 = vmatprep.subr.bf16.mxu0 0
      %2156 = vmatpush1.bf16.msra.mxu0 0
      %2157 = vmatprep.subr.bf16.mxu0 0
      %2158 = vmatpush1.bf16.msra.mxu0 0
      %2159 = vmatprep.subr.bf16.mxu0 0
      %2160 = vmatpush1.bf16.msra.mxu0 0
      %2161 = vmatprep.subr.bf16.mxu0 0
      %2162 = vmatpush1.bf16.msra.mxu0 0
      %2163 = vmatprep.subr.bf16.mxu0 0
      %2164 = vmatpush1.bf16.msra.mxu0 0
      %2165 = vmatprep.subr.bf16.mxu0 0
      %2166 = vmatpush1.bf16.msra.mxu0 0
      %2167 = vmatprep.subr.bf16.mxu0 0
      %2168 = vmatpush1.bf16.msra.mxu0 0
      %2169 = vmatprep.mubr.bf16.mxu0 0
      %2170 = vmatmul.mubr.bf16.gmra.mrb[0].mxu0 %v2132
      %v2171 = vpop.f32.mrb[0].mxu0
      %v2172 = vadd.f32 0.0, %v2171
      %v2173 = vpop.f32.mrb[0].mxu0
      %v2174 = vpop.f32.mrb[0].mxu0
      %v2175 = vpop.f32.mrb[0].mxu0
      %2176 = vdwg.mxu0
      %v2177 = vadd.f32 %v2126, %v2172
      %s2178 = scalar_lea.vmem %s1, 92
      %v2179 = vld [vmem:[%s2178] sm:$0xf]
      %v2181 = vsel %vm259, %v2179, 0
      %2183 = vmatprep.subr.bf16.mxu0 0
      %2184 = vmatpush1.bf16.msra.mxu0 %v1938
      %2185 = vmatprep.subr.bf16.mxu0 0
      %2186 = vmatpush1.bf16.msra.mxu0 0
      %2187 = vmatprep.subr.bf16.mxu0 0
      %2188 = vmatpush1.bf16.msra.mxu0 0
      %2189 = vmatprep.subr.bf16.mxu0 0
      %2190 = vmatpush1.bf16.msra.mxu0 0
      %2191 = vmatprep.subr.bf16.mxu0 0
      %2192 = vmatpush1.bf16.msra.mxu0 0
      %2193 = vmatprep.subr.bf16.mxu0 0
      %2194 = vmatpush1.bf16.msra.mxu0 0
      %2195 = vmatprep.subr.bf16.mxu0 0
      %2196 = vmatpush1.bf16.msra.mxu0 0
      %2197 = vmatprep.subr.bf16.mxu0 0
      %2198 = vmatpush1.bf16.msra.mxu0 0
      %2199 = vmatprep.subr.bf16.mxu0 0
      %2200 = vmatpush1.bf16.msra.mxu0 0
      %2201 = vmatprep.subr.bf16.mxu0 0
      %2202 = vmatpush1.bf16.msra.mxu0 0
      %2203 = vmatprep.subr.bf16.mxu0 0
      %2204 = vmatpush1.bf16.msra.mxu0 0
      %2205 = vmatprep.subr.bf16.mxu0 0
      %2206 = vmatpush1.bf16.msra.mxu0 0
      %2207 = vmatprep.subr.bf16.mxu0 0
      %2208 = vmatpush1.bf16.msra.mxu0 0
      %2209 = vmatprep.subr.bf16.mxu0 0
      %2210 = vmatpush1.bf16.msra.mxu0 0
      %2211 = vmatprep.subr.bf16.mxu0 0
      %2212 = vmatpush1.bf16.msra.mxu0 0
      %2213 = vmatprep.subr.bf16.mxu0 0
      %2214 = vmatpush1.bf16.msra.mxu0 0
      %2215 = vmatprep.mubr.bf16.mxu0 0
      %2216 = vmatmul.mubr.bf16.gmra.mrb[0].mxu0 %v2181
      %v2217 = vpop.f32.mrb[0].mxu0
      %v2218 = vadd.f32 0.0, %v2217
      %v2219 = vpop.f32.mrb[0].mxu0
      %v2220 = vpop.f32.mrb[0].mxu0
      %v2221 = vpop.f32.mrb[0].mxu0
      %2222 = vdwg.mxu0
      %v2223 = vadd.f32 %v2177, %v2218
      %s2224 = scalar_lea.vmem %s1, 128
      %v2225 = vld [vmem:[%s2224] sm:$0xf]
      %2226 = vrot.lane.b32.xlu0 %v1829, 107
      %v2227 = vpop.permute.xlu0 %2226
      %v2229 = vsel %vm259, %v2225, 0
      %v2232 = vsel %vm263, %v2227, 0
      %2234 = vmatprep.subr.bf16.mxu0 0
      %2235 = vmatpush1.bf16.msra.mxu0 %v2232
      %2236 = vmatprep.subr.bf16.mxu0 0
      %2237 = vmatpush1.bf16.msra.mxu0 0
      %2238 = vmatprep.subr.bf16.mxu0 0
      %2239 = vmatpush1.bf16.msra.mxu0 0
      %2240 = vmatprep.subr.bf16.mxu0 0
      %2241 = vmatpush1.bf16.msra.mxu0 0
      %2242 = vmatprep.subr.bf16.mxu0 0
      %2243 = vmatpush1.bf16.msra.mxu0 0
      %2244 = vmatprep.subr.bf16.mxu0 0
      %2245 = vmatpush1.bf16.msra.mxu0 0
      %2246 = vmatprep.subr.bf16.mxu0 0
      %2247 = vmatpush1.bf16.msra.mxu0 0
      %2248 = vmatprep.subr.bf16.mxu0 0
      %2249 = vmatpush1.bf16.msra.mxu0 0
      %2250 = vmatprep.subr.bf16.mxu0 0
      %2251 = vmatpush1.bf16.msra.mxu0 0
      %2252 = vmatprep.subr.bf16.mxu0 0
      %2253 = vmatpush1.bf16.msra.mxu0 0
      %2254 = vmatprep.subr.bf16.mxu0 0
      %2255 = vmatpush1.bf16.msra.mxu0 0
      %2256 = vmatprep.subr.bf16.mxu0 0
      %2257 = vmatpush1.bf16.msra.mxu0 0
      %2258 = vmatprep.subr.bf16.mxu0 0
      %2259 = vmatpush1.bf16.msra.mxu0 0
      %2260 = vmatprep.subr.bf16.mxu0 0
      %2261 = vmatpush1.bf16.msra.mxu0 0
      %2262 = vmatprep.subr.bf16.mxu0 0
      %2263 = vmatpush1.bf16.msra.mxu0 0
      %2264 = vmatprep.subr.bf16.mxu0 0
      %2265 = vmatpush1.bf16.msra.mxu0 0
      %2266 = vmatprep.mubr.bf16.mxu0 0
      %2267 = vmatmul.mubr.bf16.gmra.mrb[0].mxu0 %v2229
      %v2268 = vpop.f32.mrb[0].mxu0
      %v2269 = vadd.f32 0.0, %v2268
      %v2270 = vpop.f32.mrb[0].mxu0
      %v2271 = vpop.f32.mrb[0].mxu0
      %v2272 = vpop.f32.mrb[0].mxu0
      %2273 = vdwg.mxu0
      %v2274 = vadd.f32 %v1627, %v2269
      %s2275 = scalar_lea.vmem %s1, 132
      %v2276 = vld [vmem:[%s2275] sm:$0xf]
      %2277 = vrot.lane.b32.xlu0 %v1829, 108
      %v2278 = vpop.permute.xlu0 %2277
      %v2280 = vsel %vm259, %v2276, 0
      %v2283 = vsel %vm263, %v2278, 0
      %2285 = vmatprep.subr.bf16.mxu0 0
      %2286 = vmatpush1.bf16.msra.mxu0 %v2283
      %2287 = vmatprep.subr.bf16.mxu0 0
      %2288 = vmatpush1.bf16.msra.mxu0 0
      %2289 = vmatprep.subr.bf16.mxu0 0
      %2290 = vmatpush1.bf16.msra.mxu0 0
      %2291 = vmatprep.subr.bf16.mxu0 0
      %2292 = vmatpush1.bf16.msra.mxu0 0
      %2293 = vmatprep.subr.bf16.mxu0 0
      %2294 = vmatpush1.bf16.msra.mxu0 0
      %2295 = vmatprep.subr.bf16.mxu0 0
      %2296 = vmatpush1.bf16.msra.mxu0 0
      %2297 = vmatprep.subr.bf16.mxu0 0
      %2298 = vmatpush1.bf16.msra.mxu0 0
      %2299 = vmatprep.subr.bf16.mxu0 0
      %2300 = vmatpush1.bf16.msra.mxu0 0
      %2301 = vmatprep.subr.bf16.mxu0 0
      %2302 = vmatpush1.bf16.msra.mxu0 0
      %2303 = vmatprep.subr.bf16.mxu0 0
      %2304 = vmatpush1.bf16.msra.mxu0 0
      %2305 = vmatprep.subr.bf16.mxu0 0
      %2306 = vmatpush1.bf16.msra.mxu0 0
      %2307 = vmatprep.subr.bf16.mxu0 0
      %2308 = vmatpush1.bf16.msra.mxu0 0
      %2309 = vmatprep.subr.bf16.mxu0 0
      %2310 = vmatpush1.bf16.msra.mxu0 0
      %2311 = vmatprep.subr.bf16.mxu0 0
      %2312 = vmatpush1.bf16.msra.mxu0 0
      %2313 = vmatprep.subr.bf16.mxu0 0
      %2314 = vmatpush1.bf16.msra.mxu0 0
      %2315 = vmatprep.subr.bf16.mxu0 0
      %2316 = vmatpush1.bf16.msra.mxu0 0
      %2317 = vmatprep.mubr.bf16.mxu0 0
      %2318 = vmatmul.mubr.bf16.gmra.mrb[0].mxu0 %v2280
      %v2319 = vpop.f32.mrb[0].mxu0
      %v2320 = vadd.f32 0.0, %v2319
      %v2321 = vpop.f32.mrb[0].mxu0
      %v2322 = vpop.f32.mrb[0].mxu0
      %v2323 = vpop.f32.mrb[0].mxu0
      %2324 = vdwg.mxu0
      %v2325 = vadd.f32 %v2274, %v2320
      %s2326 = scalar_lea.vmem %s1, 136
      %v2327 = vld [vmem:[%s2326] sm:$0xf]
      %v2329 = vsel %vm259, %v2327, 0
      %2331 = vmatprep.subr.bf16.mxu0 0
      %2332 = vmatpush1.bf16.msra.mxu0 %v1836
      %2333 = vmatprep.subr.bf16.mxu0 0
      %2334 = vmatpush1.bf16.msra.mxu0 0
      %2335 = vmatprep.subr.bf16.mxu0 0
      %2336 = vmatpush1.bf16.msra.mxu0 0
      %2337 = vmatprep.subr.bf16.mxu0 0
      %2338 = vmatpush1.bf16.msra.mxu0 0
      %2339 = vmatprep.subr.bf16.mxu0 0
      %2340 = vmatpush1.bf16.msra.mxu0 0
      %2341 = vmatprep.subr.bf16.mxu0 0
      %2342 = vmatpush1.bf16.msra.mxu0 0
      %2343 = vmatprep.subr.bf16.mxu0 0
      %2344 = vmatpush1.bf16.msra.mxu0 0
      %2345 = vmatprep.subr.bf16.mxu0 0
      %2346 = vmatpush1.bf16.msra.mxu0 0
      %2347 = vmatprep.subr.bf16.mxu0 0
      %2348 = vmatpush1.bf16.msra.mxu0 0
      %2349 = vmatprep.subr.bf16.mxu0 0
      %2350 = vmatpush1.bf16.msra.mxu0 0
      %2351 = vmatprep.subr.bf16.mxu0 0
      %2352 = vmatpush1.bf16.msra.mxu0 0
      %2353 = vmatprep.subr.bf16.mxu0 0
      %2354 = vmatpush1.bf16.msra.mxu0 0
      %2355 = vmatprep.subr.bf16.mxu0 0
      %2356 = vmatpush1.bf16.msra.mxu0 0
      %2357 = vmatprep.subr.bf16.mxu0 0
      %2358 = vmatpush1.bf16.msra.mxu0 0
      %2359 = vmatprep.subr.bf16.mxu0 0
      %2360 = vmatpush1.bf16.msra.mxu0 0
      %2361 = vmatprep.subr.bf16.mxu0 0
      %2362 = vmatpush1.bf16.msra.mxu0 0
      %2363 = vmatprep.mubr.bf16.mxu0 0
      %2364 = vmatmul.mubr.bf16.gmra.mrb[0].mxu0 %v2329
      %v2365 = vpop.f32.mrb[0].mxu0
      %v2366 = vadd.f32 0.0, %v2365
      %v2367 = vpop.f32.mrb[0].mxu0
      %v2368 = vpop.f32.mrb[0].mxu0
      %v2369 = vpop.f32.mrb[0].mxu0
      %2370 = vdwg.mxu0
      %v2371 = vadd.f32 %v2325, %v2366
      %s2372 = scalar_lea.vmem %s1, 140
      %v2373 = vld [vmem:[%s2372] sm:$0xf]
      %v2375 = vsel %vm259, %v2373, 0
      %2377 = vmatprep.subr.bf16.mxu0 0
      %2378 = vmatpush1.bf16.msra.mxu0 %v1887
      %2379 = vmatprep.subr.bf16.mxu0 0
      %2380 = vmatpush1.bf16.msra.mxu0 0
      %2381 = vmatprep.subr.bf16.mxu0 0
      %2382 = vmatpush1.bf16.msra.mxu0 0
      %2383 = vmatprep.subr.bf16.mxu0 0
      %2384 = vmatpush1.bf16.msra.mxu0 0
      %2385 = vmatprep.subr.bf16.mxu0 0
      %2386 = vmatpush1.bf16.msra.mxu0 0
      %2387 = vmatprep.subr.bf16.mxu0 0
      %2388 = vmatpush1.bf16.msra.mxu0 0
      %2389 = vmatprep.subr.bf16.mxu0 0
      %2390 = vmatpush1.bf16.msra.mxu0 0
      %2391 = vmatprep.subr.bf16.mxu0 0
      %2392 = vmatpush1.bf16.msra.mxu0 0
      %2393 = vmatprep.subr.bf16.mxu0 0
      %2394 = vmatpush1.bf16.msra.mxu0 0
      %2395 = vmatprep.subr.bf16.mxu0 0
      %2396 = vmatpush1.bf16.msra.mxu0 0
      %2397 = vmatprep.subr.bf16.mxu0 0
      %2398 = vmatpush1.bf16.msra.mxu0 0
      %2399 = vmatprep.subr.bf16.mxu0 0
      %2400 = vmatpush1.bf16.msra.mxu0 0
      %2401 = vmatprep.subr.bf16.mxu0 0
      %2402 = vmatpush1.bf16.msra.mxu0 0
      %2403 = vmatprep.subr.bf16.mxu0 0
      %2404 = vmatpush1.bf16.msra.mxu0 0
      %2405 = vmatprep.subr.bf16.mxu0 0
      %2406 = vmatpush1.bf16.msra.mxu0 0
      %2407 = vmatprep.subr.bf16.mxu0 0
      %2408 = vmatpush1.bf16.msra.mxu0 0
      %2409 = vmatprep.mubr.bf16.mxu0 0
      %2410 = vmatmul.mubr.bf16.gmra.mrb[0].mxu0 %v2375
      %v2411 = vpop.f32.mrb[0].mxu0
      %v2412 = vadd.f32 0.0, %v2411
      %v2413 = vpop.f32.mrb[0].mxu0
      %v2414 = vpop.f32.mrb[0].mxu0
      %v2415 = vpop.f32.mrb[0].mxu0
      %2416 = vdwg.mxu0
      %v2417 = vadd.f32 %v2371, %v2412
      %s2418 = scalar_lea.vmem %s1, 176
      %v2419 = vld [vmem:[%s2418] sm:$0xf]
      %2420 = vrot.lane.b32.xlu0 %v1829, 106
      %v2421 = vpop.permute.xlu0 %2420
      %v2423 = vsel %vm259, %v2419, 0
      %v2426 = vsel %vm263, %v2421, 0
      %2428 = vmatprep.subr.bf16.mxu0 0
      %2429 = vmatpush1.bf16.msra.mxu0 %v2426
      %2430 = vmatprep.subr.bf16.mxu0 0
      %2431 = vmatpush1.bf16.msra.mxu0 0
      %2432 = vmatprep.subr.bf16.mxu0 0
      %2433 = vmatpush1.bf16.msra.mxu0 0
      %2434 = vmatprep.subr.bf16.mxu0 0
      %2435 = vmatpush1.bf16.msra.mxu0 0
      %2436 = vmatprep.subr.bf16.mxu0 0
      %2437 = vmatpush1.bf16.msra.mxu0 0
      %2438 = vmatprep.subr.bf16.mxu0 0
      %2439 = vmatpush1.bf16.msra.mxu0 0
      %2440 = vmatprep.subr.bf16.mxu0 0
      %2441 = vmatpush1.bf16.msra.mxu0 0
      %2442 = vmatprep.subr.bf16.mxu0 0
      %2443 = vmatpush1.bf16.msra.mxu0 0
      %2444 = vmatprep.subr.bf16.mxu0 0
      %2445 = vmatpush1.bf16.msra.mxu0 0
      %2446 = vmatprep.subr.bf16.mxu0 0
      %2447 = vmatpush1.bf16.msra.mxu0 0
      %2448 = vmatprep.subr.bf16.mxu0 0
      %2449 = vmatpush1.bf16.msra.mxu0 0
      %2450 = vmatprep.subr.bf16.mxu0 0
      %2451 = vmatpush1.bf16.msra.mxu0 0
      %2452 = vmatprep.subr.bf16.mxu0 0
      %2453 = vmatpush1.bf16.msra.mxu0 0
      %2454 = vmatprep.subr.bf16.mxu0 0
      %2455 = vmatpush1.bf16.msra.mxu0 0
      %2456 = vmatprep.subr.bf16.mxu0 0
      %2457 = vmatpush1.bf16.msra.mxu0 0
      %2458 = vmatprep.subr.bf16.mxu0 0
      %2459 = vmatpush1.bf16.msra.mxu0 0
      %2460 = vmatprep.mubr.bf16.mxu0 0
      %2461 = vmatmul.mubr.bf16.gmra.mrb[0].mxu0 %v2423
      %v2462 = vpop.f32.mrb[0].mxu0
      %v2463 = vadd.f32 0.0, %v2462
      %v2464 = vpop.f32.mrb[0].mxu0
      %v2465 = vpop.f32.mrb[0].mxu0
      %v2466 = vpop.f32.mrb[0].mxu0
      %2467 = vdwg.mxu0
      %v2468 = vadd.f32 %v1816, %v2463
      %s2469 = scalar_lea.vmem %s1, 180
      %v2470 = vld [vmem:[%s2469] sm:$0xf]
      %v2472 = vsel %vm259, %v2470, 0
      %2474 = vmatprep.subr.bf16.mxu0 0
      %2475 = vmatpush1.bf16.msra.mxu0 %v2232
      %2476 = vmatprep.subr.bf16.mxu0 0
      %2477 = vmatpush1.bf16.msra.mxu0 0
      %2478 = vmatprep.subr.bf16.mxu0 0
      %2479 = vmatpush1.bf16.msra.mxu0 0
      %2480 = vmatprep.subr.bf16.mxu0 0
      %2481 = vmatpush1.bf16.msra.mxu0 0
      %2482 = vmatprep.subr.bf16.mxu0 0
      %2483 = vmatpush1.bf16.msra.mxu0 0
      %2484 = vmatprep.subr.bf16.mxu0 0
      %2485 = vmatpush1.bf16.msra.mxu0 0
      %2486 = vmatprep.subr.bf16.mxu0 0
      %2487 = vmatpush1.bf16.msra.mxu0 0
      %2488 = vmatprep.subr.bf16.mxu0 0
      %2489 = vmatpush1.bf16.msra.mxu0 0
      %2490 = vmatprep.subr.bf16.mxu0 0
      %2491 = vmatpush1.bf16.msra.mxu0 0
      %2492 = vmatprep.subr.bf16.mxu0 0
      %2493 = vmatpush1.bf16.msra.mxu0 0
      %2494 = vmatprep.subr.bf16.mxu0 0
      %2495 = vmatpush1.bf16.msra.mxu0 0
      %2496 = vmatprep.subr.bf16.mxu0 0
      %2497 = vmatpush1.bf16.msra.mxu0 0
      %2498 = vmatprep.subr.bf16.mxu0 0
      %2499 = vmatpush1.bf16.msra.mxu0 0
      %2500 = vmatprep.subr.bf16.mxu0 0
      %2501 = vmatpush1.bf16.msra.mxu0 0
      %2502 = vmatprep.subr.bf16.mxu0 0
      %2503 = vmatpush1.bf16.msra.mxu0 0
      %2504 = vmatprep.subr.bf16.mxu0 0
      %2505 = vmatpush1.bf16.msra.mxu0 0
      %2506 = vmatprep.mubr.bf16.mxu0 0
      %2507 = vmatmul.mubr.bf16.gmra.mrb[0].mxu0 %v2472
      %v2508 = vpop.f32.mrb[0].mxu0
      %v2509 = vadd.f32 0.0, %v2508
      %v2510 = vpop.f32.mrb[0].mxu0
      %v2511 = vpop.f32.mrb[0].mxu0
      %v2512 = vpop.f32.mrb[0].mxu0
      %2513 = vdwg.mxu0
      %v2514 = vadd.f32 %v2468, %v2509
      %s2515 = scalar_lea.vmem %s1, 184
      %v2516 = vld [vmem:[%s2515] sm:$0xf]
      %v2518 = vsel %vm259, %v2516, 0
      %2520 = vmatprep.subr.bf16.mxu0 0
      %2521 = vmatpush1.bf16.msra.mxu0 %v2038
      %2522 = vmatprep.subr.bf16.mxu0 0
      %2523 = vmatpush1.bf16.msra.mxu0 0
      %2524 = vmatprep.subr.bf16.mxu0 0
      %2525 = vmatpush1.bf16.msra.mxu0 0
      %2526 = vmatprep.subr.bf16.mxu0 0
      %2527 = vmatpush1.bf16.msra.mxu0 0
      %2528 = vmatprep.subr.bf16.mxu0 0
      %2529 = vmatpush1.bf16.msra.mxu0 0
      %2530 = vmatprep.subr.bf16.mxu0 0
      %2531 = vmatpush1.bf16.msra.mxu0 0
      %2532 = vmatprep.subr.bf16.mxu0 0
      %2533 = vmatpush1.bf16.msra.mxu0 0
      %2534 = vmatprep.subr.bf16.mxu0 0
      %2535 = vmatpush1.bf16.msra.mxu0 0
      %2536 = vmatprep.subr.bf16.mxu0 0
      %2537 = vmatpush1.bf16.msra.mxu0 0
      %2538 = vmatprep.subr.bf16.mxu0 0
      %2539 = vmatpush1.bf16.msra.mxu0 0
      %2540 = vmatprep.subr.bf16.mxu0 0
      %2541 = vmatpush1.bf16.msra.mxu0 0
      %2542 = vmatprep.subr.bf16.mxu0 0
      %2543 = vmatpush1.bf16.msra.mxu0 0
      %2544 = vmatprep.subr.bf16.mxu0 0
      %2545 = vmatpush1.bf16.msra.mxu0 0
      %2546 = vmatprep.subr.bf16.mxu0 0
      %2547 = vmatpush1.bf16.msra.mxu0 0
      %2548 = vmatprep.subr.bf16.mxu0 0
      %2549 = vmatpush1.bf16.msra.mxu0 0
      %2550 = vmatprep.subr.bf16.mxu0 0
      %2551 = vmatpush1.bf16.msra.mxu0 0
      %2552 = vmatprep.mubr.bf16.mxu0 0
      %2553 = vmatmul.mubr.bf16.gmra.mrb[0].mxu0 %v2518
      %v2554 = vpop.f32.mrb[0].mxu0
      %v2555 = vadd.f32 0.0, %v2554
      %v2556 = vpop.f32.mrb[0].mxu0
      %v2557 = vpop.f32.mrb[0].mxu0
      %v2558 = vpop.f32.mrb[0].mxu0
      %2559 = vdwg.mxu0
      %v2560 = vadd.f32 %v2514, %v2555
      %s2561 = scalar_lea.vmem %s1, 188
      %v2562 = vld [vmem:[%s2561] sm:$0xf]
      %v2564 = vsel %vm259, %v2562, 0
      %2566 = vmatprep.subr.bf16.mxu0 0
      %2567 = vmatpush1.bf16.msra.mxu0 %v1836
      %2568 = vmatprep.subr.bf16.mxu0 0
      %2569 = vmatpush1.bf16.msra.mxu0 0
      %2570 = vmatprep.subr.bf16.mxu0 0
      %2571 = vmatpush1.bf16.msra.mxu0 0
      %2572 = vmatprep.subr.bf16.mxu0 0
      %2573 = vmatpush1.bf16.msra.mxu0 0
      %2574 = vmatprep.subr.bf16.mxu0 0
      %2575 = vmatpush1.bf16.msra.mxu0 0
      %2576 = vmatprep.subr.bf16.mxu0 0
      %2577 = vmatpush1.bf16.msra.mxu0 0
      %2578 = vmatprep.subr.bf16.mxu0 0
      %2579 = vmatpush1.bf16.msra.mxu0 0
      %2580 = vmatprep.subr.bf16.mxu0 0
      %2581 = vmatpush1.bf16.msra.mxu0 0
      %2582 = vmatprep.subr.bf16.mxu0 0
      %2583 = vmatpush1.bf16.msra.mxu0 0
      %2584 = vmatprep.subr.bf16.mxu0 0
      %2585 = vmatpush1.bf16.msra.mxu0 0
      %2586 = vmatprep.subr.bf16.mxu0 0
      %2587 = vmatpush1.bf16.msra.mxu0 0
      %2588 = vmatprep.subr.bf16.mxu0 0
      %2589 = vmatpush1.bf16.msra.mxu0 0
      %2590 = vmatprep.subr.bf16.mxu0 0
      %2591 = vmatpush1.bf16.msra.mxu0 0
      %2592 = vmatprep.subr.bf16.mxu0 0
      %2593 = vmatpush1.bf16.msra.mxu0 0
      %2594 = vmatprep.subr.bf16.mxu0 0
      %2595 = vmatpush1.bf16.msra.mxu0 0
      %2596 = vmatprep.subr.bf16.mxu0 0
      %2597 = vmatpush1.bf16.msra.mxu0 0
      %2598 = vmatprep.mubr.bf16.mxu0 0
      %2599 = vmatmul.mubr.bf16.gmra.mrb[0].mxu0 %v2564
      %v2600 = vpop.f32.mrb[0].mxu0
      %v2601 = vadd.f32 0.0, %v2600
      %v2602 = vpop.f32.mrb[0].mxu0
      %v2603 = vpop.f32.mrb[0].mxu0
      %v2604 = vpop.f32.mrb[0].mxu0
      %2605 = vdwg.mxu0
      %v2606 = vadd.f32 %v2560, %v2601
      %v2607 = vlaneseq
      %v2608 = vand.u32 %v2607, 127
      %vm2609 = vcmp.lt.s32.totalorder %v2608, 0
      %v2610 = vsub.s32 0, %v2608
      %v2611 = vsel %vm2609, %v2610, %v2608
      %v2612 = vmul.u32.u64.compose %v2611, 3435973837
      %v2613 = vextract.low.u32 %v2612
      %v2614 = vextract.high.u32 %v2612
      %v2615 = vshrl.u32 %v2614, 3
      %v2616 = vmul.u32 %v2615, 10
      %v2617 = vsub.s32 %v2611, %v2616
      %v2618 = vsub.s32 0, %v2617
      %v2619 = vsel %vm2609, %v2618, %v2617
      %vm2620 = vcmp.ne.s32.totalorder %v2619, 0
      %vm2621 = vcmp.lt.s32.totalorder %v2619, 0
      %vm2622 = vmand %vm2621, %vm2620
      %v2623 = vadd.s32 %v2619, 10
      %v2624 = vsel %vm2622, %v2623, %v2619
      %vm2625 = vcmp.lt.s32.totalorder %v2624, 8
      %v2626 = vsel %vm2625, %v2029, 0.0
      %vm2627 = vcmask 654336
      %v2628 = vsel %vm2627, %v2626, 0.0
      %2629 = vadd.xlane.f32.xlu0 %v2628
      %v2630 = vpop.xlane.xlu0 %2629
      %v2631 = vadd.f32 %v2630, 0.0
      %v2632 = vld [vmem:[%s2] sm:$0xff]
      %2634 = vset.pattern.permute.xlu0 0
      %2635 = vperm.xlu0 %2634, %v2632
      %v2636 = vpop.permute.xlu0 %2635
      %v2638 = vadd.f32 %v2029, %v2636
      %v2639 = vpack.c.bf16 %v2638, %v2638
      %vm2640 = vcmask 650240
      %2641 = vst.msk [vmem:[%s232] sm:$0xf] %vm2640, %v2639
      %v2642 = vsel %vm2625, %v2223, 0.0
      %v2643 = vsel %vm2627, %v2642, 0.0
      %2644 = vadd.xlane.f32.xlu0 %v2643
      %v2645 = vpop.xlane.xlu0 %2644
      %v2646 = vadd.f32 %v2631, %v2645
      %v2647 = vld [vmem:[%s2] sm:$0xff]
      %2649 = vset.pattern.permute.xlu0 0
      %2650 = vperm.xlu0 %2649, %v2647
      %v2651 = vpop.permute.xlu0 %2650
      %v2653 = vadd.f32 %v2223, %v2651
      %v2654 = vpack.c.bf16 %v2653, %v2653
      %s2655 = scalar_lea.vmem %s232, 4
      %2656 = vst.msk [vmem:[%s2655] sm:$0xf] %vm2640, %v2654
      %v2657 = vsel %vm2625, %v2417, 0.0
      %v2658 = vsel %vm2627, %v2657, 0.0
      %2659 = vadd.xlane.f32.xlu0 %v2658
      %v2660 = vpop.xlane.xlu0 %2659
      %v2661 = vadd.f32 %v2646, %v2660
      %v2662 = vld [vmem:[%s2] sm:$0xff]
      %2664 = vset.pattern.permute.xlu0 0
      %2665 = vperm.xlu0 %2664, %v2662
      %v2666 = vpop.permute.xlu0 %2665
      %v2668 = vadd.f32 %v2417, %v2666
      %v2669 = vpack.c.bf16 %v2668, %v2668
      %s2670 = scalar_lea.vmem %s232, 8
      %2671 = vst.msk [vmem:[%s2670] sm:$0xf] %vm2640, %v2669
      %v2672 = vsel %vm2625, %v2606, 0.0
      %v2673 = vsel %vm2627, %v2672, 0.0
      %2674 = vadd.xlane.f32.xlu0 %v2673
      %v2675 = vpop.xlane.xlu0 %2674
      %v2676 = vadd.f32 %v2661, %v2675
      %v2677 = vld [vmem:[%s2] sm:$0xff]
      %2679 = vset.pattern.permute.xlu0 0
      %2680 = vperm.xlu0 %2679, %v2677
      %v2681 = vpop.permute.xlu0 %2680
      %v2683 = vadd.f32 %v2606, %v2681
      %v2684 = vpack.c.bf16 %v2683, %v2683
      %s2685 = scalar_lea.vmem %s232, 12
      %2686 = vst.msk [vmem:[%s2685] sm:$0xf] %vm2640, %v2684
      %vm2687 = vcmask 7168
      %2688 = vst.msk [vmem:[%s240] sm:$0xff] %vm2687, %v2676
      %p2689 = scmp.lt.s32.totalorder %s20, 1
      %s2690 = scalar_select %p2689, %s20, 1
      %p2691 = scmp.lt.s32.totalorder %s21, 3
      %s2692 = scalar_select %p2691, %s21, 3
      %s2693 = smul.addr %s2692, 4
      %s2694 = smul.addr %s2690, 16
      %s2695 = sadd.s32 %s2693, %s2694
      %s2696 = smul.addr %s2695, 4
      %s2697 = scalar_lea.vmem %s3, %s2696
      %p2698 = scmp.lt.s32.totalorder %s20, 1
      %s2699 = scalar_select %p2698, %s20, 1
      %p2700 = scmp.lt.s32.totalorder %s21, 3
      %s2701 = scalar_select %p2700, %s21, 3
      %s2702 = smul.addr %s2699, 4
      %s2703 = sadd.s32 %s2701, %s2702
      %s2704 = smul.addr %s2703, 8
      %s2705 = scalar_lea.vmem %s4, %s2704
      // Predicated region
      $region33: #{up_conv3d_forward.1} parent=31 // pred_check
        %p2706 = pneg %p116
      $region34: #{up_conv3d_forward.1} parent=31 // pred_check_branch
        %2708 = sbr.rel (%p2706) target = $region36
      $region35: #{up_conv3d_forward.1} parent=31 // pred_region
        _
      $region36: #{up_conv3d_forward.1} parent=31 // pred_fallthru
        _
      // Predicated region
      $region37: #{up_conv3d_forward.1} parent=31 // pred_check
        %p2709 = pneg %p144
      $region38: #{up_conv3d_forward.1} parent=31 // pred_check_branch
        %2711 = sbr.rel (%p2709) target = $region40
      $region39: #{up_conv3d_forward.1} parent=31 // pred_region
        _
      $region40: #{up_conv3d_forward.1} parent=31 // pred_fallthru
        _
    $region32: #{up_conv3d_forward.1} parent=5 // pred_fallthru
      _
    %p2712 = scmp.le.s32.totalorder 2, %s11
    // Predicated region
    $region41: #{up_conv3d_forward.1} parent=5 // pred_check
      %p2713 = pneg %p2712
    $region42: #{up_conv3d_forward.1} parent=5 // pred_check_branch
      %2715 = sbr.rel (%p2713) target = $region44
    $region43: #{up_conv3d_forward.1} parent=5 // pred_region
      %s2716 = ssub.s32 %s11, 2
      // Predicated region
      $region45: #{up_conv3d_forward.1} parent=43 // pred_check
        %p2717 = pneg %p122
      $region46: #{up_conv3d_forward.1} parent=43 // pred_check_branch
        %2719 = sbr.rel (%p2717) target = $region48
      $region47: #{up_conv3d_forward.1} parent=43 // pred_region
        %p2720 = scmp.lt.s32.totalorder %s22, 1
        %s2721 = scalar_select %p2720, %s22, 1
        %p2722 = scmp.lt.s32.totalorder %s23, 3
        %s2723 = scalar_select %p2722, %s23, 3
        %s2724 = smul.addr %s2723, 4
        %s2725 = smul.addr %s2721, 16
        %s2726 = sadd.s32 %s2724, %s2725
        %s2727 = smul.addr %s2726, 4
        %s2728 = scalar_lea.vmem %s3, %s2727
      $region48: #{up_conv3d_forward.1} parent=43 // pred_fallthru
        _
      // Predicated region
      $region49: #{up_conv3d_forward.1} parent=43 // pred_check
        %p2729 = pneg %p150
      $region50: #{up_conv3d_forward.1} parent=43 // pred_check_branch
        %2731 = sbr.rel (%p2729) target = $region52
      $region51: #{up_conv3d_forward.1} parent=43 // pred_region
        %p2732 = scmp.lt.s32.totalorder %s22, 1
        %s2733 = scalar_select %p2732, %s22, 1
        %p2734 = scmp.lt.s32.totalorder %s23, 3
        %s2735 = scalar_select %p2734, %s23, 3
        %s2736 = smul.addr %s2733, 4
        %s2737 = sadd.s32 %s2735, %s2736
        %s2738 = smul.addr %s2737, 8
        %s2739 = scalar_lea.vmem %s4, %s2738
      $region52: #{up_conv3d_forward.1} parent=43 // pred_fallthru
        _
    $region44: #{up_conv3d_forward.1} parent=5 // pred_fallthru
      _
  $region6: #{up_conv3d_forward.1} parent=0 // loop_footer
    %s15 = sadd.s32 1, %s11
  $region7: #{up_conv3d_forward.1} parent=0 // loop_footer_branch
    %10 = sbr.rel target = $region3
  $region8: #{up_conv3d_forward.1} parent=0 // loop_exit
    _

</llo_original>
